<compile_context>
chip_gen: v6e
topology: v6e:2x2x1
jax: 0.10.0
libtpu: 0.0.40
codegen_flags: <defaults>
</compile_context>

<pallas_src>
import math

import jax
import jax.numpy as jnp
from jax.experimental import pallas as pl
from jax.experimental.pallas import tpu as pltpu

_BN_EPS = 1e-5


# ----------------------------------------------------------------------------
# Parameters (deterministic, replicating the weights_init bounds), stored in
# the layouts the kernel consumes directly.
# ----------------------------------------------------------------------------
def init_params(key, input_width, num_hidden, num_action):
    hc1 = input_width + 1
    hp1 = hc1 // 2
    hc2 = hp1 + 1
    hp2 = hc2 // 2
    feat = 64 * hp2 * hp2                               # featureSize()
    keys = jax.random.split(key, 5)

    def unif(k, shape, fan_in, fan_out):
        wb = math.sqrt(6.0 / (fan_in + fan_out))
        return jax.random.uniform(k, shape, jnp.float32, -wb, wb)

    conv1 = unif(keys[0], (32, 1, 2, 2), 1 * 2 * 2, 2 * 2 * 32)
    conv2 = unif(keys[1], (64, 32, 2, 2), 32 * 2 * 2, 2 * 2 * 64)
    fc0_w = unif(keys[2], (32, 2), 2, 32)
    fc1_w = unif(keys[3], (num_hidden, feat + 32), feat + 32, num_hidden)
    fc2_w = unif(keys[4], (num_action, num_hidden), num_hidden, num_action)

    # conv1: (Cout, 1, 2, 2) -> (tap = kh*2+kw, Cout); consumed as VPU FMAs.
    w1 = jnp.transpose(conv1[:, 0], (1, 2, 0)).reshape(4, 32)
    # conv2: (Cout, Cin, 2, 2) -> (Cin, tap*Cout) so ONE matmul yields all taps.
    w2cat = jnp.transpose(conv2, (1, 2, 3, 0)).reshape(32, 4 * 64)
    # fc1: torch flattens layer-2 output in (c, h, w) order; the kernel builds
    # (h, w, c) rows, so permute the conv-feature rows of W1^T accordingly and
    # append the fc0-target rows (torch.cat folded into one matmul).
    wa = jnp.transpose(fc1_w[:, :feat].reshape(num_hidden, 64, hp2, hp2),
                       (2, 3, 1, 0)).reshape(feat, num_hidden)
    wb = fc1_w[:, feat:].T
    w1f = jnp.concatenate([wa, wb], axis=0)

    # NOTE: Conv2d biases are omitted: BatchNorm2d in training mode subtracts
    # the per-channel batch mean, which cancels them exactly (and weights_init
    # zero-fills them anyway).
    return {
        "w1": w1.astype(jnp.float32),
        "bn1_g": jnp.ones((1, 32), jnp.float32),
        "bn1_b": jnp.zeros((1, 32), jnp.float32),
        "w2": w2cat.astype(jnp.bfloat16),
        "bn2_g": jnp.ones((1, 64), jnp.float32),
        "bn2_b": jnp.zeros((1, 64), jnp.float32),
        "w0": fc0_w.T.astype(jnp.float32),
        "b0": jnp.zeros((1, 32), jnp.float32),
        "w1f": w1f.astype(jnp.bfloat16),
        "b1": jnp.zeros((1, num_hidden), jnp.float32),
        "w2f": fc2_w.T.astype(jnp.bfloat16),
        "b2": jnp.zeros((1, num_action), jnp.float32),
    }


# ----------------------------------------------------------------------------
# Full forward pass of MulChanConvNet as ONE fused Pallas kernel.
# ----------------------------------------------------------------------------
def mulchan_forward(params, sensor, target):
    N, Cin, H, W = sensor.shape
    if Cin != 1:
        raise ValueError("MulChanConvNet expects a single-channel sensor input")
    Hc1, Wc1 = H + 1, W + 1                 # conv1 output grid (k=2, s=1, p=1)
    Hp1, Wp1 = Hc1 // 2, Wc1 // 2           # after MaxPool2d(2,2), floor mode
    Hc2, Wc2 = Hp1 + 1, Wp1 + 1             # conv2 output grid
    Hp2, Wp2 = Hc2 // 2, Wc2 // 2
    C1, C2 = 32, 64
    num_hidden = params["w1f"].shape[1]
    num_action = params["w2f"].shape[1]
    f32, bf16 = jnp.float32, jnp.bfloat16

    # Layout-only glue on the raw 1-channel input (tiny, ordinary XLA ops):
    # the four 2x2 / pad-1 conv taps stacked on the lane dim -> (N, Hc1, Wc1, 4).
    x = sensor[:, 0].astype(f32)
    xp = jnp.pad(x, ((0, 0), (1, 1), (1, 1)))
    p1 = jnp.stack([xp[:, kh:kh + Hc1, kw:kw + Wc1]
                    for kh in (0, 1) for kw in (0, 1)], axis=-1)

    def maxpool2x2(a):
        # Per-sample 2x2 / stride-2 max pool (floor mode) from static slices +
        # maximum + concat only: batch-linear replacement for the old
        # O(batch^2) pool-gather matmuls.
        n_, h_, w_, c_ = a.shape
        hp, wp = h_ // 2, w_ // 2
        rows = []
        for i in range(hp):
            r = jnp.maximum(a[:, 2 * i:2 * i + 1], a[:, 2 * i + 1:2 * i + 2])
            cols = [jnp.maximum(r[:, :, 2 * j:2 * j + 1, :],
                                r[:, :, 2 * j + 1:2 * j + 2, :])
                    for j in range(wp)]
            rows.append(jnp.concatenate(cols, axis=2))           # (n,1,wp,c)
        return jnp.concatenate(rows, axis=1)                     # (n,hp,wp,c)

    def bn_scale_shift(conv, gamma, beta, count):
        # One-pass training-mode BatchNorm2d stats over the FULL conv grid
        # (biased variance, eps=1e-5): sum + sum-of-squares in a single pass.
        s = conv.sum(0).sum(0).sum(0)
        ss = (conv * conv).sum(0).sum(0).sum(0)
        mean = s * (1.0 / count)
        var = jnp.maximum(ss * (1.0 / count) - mean * mean, 0.0)
        scale = gamma * jax.lax.rsqrt(var + _BN_EPS)
        shift = beta - mean * scale
        return scale, shift

    def kernel(p1_ref, w1_ref, g1_ref, bb1_ref, w2_ref, g2_ref, bb2_ref,
               y_ref, w0_ref, b0_ref, w1f_ref, b1_ref, w2f_ref, b2_ref, o_ref):
        # ---- layer 1: Conv(1->32, 2x2, pad 1) + BN + ReLU + MaxPool ---------
        # K=4 conv as four VPU broadcast FMAs (an MXU matmul with K=4 is pure
        # latency on every TPU generation).
        p1v = p1_ref[...]
        w1v = w1_ref[...]
        conv1 = p1v[..., 0:1] * w1v[0:1, :]
        for t in range(1, 4):
            conv1 = conv1 + p1v[..., t:t + 1] * w1v[t:t + 1, :]  # (N,Hc1,Wc1,32)
        sc1, sh1 = bn_scale_shift(conv1, g1_ref[...], bb1_ref[...],
                                  N * Hc1 * Wc1)
        # Stats used the full grid; normalize/ReLU only the region the
        # floor-mode pool actually consumes.
        act1 = jnp.maximum(conv1[:, :2 * Hp1, :2 * Wp1, :] * sc1 + sh1, 0.0)
        pooled1 = maxpool2x2(act1)                               # (N,Hp1,Wp1,32)

        # ---- layer 2: Conv(32->64, 2x2, pad 1) + BN + ReLU + MaxPool --------
        # ONE bf16 matmul computes every 2x2 tap; taps are then placed on the
        # padded (Hc2, Wc2) grid with static zero-concat shifts (batch-linear
        # replacement for the old O(batch^2) tap-gather matmuls).
        lhs1 = pooled1.reshape(N * Hp1 * Wp1, C1).astype(bf16)
        m_all = jnp.dot(lhs1, w2_ref[...], preferred_element_type=f32)
        m_all = m_all.reshape(N, Hp1, Wp1, 4 * C2)

        def place(m, top, left):
            # Embed an (N, Hp1, Wp1, C2) tap at rows [top:top+Hp1],
            # cols [left:left+Wp1] of the (N, Hc2, Wc2, C2) conv-2 grid.
            zr = jnp.zeros((N, 1, Wp1, C2), f32)
            m = jnp.concatenate([zr, m] if top else [m, zr], axis=1)
            zc = jnp.zeros((N, Hc2, 1, C2), f32)
            return jnp.concatenate([zc, m] if left else [m, zc], axis=2)

        conv2 = None
        for kh in (0, 1):
            for kw in (0, 1):
                t = kh * 2 + kw
                tap = place(m_all[..., t * C2:(t + 1) * C2], 1 - kh, 1 - kw)
                conv2 = tap if conv2 is None else conv2 + tap    # (N,Hc2,Wc2,64)
        sc2, sh2 = bn_scale_shift(conv2, g2_ref[...], bb2_ref[...],
                                  N * Hc2 * Wc2)
        act2 = jnp.maximum(conv2[:, :2 * Hp2, :2 * Wp2, :] * sc2 + sh2, 0.0)
        pooled2 = maxpool2x2(act2)                               # (N,Hp2,Wp2,64)

        # ---- FC head --------------------------------------------------------
        # fc0 (K=2) on the VPU; torch.cat((xout, yout), 1) and the NCHW flatten
        # are folded into the pre-permuted w1f rows, so fc1 is ONE matmul with
        # K = 64*Hp2*Wp2 + 32.
        yv = y_ref[...]
        w0v = w0_ref[...]
        yout = jnp.maximum(yv[:, 0:1] * w0v[0:1, :] + yv[:, 1:2] * w0v[1:2, :]
                           + b0_ref[...], 0.0)                   # (N, 32)
        xparts = [pooled2[:, i, j, :] for i in range(Hp2) for j in range(Wp2)]
        feat = jnp.concatenate(xparts + [yout], axis=1)          # (N, feat+32)
        h1 = jnp.maximum(
            jnp.dot(feat.astype(bf16), w1f_ref[...],
                    preferred_element_type=f32) + b1_ref[...], 0.0)
        o_ref[...] = (jnp.dot(h1.astype(bf16), w2f_ref[...],
                              preferred_element_type=f32) + b2_ref[...])

    # TODO(synk): for large batches, add a batch grid axis with
    # dimension_semantics=("parallel",) and two-pass BatchNorm statistics so
    # v7x's second TensorCore is used and tiles stay within its 64 MiB VMEM;
    # at DQN batch sizes the whole working set (<1 MiB) fits and a grid-less
    # call is latency-optimal.
    # TODO(synk): for large batches, pack width-pairs (or 4 samples) into the
    # lane dim for the 32-lane layer-1 elementwise/pool stretch to raise VALU
    # lane occupancy.
    vmem = pl.BlockSpec(memory_space=pltpu.MemorySpace.VMEM)
    return pl.pallas_call(
        kernel,
        out_shape=jax.ShapeDtypeStruct((N, num_action), jnp.float32),
        in_specs=[vmem] * 14,
        out_specs=vmem,
        compiler_params=pltpu.CompilerParams(
            # Everything is now batch-linear; actual footprint is well under
            # 1 MiB here, 32 MiB leaves huge headroom on v5e / v6e / v7x.
            vmem_limit_bytes=32 * 1024 * 1024),
    )(p1, params["w1"], params["bn1_g"], params["bn1_b"],
      params["w2"], params["bn2_g"], params["bn2_b"],
      target.astype(f32), params["w0"], params["b0"],
      params["w1f"], params["b1"], params["w2f"], params["b2"])


if __name__ == "__main__":
    input_width = 16
    num_hidden = 32
    num_action = 4
    batch = 2

    key = jax.random.PRNGKey(0)
    k_params, k_sensor, k_target = jax.random.split(key, 3)

    params = init_params(k_params, input_width, num_hidden, num_action)
    sensor = jax.random.normal(k_sensor, (batch, 1, input_width, input_width),
                               dtype=jnp.float32)            # state['sensor']
    target = jax.random.normal(k_target, (batch, 2), dtype=jnp.float32)  # state['target']

    out = jax.jit(mulchan_forward)(params, sensor, target)
    jax.block_until_ready(out)
    assert out.shape == (batch, num_action)
    print("KERNEL_OK")
</pallas_src>

<mosaic_0001>
module attributes {stable_mosaic.version = 11 : i64} {
  func.func @kernel(%arg0: memref<2x17x17x4xf32, #tpu.memory_space<vmem>>, %arg1: memref<4x32xf32, #tpu.memory_space<vmem>>, %arg2: memref<1x32xf32, #tpu.memory_space<vmem>>, %arg3: memref<1x32xf32, #tpu.memory_space<vmem>>, %arg4: memref<32x256xbf16, #tpu.memory_space<vmem>>, %arg5: memref<1x64xf32, #tpu.memory_space<vmem>>, %arg6: memref<1x64xf32, #tpu.memory_space<vmem>>, %arg7: memref<2x2xf32, #tpu.memory_space<vmem>>, %arg8: memref<2x32xf32, #tpu.memory_space<vmem>>, %arg9: memref<1x32xf32, #tpu.memory_space<vmem>>, %arg10: memref<1056x32xbf16, #tpu.memory_space<vmem>>, %arg11: memref<1x32xf32, #tpu.memory_space<vmem>>, %arg12: memref<32x4xbf16, #tpu.memory_space<vmem>>, %arg13: memref<1x4xf32, #tpu.memory_space<vmem>>, %arg14: memref<2x4xf32, #tpu.memory_space<vmem>>) attributes {dimension_semantics = [], scalar_prefetch = 0 : i64, scratch_operands = 0 : i64, tpu.core_type = #tpu.core_type<tc>} {
    %c0 = arith.constant 0 : index
    %c0_0 = arith.constant 0 : index
    %c0_1 = arith.constant 0 : index
    %c0_2 = arith.constant 0 : index
    %0 = vector.load %arg0[%c0, %c0_0, %c0_1, %c0_2] : memref<2x17x17x4xf32, #tpu.memory_space<vmem>>, vector<2x17x17x4xf32>
    %c0_3 = arith.constant 0 : index
    %c0_4 = arith.constant 0 : index
    %1 = vector.load %arg1[%c0_3, %c0_4] : memref<4x32xf32, #tpu.memory_space<vmem>>, vector<4x32xf32>
    %2 = vector.extract_strided_slice %0 {offsets = [0, 0, 0, 0], sizes = [2, 17, 17, 1], strides = [1, 1, 1, 1]} : vector<2x17x17x4xf32> to vector<2x17x17x1xf32>
    %3 = vector.extract_strided_slice %1 {offsets = [0, 0], sizes = [1, 32], strides = [1, 1]} : vector<4x32xf32> to vector<1x32xf32>
    %4 = vector.shape_cast %3 : vector<1x32xf32> to vector<1x1x1x32xf32>
    %5 = vector.broadcast %2 : vector<2x17x17x1xf32> to vector<2x17x17x32xf32>
    %6 = vector.broadcast %4 : vector<1x1x1x32xf32> to vector<2x17x17x32xf32>
    %7 = arith.mulf %5, %6 : vector<2x17x17x32xf32>
    %8 = vector.extract_strided_slice %0 {offsets = [0, 0, 0, 1], sizes = [2, 17, 17, 1], strides = [1, 1, 1, 1]} : vector<2x17x17x4xf32> to vector<2x17x17x1xf32>
    %9 = vector.extract_strided_slice %1 {offsets = [1, 0], sizes = [1, 32], strides = [1, 1]} : vector<4x32xf32> to vector<1x32xf32>
    %10 = vector.shape_cast %9 : vector<1x32xf32> to vector<1x1x1x32xf32>
    %11 = vector.broadcast %8 : vector<2x17x17x1xf32> to vector<2x17x17x32xf32>
    %12 = vector.broadcast %10 : vector<1x1x1x32xf32> to vector<2x17x17x32xf32>
    %13 = arith.mulf %11, %12 : vector<2x17x17x32xf32>
    %14 = arith.addf %7, %13 : vector<2x17x17x32xf32>
    %15 = vector.extract_strided_slice %0 {offsets = [0, 0, 0, 2], sizes = [2, 17, 17, 1], strides = [1, 1, 1, 1]} : vector<2x17x17x4xf32> to vector<2x17x17x1xf32>
    %16 = vector.extract_strided_slice %1 {offsets = [2, 0], sizes = [1, 32], strides = [1, 1]} : vector<4x32xf32> to vector<1x32xf32>
    %17 = vector.shape_cast %16 : vector<1x32xf32> to vector<1x1x1x32xf32>
    %18 = vector.broadcast %15 : vector<2x17x17x1xf32> to vector<2x17x17x32xf32>
    %19 = vector.broadcast %17 : vector<1x1x1x32xf32> to vector<2x17x17x32xf32>
    %20 = arith.mulf %18, %19 : vector<2x17x17x32xf32>
    %21 = arith.addf %14, %20 : vector<2x17x17x32xf32>
    %22 = vector.extract_strided_slice %0 {offsets = [0, 0, 0, 3], sizes = [2, 17, 17, 1], strides = [1, 1, 1, 1]} : vector<2x17x17x4xf32> to vector<2x17x17x1xf32>
    %23 = vector.extract_strided_slice %1 {offsets = [3, 0], sizes = [1, 32], strides = [1, 1]} : vector<4x32xf32> to vector<1x32xf32>
    %24 = vector.shape_cast %23 : vector<1x32xf32> to vector<1x1x1x32xf32>
    %25 = vector.broadcast %22 : vector<2x17x17x1xf32> to vector<2x17x17x32xf32>
    %26 = vector.broadcast %24 : vector<1x1x1x32xf32> to vector<2x17x17x32xf32>
    %27 = arith.mulf %25, %26 : vector<2x17x17x32xf32>
    %28 = arith.addf %21, %27 : vector<2x17x17x32xf32>
    %c0_5 = arith.constant 0 : index
    %c0_6 = arith.constant 0 : index
    %29 = vector.load %arg2[%c0_5, %c0_6] : memref<1x32xf32, #tpu.memory_space<vmem>>, vector<1x32xf32>
    %c0_7 = arith.constant 0 : index
    %c0_8 = arith.constant 0 : index
    %30 = vector.load %arg3[%c0_7, %c0_8] : memref<1x32xf32, #tpu.memory_space<vmem>>, vector<1x32xf32>
    %cst = arith.constant dense<0.000000e+00> : vector<17x17x32xf32>
    %31 = vector.multi_reduction <add>, %28, %cst [0] : vector<2x17x17x32xf32> to vector<17x17x32xf32>
    %cst_9 = arith.constant dense<0.000000e+00> : vector<17x32xf32>
    %32 = vector.multi_reduction <add>, %31, %cst_9 [0] : vector<17x17x32xf32> to vector<17x32xf32>
    %cst_10 = arith.constant dense<0.000000e+00> : vector<32xf32>
    %33 = vector.multi_reduction <add>, %32, %cst_10 [0] : vector<17x32xf32> to vector<32xf32>
    %34 = arith.mulf %28, %28 : vector<2x17x17x32xf32>
    %cst_11 = arith.constant dense<0.000000e+00> : vector<17x17x32xf32>
    %35 = vector.multi_reduction <add>, %34, %cst_11 [0] : vector<2x17x17x32xf32> to vector<17x17x32xf32>
    %cst_12 = arith.constant dense<0.000000e+00> : vector<17x32xf32>
    %36 = vector.multi_reduction <add>, %35, %cst_12 [0] : vector<17x17x32xf32> to vector<17x32xf32>
    %cst_13 = arith.constant dense<0.000000e+00> : vector<32xf32>
    %37 = vector.multi_reduction <add>, %36, %cst_13 [0] : vector<17x32xf32> to vector<32xf32>
    %cst_14 = arith.constant 0.00173010386 : f32
    %38 = vector.broadcast %cst_14 : f32 to vector<32xf32>
    %39 = arith.mulf %33, %38 : vector<32xf32>
    %cst_15 = arith.constant 0.00173010386 : f32
    %40 = vector.broadcast %cst_15 : f32 to vector<32xf32>
    %41 = arith.mulf %37, %40 : vector<32xf32>
    %42 = arith.mulf %39, %39 : vector<32xf32>
    %43 = arith.subf %41, %42 : vector<32xf32>
    %cst_16 = arith.constant 0.000000e+00 : f32
    %44 = vector.broadcast %cst_16 : f32 to vector<32xf32>
    %45 = arith.maximumf %43, %44 : vector<32xf32>
    %cst_17 = arith.constant 9.99999974E-6 : f32
    %46 = vector.broadcast %cst_17 : f32 to vector<32xf32>
    %47 = arith.addf %45, %46 : vector<32xf32>
    %48 = math.rsqrt %47 : vector<32xf32>
    %49 = vector.shape_cast %48 : vector<32xf32> to vector<1x32xf32>
    %50 = arith.mulf %29, %49 : vector<1x32xf32>
    %51 = vector.shape_cast %39 : vector<32xf32> to vector<1x32xf32>
    %52 = arith.mulf %51, %50 : vector<1x32xf32>
    %53 = arith.subf %30, %52 : vector<1x32xf32>
    %54 = vector.extract_strided_slice %28 {offsets = [0, 0, 0, 0], sizes = [2, 16, 16, 32], strides = [1, 1, 1, 1]} : vector<2x17x17x32xf32> to vector<2x16x16x32xf32>
    %55 = vector.shape_cast %50 : vector<1x32xf32> to vector<1x1x1x32xf32>
    %56 = vector.broadcast %55 : vector<1x1x1x32xf32> to vector<2x16x16x32xf32>
    %57 = arith.mulf %54, %56 : vector<2x16x16x32xf32>
    %58 = vector.shape_cast %53 : vector<1x32xf32> to vector<1x1x1x32xf32>
    %59 = vector.broadcast %58 : vector<1x1x1x32xf32> to vector<2x16x16x32xf32>
    %60 = arith.addf %57, %59 : vector<2x16x16x32xf32>
    %cst_18 = arith.constant 0.000000e+00 : f32
    %61 = vector.broadcast %cst_18 : f32 to vector<2x16x16x32xf32>
    %62 = arith.maximumf %60, %61 : vector<2x16x16x32xf32>
    %63 = vector.extract_strided_slice %62 {offsets = [0, 0, 0, 0], sizes = [2, 1, 16, 32], strides = [1, 1, 1, 1]} : vector<2x16x16x32xf32> to vector<2x1x16x32xf32>
    %64 = vector.extract_strided_slice %62 {offsets = [0, 1, 0, 0], sizes = [2, 1, 16, 32], strides = [1, 1, 1, 1]} : vector<2x16x16x32xf32> to vector<2x1x16x32xf32>
    %65 = arith.maximumf %63, %64 : vector<2x1x16x32xf32>
    %66 = vector.extract_strided_slice %65 {offsets = [0, 0, 0, 0], sizes = [2, 1, 1, 32], strides = [1, 1, 1, 1]} : vector<2x1x16x32xf32> to vector<2x1x1x32xf32>
    %67 = vector.extract_strided_slice %65 {offsets = [0, 0, 1, 0], sizes = [2, 1, 1, 32], strides = [1, 1, 1, 1]} : vector<2x1x16x32xf32> to vector<2x1x1x32xf32>
    %68 = arith.maximumf %66, %67 : vector<2x1x1x32xf32>
    %69 = vector.extract_strided_slice %65 {offsets = [0, 0, 2, 0], sizes = [2, 1, 1, 32], strides = [1, 1, 1, 1]} : vector<2x1x16x32xf32> to vector<2x1x1x32xf32>
    %70 = vector.extract_strided_slice %65 {offsets = [0, 0, 3, 0], sizes = [2, 1, 1, 32], strides = [1, 1, 1, 1]} : vector<2x1x16x32xf32> to vector<2x1x1x32xf32>
    %71 = arith.maximumf %69, %70 : vector<2x1x1x32xf32>
    %72 = vector.extract_strided_slice %65 {offsets = [0, 0, 4, 0], sizes = [2, 1, 1, 32], strides = [1, 1, 1, 1]} : vector<2x1x16x32xf32> to vector<2x1x1x32xf32>
    %73 = vector.extract_strided_slice %65 {offsets = [0, 0, 5, 0], sizes = [2, 1, 1, 32], strides = [1, 1, 1, 1]} : vector<2x1x16x32xf32> to vector<2x1x1x32xf32>
    %74 = arith.maximumf %72, %73 : vector<2x1x1x32xf32>
    %75 = vector.extract_strided_slice %65 {offsets = [0, 0, 6, 0], sizes = [2, 1, 1, 32], strides = [1, 1, 1, 1]} : vector<2x1x16x32xf32> to vector<2x1x1x32xf32>
    %76 = vector.extract_strided_slice %65 {offsets = [0, 0, 7, 0], sizes = [2, 1, 1, 32], strides = [1, 1, 1, 1]} : vector<2x1x16x32xf32> to vector<2x1x1x32xf32>
    %77 = arith.maximumf %75, %76 : vector<2x1x1x32xf32>
    %78 = vector.extract_strided_slice %65 {offsets = [0, 0, 8, 0], sizes = [2, 1, 1, 32], strides = [1, 1, 1, 1]} : vector<2x1x16x32xf32> to vector<2x1x1x32xf32>
    %79 = vector.extract_strided_slice %65 {offsets = [0, 0, 9, 0], sizes = [2, 1, 1, 32], strides = [1, 1, 1, 1]} : vector<2x1x16x32xf32> to vector<2x1x1x32xf32>
    %80 = arith.maximumf %78, %79 : vector<2x1x1x32xf32>
    %81 = vector.extract_strided_slice %65 {offsets = [0, 0, 10, 0], sizes = [2, 1, 1, 32], strides = [1, 1, 1, 1]} : vector<2x1x16x32xf32> to vector<2x1x1x32xf32>
    %82 = vector.extract_strided_slice %65 {offsets = [0, 0, 11, 0], sizes = [2, 1, 1, 32], strides = [1, 1, 1, 1]} : vector<2x1x16x32xf32> to vector<2x1x1x32xf32>
    %83 = arith.maximumf %81, %82 : vector<2x1x1x32xf32>
    %84 = vector.extract_strided_slice %65 {offsets = [0, 0, 12, 0], sizes = [2, 1, 1, 32], strides = [1, 1, 1, 1]} : vector<2x1x16x32xf32> to vector<2x1x1x32xf32>
    %85 = vector.extract_strided_slice %65 {offsets = [0, 0, 13, 0], sizes = [2, 1, 1, 32], strides = [1, 1, 1, 1]} : vector<2x1x16x32xf32> to vector<2x1x1x32xf32>
    %86 = arith.maximumf %84, %85 : vector<2x1x1x32xf32>
    %87 = vector.extract_strided_slice %65 {offsets = [0, 0, 14, 0], sizes = [2, 1, 1, 32], strides = [1, 1, 1, 1]} : vector<2x1x16x32xf32> to vector<2x1x1x32xf32>
    %88 = vector.extract_strided_slice %65 {offsets = [0, 0, 15, 0], sizes = [2, 1, 1, 32], strides = [1, 1, 1, 1]} : vector<2x1x16x32xf32> to vector<2x1x1x32xf32>
    %89 = arith.maximumf %87, %88 : vector<2x1x1x32xf32>
    %90 = tpu.concatenate %68, %71, %74, %77, %80, %83, %86, %89 in 2 : vector<2x1x1x32xf32>, vector<2x1x1x32xf32>, vector<2x1x1x32xf32>, vector<2x1x1x32xf32>, vector<2x1x1x32xf32>, vector<2x1x1x32xf32>, vector<2x1x1x32xf32>, vector<2x1x1x32xf32> -> vector<2x1x8x32xf32>
    %91 = vector.extract_strided_slice %62 {offsets = [0, 2, 0, 0], sizes = [2, 1, 16, 32], strides = [1, 1, 1, 1]} : vector<2x16x16x32xf32> to vector<2x1x16x32xf32>
    %92 = vector.extract_strided_slice %62 {offsets = [0, 3, 0, 0], sizes = [2, 1, 16, 32], strides = [1, 1, 1, 1]} : vector<2x16x16x32xf32> to vector<2x1x16x32xf32>
    %93 = arith.maximumf %91, %92 : vector<2x1x16x32xf32>
    %94 = vector.extract_strided_slice %93 {offsets = [0, 0, 0, 0], sizes = [2, 1, 1, 32], strides = [1, 1, 1, 1]} : vector<2x1x16x32xf32> to vector<2x1x1x32xf32>
    %95 = vector.extract_strided_slice %93 {offsets = [0, 0, 1, 0], sizes = [2, 1, 1, 32], strides = [1, 1, 1, 1]} : vector<2x1x16x32xf32> to vector<2x1x1x32xf32>
    %96 = arith.maximumf %94, %95 : vector<2x1x1x32xf32>
    %97 = vector.extract_strided_slice %93 {offsets = [0, 0, 2, 0], sizes = [2, 1, 1, 32], strides = [1, 1, 1, 1]} : vector<2x1x16x32xf32> to vector<2x1x1x32xf32>
    %98 = vector.extract_strided_slice %93 {offsets = [0, 0, 3, 0], sizes = [2, 1, 1, 32], strides = [1, 1, 1, 1]} : vector<2x1x16x32xf32> to vector<2x1x1x32xf32>
    %99 = arith.maximumf %97, %98 : vector<2x1x1x32xf32>
    %100 = vector.extract_strided_slice %93 {offsets = [0, 0, 4, 0], sizes = [2, 1, 1, 32], strides = [1, 1, 1, 1]} : vector<2x1x16x32xf32> to vector<2x1x1x32xf32>
    %101 = vector.extract_strided_slice %93 {offsets = [0, 0, 5, 0], sizes = [2, 1, 1, 32], strides = [1, 1, 1, 1]} : vector<2x1x16x32xf32> to vector<2x1x1x32xf32>
    %102 = arith.maximumf %100, %101 : vector<2x1x1x32xf32>
    %103 = vector.extract_strided_slice %93 {offsets = [0, 0, 6, 0], sizes = [2, 1, 1, 32], strides = [1, 1, 1, 1]} : vector<2x1x16x32xf32> to vector<2x1x1x32xf32>
    %104 = vector.extract_strided_slice %93 {offsets = [0, 0, 7, 0], sizes = [2, 1, 1, 32], strides = [1, 1, 1, 1]} : vector<2x1x16x32xf32> to vector<2x1x1x32xf32>
    %105 = arith.maximumf %103, %104 : vector<2x1x1x32xf32>
    %106 = vector.extract_strided_slice %93 {offsets = [0, 0, 8, 0], sizes = [2, 1, 1, 32], strides = [1, 1, 1, 1]} : vector<2x1x16x32xf32> to vector<2x1x1x32xf32>
    %107 = vector.extract_strided_slice %93 {offsets = [0, 0, 9, 0], sizes = [2, 1, 1, 32], strides = [1, 1, 1, 1]} : vector<2x1x16x32xf32> to vector<2x1x1x32xf32>
    %108 = arith.maximumf %106, %107 : vector<2x1x1x32xf32>
    %109 = vector.extract_strided_slice %93 {offsets = [0, 0, 10, 0], sizes = [2, 1, 1, 32], strides = [1, 1, 1, 1]} : vector<2x1x16x32xf32> to vector<2x1x1x32xf32>
    %110 = vector.extract_strided_slice %93 {offsets = [0, 0, 11, 0], sizes = [2, 1, 1, 32], strides = [1, 1, 1, 1]} : vector<2x1x16x32xf32> to vector<2x1x1x32xf32>
    %111 = arith.maximumf %109, %110 : vector<2x1x1x32xf32>
    %112 = vector.extract_strided_slice %93 {offsets = [0, 0, 12, 0], sizes = [2, 1, 1, 32], strides = [1, 1, 1, 1]} : vector<2x1x16x32xf32> to vector<2x1x1x32xf32>
    %113 = vector.extract_strided_slice %93 {offsets = [0, 0, 13, 0], sizes = [2, 1, 1, 32], strides = [1, 1, 1, 1]} : vector<2x1x16x32xf32> to vector<2x1x1x32xf32>
    %114 = arith.maximumf %112, %113 : vector<2x1x1x32xf32>
    %115 = vector.extract_strided_slice %93 {offsets = [0, 0, 14, 0], sizes = [2, 1, 1, 32], strides = [1, 1, 1, 1]} : vector<2x1x16x32xf32> to vector<2x1x1x32xf32>
    %116 = vector.extract_strided_slice %93 {offsets = [0, 0, 15, 0], sizes = [2, 1, 1, 32], strides = [1, 1, 1, 1]} : vector<2x1x16x32xf32> to vector<2x1x1x32xf32>
    %117 = arith.maximumf %115, %116 : vector<2x1x1x32xf32>
    %118 = tpu.concatenate %96, %99, %102, %105, %108, %111, %114, %117 in 2 : vector<2x1x1x32xf32>, vector<2x1x1x32xf32>, vector<2x1x1x32xf32>, vector<2x1x1x32xf32>, vector<2x1x1x32xf32>, vector<2x1x1x32xf32>, vector<2x1x1x32xf32>, vector<2x1x1x32xf32> -> vector<2x1x8x32xf32>
    %119 = vector.extract_strided_slice %62 {offsets = [0, 4, 0, 0], sizes = [2, 1, 16, 32], strides = [1, 1, 1, 1]} : vector<2x16x16x32xf32> to vector<2x1x16x32xf32>
    %120 = vector.extract_strided_slice %62 {offsets = [0, 5, 0, 0], sizes = [2, 1, 16, 32], strides = [1, 1, 1, 1]} : vector<2x16x16x32xf32> to vector<2x1x16x32xf32>
    %121 = arith.maximumf %119, %120 : vector<2x1x16x32xf32>
    %122 = vector.extract_strided_slice %121 {offsets = [0, 0, 0, 0], sizes = [2, 1, 1, 32], strides = [1, 1, 1, 1]} : vector<2x1x16x32xf32> to vector<2x1x1x32xf32>
    %123 = vector.extract_strided_slice %121 {offsets = [0, 0, 1, 0], sizes = [2, 1, 1, 32], strides = [1, 1, 1, 1]} : vector<2x1x16x32xf32> to vector<2x1x1x32xf32>
    %124 = arith.maximumf %122, %123 : vector<2x1x1x32xf32>
    %125 = vector.extract_strided_slice %121 {offsets = [0, 0, 2, 0], sizes = [2, 1, 1, 32], strides = [1, 1, 1, 1]} : vector<2x1x16x32xf32> to vector<2x1x1x32xf32>
    %126 = vector.extract_strided_slice %121 {offsets = [0, 0, 3, 0], sizes = [2, 1, 1, 32], strides = [1, 1, 1, 1]} : vector<2x1x16x32xf32> to vector<2x1x1x32xf32>
    %127 = arith.maximumf %125, %126 : vector<2x1x1x32xf32>
    %128 = vector.extract_strided_slice %121 {offsets = [0, 0, 4, 0], sizes = [2, 1, 1, 32], strides = [1, 1, 1, 1]} : vector<2x1x16x32xf32> to vector<2x1x1x32xf32>
    %129 = vector.extract_strided_slice %121 {offsets = [0, 0, 5, 0], sizes = [2, 1, 1, 32], strides = [1, 1, 1, 1]} : vector<2x1x16x32xf32> to vector<2x1x1x32xf32>
    %130 = arith.maximumf %128, %129 : vector<2x1x1x32xf32>
    %131 = vector.extract_strided_slice %121 {offsets = [0, 0, 6, 0], sizes = [2, 1, 1, 32], strides = [1, 1, 1, 1]} : vector<2x1x16x32xf32> to vector<2x1x1x32xf32>
    %132 = vector.extract_strided_slice %121 {offsets = [0, 0, 7, 0], sizes = [2, 1, 1, 32], strides = [1, 1, 1, 1]} : vector<2x1x16x32xf32> to vector<2x1x1x32xf32>
    %133 = arith.maximumf %131, %132 : vector<2x1x1x32xf32>
    %134 = vector.extract_strided_slice %121 {offsets = [0, 0, 8, 0], sizes = [2, 1, 1, 32], strides = [1, 1, 1, 1]} : vector<2x1x16x32xf32> to vector<2x1x1x32xf32>
    %135 = vector.extract_strided_slice %121 {offsets = [0, 0, 9, 0], sizes = [2, 1, 1, 32], strides = [1, 1, 1, 1]} : vector<2x1x16x32xf32> to vector<2x1x1x32xf32>
    %136 = arith.maximumf %134, %135 : vector<2x1x1x32xf32>
    %137 = vector.extract_strided_slice %121 {offsets = [0, 0, 10, 0], sizes = [2, 1, 1, 32], strides = [1, 1, 1, 1]} : vector<2x1x16x32xf32> to vector<2x1x1x32xf32>
    %138 = vector.extract_strided_slice %121 {offsets = [0, 0, 11, 0], sizes = [2, 1, 1, 32], strides = [1, 1, 1, 1]} : vector<2x1x16x32xf32> to vector<2x1x1x32xf32>
    %139 = arith.maximumf %137, %138 : vector<2x1x1x32xf32>
    %140 = vector.extract_strided_slice %121 {offsets = [0, 0, 12, 0], sizes = [2, 1, 1, 32], strides = [1, 1, 1, 1]} : vector<2x1x16x32xf32> to vector<2x1x1x32xf32>
    %141 = vector.extract_strided_slice %121 {offsets = [0, 0, 13, 0], sizes = [2, 1, 1, 32], strides = [1, 1, 1, 1]} : vector<2x1x16x32xf32> to vector<2x1x1x32xf32>
    %142 = arith.maximumf %140, %141 : vector<2x1x1x32xf32>
    %143 = vector.extract_strided_slice %121 {offsets = [0, 0, 14, 0], sizes = [2, 1, 1, 32], strides = [1, 1, 1, 1]} : vector<2x1x16x32xf32> to vector<2x1x1x32xf32>
    %144 = vector.extract_strided_slice %121 {offsets = [0, 0, 15, 0], sizes = [2, 1, 1, 32], strides = [1, 1, 1, 1]} : vector<2x1x16x32xf32> to vector<2x1x1x32xf32>
    %145 = arith.maximumf %143, %144 : vector<2x1x1x32xf32>
    %146 = tpu.concatenate %124, %127, %130, %133, %136, %139, %142, %145 in 2 : vector<2x1x1x32xf32>, vector<2x1x1x32xf32>, vector<2x1x1x32xf32>, vector<2x1x1x32xf32>, vector<2x1x1x32xf32>, vector<2x1x1x32xf32>, vector<2x1x1x32xf32>, vector<2x1x1x32xf32> -> vector<2x1x8x32xf32>
    %147 = vector.extract_strided_slice %62 {offsets = [0, 6, 0, 0], sizes = [2, 1, 16, 32], strides = [1, 1, 1, 1]} : vector<2x16x16x32xf32> to vector<2x1x16x32xf32>
    %148 = vector.extract_strided_slice %62 {offsets = [0, 7, 0, 0], sizes = [2, 1, 16, 32], strides = [1, 1, 1, 1]} : vector<2x16x16x32xf32> to vector<2x1x16x32xf32>
    %149 = arith.maximumf %147, %148 : vector<2x1x16x32xf32>
    %150 = vector.extract_strided_slice %149 {offsets = [0, 0, 0, 0], sizes = [2, 1, 1, 32], strides = [1, 1, 1, 1]} : vector<2x1x16x32xf32> to vector<2x1x1x32xf32>
    %151 = vector.extract_strided_slice %149 {offsets = [0, 0, 1, 0], sizes = [2, 1, 1, 32], strides = [1, 1, 1, 1]} : vector<2x1x16x32xf32> to vector<2x1x1x32xf32>
    %152 = arith.maximumf %150, %151 : vector<2x1x1x32xf32>
    %153 = vector.extract_strided_slice %149 {offsets = [0, 0, 2, 0], sizes = [2, 1, 1, 32], strides = [1, 1, 1, 1]} : vector<2x1x16x32xf32> to vector<2x1x1x32xf32>
    %154 = vector.extract_strided_slice %149 {offsets = [0, 0, 3, 0], sizes = [2, 1, 1, 32], strides = [1, 1, 1, 1]} : vector<2x1x16x32xf32> to vector<2x1x1x32xf32>
    %155 = arith.maximumf %153, %154 : vector<2x1x1x32xf32>
    %156 = vector.extract_strided_slice %149 {offsets = [0, 0, 4, 0], sizes = [2, 1, 1, 32], strides = [1, 1, 1, 1]} : vector<2x1x16x32xf32> to vector<2x1x1x32xf32>
    %157 = vector.extract_strided_slice %149 {offsets = [0, 0, 5, 0], sizes = [2, 1, 1, 32], strides = [1, 1, 1, 1]} : vector<2x1x16x32xf32> to vector<2x1x1x32xf32>
    %158 = arith.maximumf %156, %157 : vector<2x1x1x32xf32>
    %159 = vector.extract_strided_slice %149 {offsets = [0, 0, 6, 0], sizes = [2, 1, 1, 32], strides = [1, 1, 1, 1]} : vector<2x1x16x32xf32> to vector<2x1x1x32xf32>
    %160 = vector.extract_strided_slice %149 {offsets = [0, 0, 7, 0], sizes = [2, 1, 1, 32], strides = [1, 1, 1, 1]} : vector<2x1x16x32xf32> to vector<2x1x1x32xf32>
    %161 = arith.maximumf %159, %160 : vector<2x1x1x32xf32>
    %162 = vector.extract_strided_slice %149 {offsets = [0, 0, 8, 0], sizes = [2, 1, 1, 32], strides = [1, 1, 1, 1]} : vector<2x1x16x32xf32> to vector<2x1x1x32xf32>
    %163 = vector.extract_strided_slice %149 {offsets = [0, 0, 9, 0], sizes = [2, 1, 1, 32], strides = [1, 1, 1, 1]} : vector<2x1x16x32xf32> to vector<2x1x1x32xf32>
    %164 = arith.maximumf %162, %163 : vector<2x1x1x32xf32>
    %165 = vector.extract_strided_slice %149 {offsets = [0, 0, 10, 0], sizes = [2, 1, 1, 32], strides = [1, 1, 1, 1]} : vector<2x1x16x32xf32> to vector<2x1x1x32xf32>
    %166 = vector.extract_strided_slice %149 {offsets = [0, 0, 11, 0], sizes = [2, 1, 1, 32], strides = [1, 1, 1, 1]} : vector<2x1x16x32xf32> to vector<2x1x1x32xf32>
    %167 = arith.maximumf %165, %166 : vector<2x1x1x32xf32>
    %168 = vector.extract_strided_slice %149 {offsets = [0, 0, 12, 0], sizes = [2, 1, 1, 32], strides = [1, 1, 1, 1]} : vector<2x1x16x32xf32> to vector<2x1x1x32xf32>
    %169 = vector.extract_strided_slice %149 {offsets = [0, 0, 13, 0], sizes = [2, 1, 1, 32], strides = [1, 1, 1, 1]} : vector<2x1x16x32xf32> to vector<2x1x1x32xf32>
    %170 = arith.maximumf %168, %169 : vector<2x1x1x32xf32>
    %171 = vector.extract_strided_slice %149 {offsets = [0, 0, 14, 0], sizes = [2, 1, 1, 32], strides = [1, 1, 1, 1]} : vector<2x1x16x32xf32> to vector<2x1x1x32xf32>
    %172 = vector.extract_strided_slice %149 {offsets = [0, 0, 15, 0], sizes = [2, 1, 1, 32], strides = [1, 1, 1, 1]} : vector<2x1x16x32xf32> to vector<2x1x1x32xf32>
    %173 = arith.maximumf %171, %172 : vector<2x1x1x32xf32>
    %174 = tpu.concatenate %152, %155, %158, %161, %164, %167, %170, %173 in 2 : vector<2x1x1x32xf32>, vector<2x1x1x32xf32>, vector<2x1x1x32xf32>, vector<2x1x1x32xf32>, vector<2x1x1x32xf32>, vector<2x1x1x32xf32>, vector<2x1x1x32xf32>, vector<2x1x1x32xf32> -> vector<2x1x8x32xf32>
    %175 = vector.extract_strided_slice %62 {offsets = [0, 8, 0, 0], sizes = [2, 1, 16, 32], strides = [1, 1, 1, 1]} : vector<2x16x16x32xf32> to vector<2x1x16x32xf32>
    %176 = vector.extract_strided_slice %62 {offsets = [0, 9, 0, 0], sizes = [2, 1, 16, 32], strides = [1, 1, 1, 1]} : vector<2x16x16x32xf32> to vector<2x1x16x32xf32>
    %177 = arith.maximumf %175, %176 : vector<2x1x16x32xf32>
    %178 = vector.extract_strided_slice %177 {offsets = [0, 0, 0, 0], sizes = [2, 1, 1, 32], strides = [1, 1, 1, 1]} : vector<2x1x16x32xf32> to vector<2x1x1x32xf32>
    %179 = vector.extract_strided_slice %177 {offsets = [0, 0, 1, 0], sizes = [2, 1, 1, 32], strides = [1, 1, 1, 1]} : vector<2x1x16x32xf32> to vector<2x1x1x32xf32>
    %180 = arith.maximumf %178, %179 : vector<2x1x1x32xf32>
    %181 = vector.extract_strided_slice %177 {offsets = [0, 0, 2, 0], sizes = [2, 1, 1, 32], strides = [1, 1, 1, 1]} : vector<2x1x16x32xf32> to vector<2x1x1x32xf32>
    %182 = vector.extract_strided_slice %177 {offsets = [0, 0, 3, 0], sizes = [2, 1, 1, 32], strides = [1, 1, 1, 1]} : vector<2x1x16x32xf32> to vector<2x1x1x32xf32>
    %183 = arith.maximumf %181, %182 : vector<2x1x1x32xf32>
    %184 = vector.extract_strided_slice %177 {offsets = [0, 0, 4, 0], sizes = [2, 1, 1, 32], strides = [1, 1, 1, 1]} : vector<2x1x16x32xf32> to vector<2x1x1x32xf32>
    %185 = vector.extract_strided_slice %177 {offsets = [0, 0, 5, 0], sizes = [2, 1, 1, 32], strides = [1, 1, 1, 1]} : vector<2x1x16x32xf32> to vector<2x1x1x32xf32>
    %186 = arith.maximumf %184, %185 : vector<2x1x1x32xf32>
    %187 = vector.extract_strided_slice %177 {offsets = [0, 0, 6, 0], sizes = [2, 1, 1, 32], strides = [1, 1, 1, 1]} : vector<2x1x16x32xf32> to vector<2x1x1x32xf32>
    %188 = vector.extract_strided_slice %177 {offsets = [0, 0, 7, 0], sizes = [2, 1, 1, 32], strides = [1, 1, 1, 1]} : vector<2x1x16x32xf32> to vector<2x1x1x32xf32>
    %189 = arith.maximumf %187, %188 : vector<2x1x1x32xf32>
    %190 = vector.extract_strided_slice %177 {offsets = [0, 0, 8, 0], sizes = [2, 1, 1, 32], strides = [1, 1, 1, 1]} : vector<2x1x16x32xf32> to vector<2x1x1x32xf32>
    %191 = vector.extract_strided_slice %177 {offsets = [0, 0, 9, 0], sizes = [2, 1, 1, 32], strides = [1, 1, 1, 1]} : vector<2x1x16x32xf32> to vector<2x1x1x32xf32>
    %192 = arith.maximumf %190, %191 : vector<2x1x1x32xf32>
    %193 = vector.extract_strided_slice %177 {offsets = [0, 0, 10, 0], sizes = [2, 1, 1, 32], strides = [1, 1, 1, 1]} : vector<2x1x16x32xf32> to vector<2x1x1x32xf32>
    %194 = vector.extract_strided_slice %177 {offsets = [0, 0, 11, 0], sizes = [2, 1, 1, 32], strides = [1, 1, 1, 1]} : vector<2x1x16x32xf32> to vector<2x1x1x32xf32>
    %195 = arith.maximumf %193, %194 : vector<2x1x1x32xf32>
    %196 = vector.extract_strided_slice %177 {offsets = [0, 0, 12, 0], sizes = [2, 1, 1, 32], strides = [1, 1, 1, 1]} : vector<2x1x16x32xf32> to vector<2x1x1x32xf32>
    %197 = vector.extract_strided_slice %177 {offsets = [0, 0, 13, 0], sizes = [2, 1, 1, 32], strides = [1, 1, 1, 1]} : vector<2x1x16x32xf32> to vector<2x1x1x32xf32>
    %198 = arith.maximumf %196, %197 : vector<2x1x1x32xf32>
    %199 = vector.extract_strided_slice %177 {offsets = [0, 0, 14, 0], sizes = [2, 1, 1, 32], strides = [1, 1, 1, 1]} : vector<2x1x16x32xf32> to vector<2x1x1x32xf32>
    %200 = vector.extract_strided_slice %177 {offsets = [0, 0, 15, 0], sizes = [2, 1, 1, 32], strides = [1, 1, 1, 1]} : vector<2x1x16x32xf32> to vector<2x1x1x32xf32>
    %201 = arith.maximumf %199, %200 : vector<2x1x1x32xf32>
    %202 = tpu.concatenate %180, %183, %186, %189, %192, %195, %198, %201 in 2 : vector<2x1x1x32xf32>, vector<2x1x1x32xf32>, vector<2x1x1x32xf32>, vector<2x1x1x32xf32>, vector<2x1x1x32xf32>, vector<2x1x1x32xf32>, vector<2x1x1x32xf32>, vector<2x1x1x32xf32> -> vector<2x1x8x32xf32>
    %203 = vector.extract_strided_slice %62 {offsets = [0, 10, 0, 0], sizes = [2, 1, 16, 32], strides = [1, 1, 1, 1]} : vector<2x16x16x32xf32> to vector<2x1x16x32xf32>
    %204 = vector.extract_strided_slice %62 {offsets = [0, 11, 0, 0], sizes = [2, 1, 16, 32], strides = [1, 1, 1, 1]} : vector<2x16x16x32xf32> to vector<2x1x16x32xf32>
    %205 = arith.maximumf %203, %204 : vector<2x1x16x32xf32>
    %206 = vector.extract_strided_slice %205 {offsets = [0, 0, 0, 0], sizes = [2, 1, 1, 32], strides = [1, 1, 1, 1]} : vector<2x1x16x32xf32> to vector<2x1x1x32xf32>
    %207 = vector.extract_strided_slice %205 {offsets = [0, 0, 1, 0], sizes = [2, 1, 1, 32], strides = [1, 1, 1, 1]} : vector<2x1x16x32xf32> to vector<2x1x1x32xf32>
    %208 = arith.maximumf %206, %207 : vector<2x1x1x32xf32>
    %209 = vector.extract_strided_slice %205 {offsets = [0, 0, 2, 0], sizes = [2, 1, 1, 32], strides = [1, 1, 1, 1]} : vector<2x1x16x32xf32> to vector<2x1x1x32xf32>
    %210 = vector.extract_strided_slice %205 {offsets = [0, 0, 3, 0], sizes = [2, 1, 1, 32], strides = [1, 1, 1, 1]} : vector<2x1x16x32xf32> to vector<2x1x1x32xf32>
    %211 = arith.maximumf %209, %210 : vector<2x1x1x32xf32>
    %212 = vector.extract_strided_slice %205 {offsets = [0, 0, 4, 0], sizes = [2, 1, 1, 32], strides = [1, 1, 1, 1]} : vector<2x1x16x32xf32> to vector<2x1x1x32xf32>
    %213 = vector.extract_strided_slice %205 {offsets = [0, 0, 5, 0], sizes = [2, 1, 1, 32], strides = [1, 1, 1, 1]} : vector<2x1x16x32xf32> to vector<2x1x1x32xf32>
    %214 = arith.maximumf %212, %213 : vector<2x1x1x32xf32>
    %215 = vector.extract_strided_slice %205 {offsets = [0, 0, 6, 0], sizes = [2, 1, 1, 32], strides = [1, 1, 1, 1]} : vector<2x1x16x32xf32> to vector<2x1x1x32xf32>
    %216 = vector.extract_strided_slice %205 {offsets = [0, 0, 7, 0], sizes = [2, 1, 1, 32], strides = [1, 1, 1, 1]} : vector<2x1x16x32xf32> to vector<2x1x1x32xf32>
    %217 = arith.maximumf %215, %216 : vector<2x1x1x32xf32>
    %218 = vector.extract_strided_slice %205 {offsets = [0, 0, 8, 0], sizes = [2, 1, 1, 32], strides = [1, 1, 1, 1]} : vector<2x1x16x32xf32> to vector<2x1x1x32xf32>
    %219 = vector.extract_strided_slice %205 {offsets = [0, 0, 9, 0], sizes = [2, 1, 1, 32], strides = [1, 1, 1, 1]} : vector<2x1x16x32xf32> to vector<2x1x1x32xf32>
    %220 = arith.maximumf %218, %219 : vector<2x1x1x32xf32>
    %221 = vector.extract_strided_slice %205 {offsets = [0, 0, 10, 0], sizes = [2, 1, 1, 32], strides = [1, 1, 1, 1]} : vector<2x1x16x32xf32> to vector<2x1x1x32xf32>
    %222 = vector.extract_strided_slice %205 {offsets = [0, 0, 11, 0], sizes = [2, 1, 1, 32], strides = [1, 1, 1, 1]} : vector<2x1x16x32xf32> to vector<2x1x1x32xf32>
    %223 = arith.maximumf %221, %222 : vector<2x1x1x32xf32>
    %224 = vector.extract_strided_slice %205 {offsets = [0, 0, 12, 0], sizes = [2, 1, 1, 32], strides = [1, 1, 1, 1]} : vector<2x1x16x32xf32> to vector<2x1x1x32xf32>
    %225 = vector.extract_strided_slice %205 {offsets = [0, 0, 13, 0], sizes = [2, 1, 1, 32], strides = [1, 1, 1, 1]} : vector<2x1x16x32xf32> to vector<2x1x1x32xf32>
    %226 = arith.maximumf %224, %225 : vector<2x1x1x32xf32>
    %227 = vector.extract_strided_slice %205 {offsets = [0, 0, 14, 0], sizes = [2, 1, 1, 32], strides = [1, 1, 1, 1]} : vector<2x1x16x32xf32> to vector<2x1x1x32xf32>
    %228 = vector.extract_strided_slice %205 {offsets = [0, 0, 15, 0], sizes = [2, 1, 1, 32], strides = [1, 1, 1, 1]} : vector<2x1x16x32xf32> to vector<2x1x1x32xf32>
    %229 = arith.maximumf %227, %228 : vector<2x1x1x32xf32>
    %230 = tpu.concatenate %208, %211, %214, %217, %220, %223, %226, %229 in 2 : vector<2x1x1x32xf32>, vector<2x1x1x32xf32>, vector<2x1x1x32xf32>, vector<2x1x1x32xf32>, vector<2x1x1x32xf32>, vector<2x1x1x32xf32>, vector<2x1x1x32xf32>, vector<2x1x1x32xf32> -> vector<2x1x8x32xf32>
    %231 = vector.extract_strided_slice %62 {offsets = [0, 12, 0, 0], sizes = [2, 1, 16, 32], strides = [1, 1, 1, 1]} : vector<2x16x16x32xf32> to vector<2x1x16x32xf32>
    %232 = vector.extract_strided_slice %62 {offsets = [0, 13, 0, 0], sizes = [2, 1, 16, 32], strides = [1, 1, 1, 1]} : vector<2x16x16x32xf32> to vector<2x1x16x32xf32>
    %233 = arith.maximumf %231, %232 : vector<2x1x16x32xf32>
    %234 = vector.extract_strided_slice %233 {offsets = [0, 0, 0, 0], sizes = [2, 1, 1, 32], strides = [1, 1, 1, 1]} : vector<2x1x16x32xf32> to vector<2x1x1x32xf32>
    %235 = vector.extract_strided_slice %233 {offsets = [0, 0, 1, 0], sizes = [2, 1, 1, 32], strides = [1, 1, 1, 1]} : vector<2x1x16x32xf32> to vector<2x1x1x32xf32>
    %236 = arith.maximumf %234, %235 : vector<2x1x1x32xf32>
    %237 = vector.extract_strided_slice %233 {offsets = [0, 0, 2, 0], sizes = [2, 1, 1, 32], strides = [1, 1, 1, 1]} : vector<2x1x16x32xf32> to vector<2x1x1x32xf32>
    %238 = vector.extract_strided_slice %233 {offsets = [0, 0, 3, 0], sizes = [2, 1, 1, 32], strides = [1, 1, 1, 1]} : vector<2x1x16x32xf32> to vector<2x1x1x32xf32>
    %239 = arith.maximumf %237, %238 : vector<2x1x1x32xf32>
    %240 = vector.extract_strided_slice %233 {offsets = [0, 0, 4, 0], sizes = [2, 1, 1, 32], strides = [1, 1, 1, 1]} : vector<2x1x16x32xf32> to vector<2x1x1x32xf32>
    %241 = vector.extract_strided_slice %233 {offsets = [0, 0, 5, 0], sizes = [2, 1, 1, 32], strides = [1, 1, 1, 1]} : vector<2x1x16x32xf32> to vector<2x1x1x32xf32>
    %242 = arith.maximumf %240, %241 : vector<2x1x1x32xf32>
    %243 = vector.extract_strided_slice %233 {offsets = [0, 0, 6, 0], sizes = [2, 1, 1, 32], strides = [1, 1, 1, 1]} : vector<2x1x16x32xf32> to vector<2x1x1x32xf32>
    %244 = vector.extract_strided_slice %233 {offsets = [0, 0, 7, 0], sizes = [2, 1, 1, 32], strides = [1, 1, 1, 1]} : vector<2x1x16x32xf32> to vector<2x1x1x32xf32>
    %245 = arith.maximumf %243, %244 : vector<2x1x1x32xf32>
    %246 = vector.extract_strided_slice %233 {offsets = [0, 0, 8, 0], sizes = [2, 1, 1, 32], strides = [1, 1, 1, 1]} : vector<2x1x16x32xf32> to vector<2x1x1x32xf32>
    %247 = vector.extract_strided_slice %233 {offsets = [0, 0, 9, 0], sizes = [2, 1, 1, 32], strides = [1, 1, 1, 1]} : vector<2x1x16x32xf32> to vector<2x1x1x32xf32>
    %248 = arith.maximumf %246, %247 : vector<2x1x1x32xf32>
    %249 = vector.extract_strided_slice %233 {offsets = [0, 0, 10, 0], sizes = [2, 1, 1, 32], strides = [1, 1, 1, 1]} : vector<2x1x16x32xf32> to vector<2x1x1x32xf32>
    %250 = vector.extract_strided_slice %233 {offsets = [0, 0, 11, 0], sizes = [2, 1, 1, 32], strides = [1, 1, 1, 1]} : vector<2x1x16x32xf32> to vector<2x1x1x32xf32>
    %251 = arith.maximumf %249, %250 : vector<2x1x1x32xf32>
    %252 = vector.extract_strided_slice %233 {offsets = [0, 0, 12, 0], sizes = [2, 1, 1, 32], strides = [1, 1, 1, 1]} : vector<2x1x16x32xf32> to vector<2x1x1x32xf32>
    %253 = vector.extract_strided_slice %233 {offsets = [0, 0, 13, 0], sizes = [2, 1, 1, 32], strides = [1, 1, 1, 1]} : vector<2x1x16x32xf32> to vector<2x1x1x32xf32>
    %254 = arith.maximumf %252, %253 : vector<2x1x1x32xf32>
    %255 = vector.extract_strided_slice %233 {offsets = [0, 0, 14, 0], sizes = [2, 1, 1, 32], strides = [1, 1, 1, 1]} : vector<2x1x16x32xf32> to vector<2x1x1x32xf32>
    %256 = vector.extract_strided_slice %233 {offsets = [0, 0, 15, 0], sizes = [2, 1, 1, 32], strides = [1, 1, 1, 1]} : vector<2x1x16x32xf32> to vector<2x1x1x32xf32>
    %257 = arith.maximumf %255, %256 : vector<2x1x1x32xf32>
    %258 = tpu.concatenate %236, %239, %242, %245, %248, %251, %254, %257 in 2 : vector<2x1x1x32xf32>, vector<2x1x1x32xf32>, vector<2x1x1x32xf32>, vector<2x1x1x32xf32>, vector<2x1x1x32xf32>, vector<2x1x1x32xf32>, vector<2x1x1x32xf32>, vector<2x1x1x32xf32> -> vector<2x1x8x32xf32>
    %259 = vector.extract_strided_slice %62 {offsets = [0, 14, 0, 0], sizes = [2, 1, 16, 32], strides = [1, 1, 1, 1]} : vector<2x16x16x32xf32> to vector<2x1x16x32xf32>
    %260 = vector.extract_strided_slice %62 {offsets = [0, 15, 0, 0], sizes = [2, 1, 16, 32], strides = [1, 1, 1, 1]} : vector<2x16x16x32xf32> to vector<2x1x16x32xf32>
    %261 = arith.maximumf %259, %260 : vector<2x1x16x32xf32>
    %262 = vector.extract_strided_slice %261 {offsets = [0, 0, 0, 0], sizes = [2, 1, 1, 32], strides = [1, 1, 1, 1]} : vector<2x1x16x32xf32> to vector<2x1x1x32xf32>
    %263 = vector.extract_strided_slice %261 {offsets = [0, 0, 1, 0], sizes = [2, 1, 1, 32], strides = [1, 1, 1, 1]} : vector<2x1x16x32xf32> to vector<2x1x1x32xf32>
    %264 = arith.maximumf %262, %263 : vector<2x1x1x32xf32>
    %265 = vector.extract_strided_slice %261 {offsets = [0, 0, 2, 0], sizes = [2, 1, 1, 32], strides = [1, 1, 1, 1]} : vector<2x1x16x32xf32> to vector<2x1x1x32xf32>
    %266 = vector.extract_strided_slice %261 {offsets = [0, 0, 3, 0], sizes = [2, 1, 1, 32], strides = [1, 1, 1, 1]} : vector<2x1x16x32xf32> to vector<2x1x1x32xf32>
    %267 = arith.maximumf %265, %266 : vector<2x1x1x32xf32>
    %268 = vector.extract_strided_slice %261 {offsets = [0, 0, 4, 0], sizes = [2, 1, 1, 32], strides = [1, 1, 1, 1]} : vector<2x1x16x32xf32> to vector<2x1x1x32xf32>
    %269 = vector.extract_strided_slice %261 {offsets = [0, 0, 5, 0], sizes = [2, 1, 1, 32], strides = [1, 1, 1, 1]} : vector<2x1x16x32xf32> to vector<2x1x1x32xf32>
    %270 = arith.maximumf %268, %269 : vector<2x1x1x32xf32>
    %271 = vector.extract_strided_slice %261 {offsets = [0, 0, 6, 0], sizes = [2, 1, 1, 32], strides = [1, 1, 1, 1]} : vector<2x1x16x32xf32> to vector<2x1x1x32xf32>
    %272 = vector.extract_strided_slice %261 {offsets = [0, 0, 7, 0], sizes = [2, 1, 1, 32], strides = [1, 1, 1, 1]} : vector<2x1x16x32xf32> to vector<2x1x1x32xf32>
    %273 = arith.maximumf %271, %272 : vector<2x1x1x32xf32>
    %274 = vector.extract_strided_slice %261 {offsets = [0, 0, 8, 0], sizes = [2, 1, 1, 32], strides = [1, 1, 1, 1]} : vector<2x1x16x32xf32> to vector<2x1x1x32xf32>
    %275 = vector.extract_strided_slice %261 {offsets = [0, 0, 9, 0], sizes = [2, 1, 1, 32], strides = [1, 1, 1, 1]} : vector<2x1x16x32xf32> to vector<2x1x1x32xf32>
    %276 = arith.maximumf %274, %275 : vector<2x1x1x32xf32>
    %277 = vector.extract_strided_slice %261 {offsets = [0, 0, 10, 0], sizes = [2, 1, 1, 32], strides = [1, 1, 1, 1]} : vector<2x1x16x32xf32> to vector<2x1x1x32xf32>
    %278 = vector.extract_strided_slice %261 {offsets = [0, 0, 11, 0], sizes = [2, 1, 1, 32], strides = [1, 1, 1, 1]} : vector<2x1x16x32xf32> to vector<2x1x1x32xf32>
    %279 = arith.maximumf %277, %278 : vector<2x1x1x32xf32>
    %280 = vector.extract_strided_slice %261 {offsets = [0, 0, 12, 0], sizes = [2, 1, 1, 32], strides = [1, 1, 1, 1]} : vector<2x1x16x32xf32> to vector<2x1x1x32xf32>
    %281 = vector.extract_strided_slice %261 {offsets = [0, 0, 13, 0], sizes = [2, 1, 1, 32], strides = [1, 1, 1, 1]} : vector<2x1x16x32xf32> to vector<2x1x1x32xf32>
    %282 = arith.maximumf %280, %281 : vector<2x1x1x32xf32>
    %283 = vector.extract_strided_slice %261 {offsets = [0, 0, 14, 0], sizes = [2, 1, 1, 32], strides = [1, 1, 1, 1]} : vector<2x1x16x32xf32> to vector<2x1x1x32xf32>
    %284 = vector.extract_strided_slice %261 {offsets = [0, 0, 15, 0], sizes = [2, 1, 1, 32], strides = [1, 1, 1, 1]} : vector<2x1x16x32xf32> to vector<2x1x1x32xf32>
    %285 = arith.maximumf %283, %284 : vector<2x1x1x32xf32>
    %286 = tpu.concatenate %264, %267, %270, %273, %276, %279, %282, %285 in 2 : vector<2x1x1x32xf32>, vector<2x1x1x32xf32>, vector<2x1x1x32xf32>, vector<2x1x1x32xf32>, vector<2x1x1x32xf32>, vector<2x1x1x32xf32>, vector<2x1x1x32xf32>, vector<2x1x1x32xf32> -> vector<2x1x8x32xf32>
    %287 = tpu.concatenate %90, %118, %146, %174, %202, %230, %258, %286 in 1 : vector<2x1x8x32xf32>, vector<2x1x8x32xf32>, vector<2x1x8x32xf32>, vector<2x1x8x32xf32>, vector<2x1x8x32xf32>, vector<2x1x8x32xf32>, vector<2x1x8x32xf32>, vector<2x1x8x32xf32> -> vector<2x8x8x32xf32>
    %288 = vector.shape_cast %287 : vector<2x8x8x32xf32> to vector<128x32xf32>
    %289 = arith.truncf %288 : vector<128x32xf32> to vector<128x32xbf16>
    %c0_19 = arith.constant 0 : index
    %c0_20 = arith.constant 0 : index
    %290 = vector.load %arg4[%c0_19, %c0_20] : memref<32x256xbf16, #tpu.memory_space<vmem>>, vector<32x256xbf16>
    %cst_21 = arith.constant dense<0.000000e+00> : vector<128x256xf32>
    %291 = tpu.matmul %289, %290, %cst_21 {dimension_numbers = #tpu.dot_dimension_numbers<[1], [0], [0], [1], [0, 0, 1, 1], [], []>} : vector<128x32xbf16>, vector<32x256xbf16>, vector<128x256xf32> -> vector<128x256xf32>
    %292 = vector.shape_cast %291 : vector<128x256xf32> to vector<2x8x8x256xf32>
    %293 = vector.extract_strided_slice %292 {offsets = [0, 0, 0, 0], sizes = [2, 8, 8, 64], strides = [1, 1, 1, 1]} : vector<2x8x8x256xf32> to vector<2x8x8x64xf32>
    %cst_22 = arith.constant 0.000000e+00 : f32
    %294 = vector.broadcast %cst_22 : f32 to vector<2x1x8x64xf32>
    %295 = tpu.concatenate %294, %293 in 1 : vector<2x1x8x64xf32>, vector<2x8x8x64xf32> -> vector<2x9x8x64xf32>
    %cst_23 = arith.constant 0.000000e+00 : f32
    %296 = vector.broadcast %cst_23 : f32 to vector<2x9x1x64xf32>
    %297 = tpu.concatenate %296, %295 in 2 : vector<2x9x1x64xf32>, vector<2x9x8x64xf32> -> vector<2x9x9x64xf32>
    %298 = vector.extract_strided_slice %292 {offsets = [0, 0, 0, 64], sizes = [2, 8, 8, 64], strides = [1, 1, 1, 1]} : vector<2x8x8x256xf32> to vector<2x8x8x64xf32>
    %cst_24 = arith.constant 0.000000e+00 : f32
    %299 = vector.broadcast %cst_24 : f32 to vector<2x1x8x64xf32>
    %300 = tpu.concatenate %299, %298 in 1 : vector<2x1x8x64xf32>, vector<2x8x8x64xf32> -> vector<2x9x8x64xf32>
    %cst_25 = arith.constant 0.000000e+00 : f32
    %301 = vector.broadcast %cst_25 : f32 to vector<2x9x1x64xf32>
    %302 = tpu.concatenate %300, %301 in 2 : vector<2x9x8x64xf32>, vector<2x9x1x64xf32> -> vector<2x9x9x64xf32>
    %303 = arith.addf %297, %302 : vector<2x9x9x64xf32>
    %304 = vector.extract_strided_slice %292 {offsets = [0, 0, 0, 128], sizes = [2, 8, 8, 64], strides = [1, 1, 1, 1]} : vector<2x8x8x256xf32> to vector<2x8x8x64xf32>
    %cst_26 = arith.constant 0.000000e+00 : f32
    %305 = vector.broadcast %cst_26 : f32 to vector<2x1x8x64xf32>
    %306 = tpu.concatenate %304, %305 in 1 : vector<2x8x8x64xf32>, vector<2x1x8x64xf32> -> vector<2x9x8x64xf32>
    %cst_27 = arith.constant 0.000000e+00 : f32
    %307 = vector.broadcast %cst_27 : f32 to vector<2x9x1x64xf32>
    %308 = tpu.concatenate %307, %306 in 2 : vector<2x9x1x64xf32>, vector<2x9x8x64xf32> -> vector<2x9x9x64xf32>
    %309 = arith.addf %303, %308 : vector<2x9x9x64xf32>
    %310 = vector.extract_strided_slice %292 {offsets = [0, 0, 0, 192], sizes = [2, 8, 8, 64], strides = [1, 1, 1, 1]} : vector<2x8x8x256xf32> to vector<2x8x8x64xf32>
    %cst_28 = arith.constant 0.000000e+00 : f32
    %311 = vector.broadcast %cst_28 : f32 to vector<2x1x8x64xf32>
    %312 = tpu.concatenate %310, %311 in 1 : vector<2x8x8x64xf32>, vector<2x1x8x64xf32> -> vector<2x9x8x64xf32>
    %cst_29 = arith.constant 0.000000e+00 : f32
    %313 = vector.broadcast %cst_29 : f32 to vector<2x9x1x64xf32>
    %314 = tpu.concatenate %312, %313 in 2 : vector<2x9x8x64xf32>, vector<2x9x1x64xf32> -> vector<2x9x9x64xf32>
    %315 = arith.addf %309, %314 : vector<2x9x9x64xf32>
    %c0_30 = arith.constant 0 : index
    %c0_31 = arith.constant 0 : index
    %316 = vector.load %arg5[%c0_30, %c0_31] : memref<1x64xf32, #tpu.memory_space<vmem>>, vector<1x64xf32>
    %c0_32 = arith.constant 0 : index
    %c0_33 = arith.constant 0 : index
    %317 = vector.load %arg6[%c0_32, %c0_33] : memref<1x64xf32, #tpu.memory_space<vmem>>, vector<1x64xf32>
    %cst_34 = arith.constant dense<0.000000e+00> : vector<9x9x64xf32>
    %318 = vector.multi_reduction <add>, %315, %cst_34 [0] : vector<2x9x9x64xf32> to vector<9x9x64xf32>
    %cst_35 = arith.constant dense<0.000000e+00> : vector<9x64xf32>
    %319 = vector.multi_reduction <add>, %318, %cst_35 [0] : vector<9x9x64xf32> to vector<9x64xf32>
    %cst_36 = arith.constant dense<0.000000e+00> : vector<64xf32>
    %320 = vector.multi_reduction <add>, %319, %cst_36 [0] : vector<9x64xf32> to vector<64xf32>
    %321 = arith.mulf %315, %315 : vector<2x9x9x64xf32>
    %cst_37 = arith.constant dense<0.000000e+00> : vector<9x9x64xf32>
    %322 = vector.multi_reduction <add>, %321, %cst_37 [0] : vector<2x9x9x64xf32> to vector<9x9x64xf32>
    %cst_38 = arith.constant dense<0.000000e+00> : vector<9x64xf32>
    %323 = vector.multi_reduction <add>, %322, %cst_38 [0] : vector<9x9x64xf32> to vector<9x64xf32>
    %cst_39 = arith.constant dense<0.000000e+00> : vector<64xf32>
    %324 = vector.multi_reduction <add>, %323, %cst_39 [0] : vector<9x64xf32> to vector<64xf32>
    %cst_40 = arith.constant 0.00617283955 : f32
    %325 = vector.broadcast %cst_40 : f32 to vector<64xf32>
    %326 = arith.mulf %320, %325 : vector<64xf32>
    %cst_41 = arith.constant 0.00617283955 : f32
    %327 = vector.broadcast %cst_41 : f32 to vector<64xf32>
    %328 = arith.mulf %324, %327 : vector<64xf32>
    %329 = arith.mulf %326, %326 : vector<64xf32>
    %330 = arith.subf %328, %329 : vector<64xf32>
    %cst_42 = arith.constant 0.000000e+00 : f32
    %331 = vector.broadcast %cst_42 : f32 to vector<64xf32>
    %332 = arith.maximumf %330, %331 : vector<64xf32>
    %cst_43 = arith.constant 9.99999974E-6 : f32
    %333 = vector.broadcast %cst_43 : f32 to vector<64xf32>
    %334 = arith.addf %332, %333 : vector<64xf32>
    %335 = math.rsqrt %334 : vector<64xf32>
    %336 = vector.shape_cast %335 : vector<64xf32> to vector<1x64xf32>
    %337 = arith.mulf %316, %336 : vector<1x64xf32>
    %338 = vector.shape_cast %326 : vector<64xf32> to vector<1x64xf32>
    %339 = arith.mulf %338, %337 : vector<1x64xf32>
    %340 = arith.subf %317, %339 : vector<1x64xf32>
    %341 = vector.extract_strided_slice %315 {offsets = [0, 0, 0, 0], sizes = [2, 8, 8, 64], strides = [1, 1, 1, 1]} : vector<2x9x9x64xf32> to vector<2x8x8x64xf32>
    %342 = vector.shape_cast %337 : vector<1x64xf32> to vector<1x1x1x64xf32>
    %343 = vector.broadcast %342 : vector<1x1x1x64xf32> to vector<2x8x8x64xf32>
    %344 = arith.mulf %341, %343 : vector<2x8x8x64xf32>
    %345 = vector.shape_cast %340 : vector<1x64xf32> to vector<1x1x1x64xf32>
    %346 = vector.broadcast %345 : vector<1x1x1x64xf32> to vector<2x8x8x64xf32>
    %347 = arith.addf %344, %346 : vector<2x8x8x64xf32>
    %cst_44 = arith.constant 0.000000e+00 : f32
    %348 = vector.broadcast %cst_44 : f32 to vector<2x8x8x64xf32>
    %349 = arith.maximumf %347, %348 : vector<2x8x8x64xf32>
    %350 = vector.extract_strided_slice %349 {offsets = [0, 0, 0, 0], sizes = [2, 1, 8, 64], strides = [1, 1, 1, 1]} : vector<2x8x8x64xf32> to vector<2x1x8x64xf32>
    %351 = vector.extract_strided_slice %349 {offsets = [0, 1, 0, 0], sizes = [2, 1, 8, 64], strides = [1, 1, 1, 1]} : vector<2x8x8x64xf32> to vector<2x1x8x64xf32>
    %352 = arith.maximumf %350, %351 : vector<2x1x8x64xf32>
    %353 = vector.extract_strided_slice %352 {offsets = [0, 0, 0, 0], sizes = [2, 1, 1, 64], strides = [1, 1, 1, 1]} : vector<2x1x8x64xf32> to vector<2x1x1x64xf32>
    %354 = vector.extract_strided_slice %352 {offsets = [0, 0, 1, 0], sizes = [2, 1, 1, 64], strides = [1, 1, 1, 1]} : vector<2x1x8x64xf32> to vector<2x1x1x64xf32>
    %355 = arith.maximumf %353, %354 : vector<2x1x1x64xf32>
    %356 = vector.extract_strided_slice %352 {offsets = [0, 0, 2, 0], sizes = [2, 1, 1, 64], strides = [1, 1, 1, 1]} : vector<2x1x8x64xf32> to vector<2x1x1x64xf32>
    %357 = vector.extract_strided_slice %352 {offsets = [0, 0, 3, 0], sizes = [2, 1, 1, 64], strides = [1, 1, 1, 1]} : vector<2x1x8x64xf32> to vector<2x1x1x64xf32>
    %358 = arith.maximumf %356, %357 : vector<2x1x1x64xf32>
    %359 = vector.extract_strided_slice %352 {offsets = [0, 0, 4, 0], sizes = [2, 1, 1, 64], strides = [1, 1, 1, 1]} : vector<2x1x8x64xf32> to vector<2x1x1x64xf32>
    %360 = vector.extract_strided_slice %352 {offsets = [0, 0, 5, 0], sizes = [2, 1, 1, 64], strides = [1, 1, 1, 1]} : vector<2x1x8x64xf32> to vector<2x1x1x64xf32>
    %361 = arith.maximumf %359, %360 : vector<2x1x1x64xf32>
    %362 = vector.extract_strided_slice %352 {offsets = [0, 0, 6, 0], sizes = [2, 1, 1, 64], strides = [1, 1, 1, 1]} : vector<2x1x8x64xf32> to vector<2x1x1x64xf32>
    %363 = vector.extract_strided_slice %352 {offsets = [0, 0, 7, 0], sizes = [2, 1, 1, 64], strides = [1, 1, 1, 1]} : vector<2x1x8x64xf32> to vector<2x1x1x64xf32>
    %364 = arith.maximumf %362, %363 : vector<2x1x1x64xf32>
    %365 = tpu.concatenate %355, %358, %361, %364 in 2 : vector<2x1x1x64xf32>, vector<2x1x1x64xf32>, vector<2x1x1x64xf32>, vector<2x1x1x64xf32> -> vector<2x1x4x64xf32>
    %366 = vector.extract_strided_slice %349 {offsets = [0, 2, 0, 0], sizes = [2, 1, 8, 64], strides = [1, 1, 1, 1]} : vector<2x8x8x64xf32> to vector<2x1x8x64xf32>
    %367 = vector.extract_strided_slice %349 {offsets = [0, 3, 0, 0], sizes = [2, 1, 8, 64], strides = [1, 1, 1, 1]} : vector<2x8x8x64xf32> to vector<2x1x8x64xf32>
    %368 = arith.maximumf %366, %367 : vector<2x1x8x64xf32>
    %369 = vector.extract_strided_slice %368 {offsets = [0, 0, 0, 0], sizes = [2, 1, 1, 64], strides = [1, 1, 1, 1]} : vector<2x1x8x64xf32> to vector<2x1x1x64xf32>
    %370 = vector.extract_strided_slice %368 {offsets = [0, 0, 1, 0], sizes = [2, 1, 1, 64], strides = [1, 1, 1, 1]} : vector<2x1x8x64xf32> to vector<2x1x1x64xf32>
    %371 = arith.maximumf %369, %370 : vector<2x1x1x64xf32>
    %372 = vector.extract_strided_slice %368 {offsets = [0, 0, 2, 0], sizes = [2, 1, 1, 64], strides = [1, 1, 1, 1]} : vector<2x1x8x64xf32> to vector<2x1x1x64xf32>
    %373 = vector.extract_strided_slice %368 {offsets = [0, 0, 3, 0], sizes = [2, 1, 1, 64], strides = [1, 1, 1, 1]} : vector<2x1x8x64xf32> to vector<2x1x1x64xf32>
    %374 = arith.maximumf %372, %373 : vector<2x1x1x64xf32>
    %375 = vector.extract_strided_slice %368 {offsets = [0, 0, 4, 0], sizes = [2, 1, 1, 64], strides = [1, 1, 1, 1]} : vector<2x1x8x64xf32> to vector<2x1x1x64xf32>
    %376 = vector.extract_strided_slice %368 {offsets = [0, 0, 5, 0], sizes = [2, 1, 1, 64], strides = [1, 1, 1, 1]} : vector<2x1x8x64xf32> to vector<2x1x1x64xf32>
    %377 = arith.maximumf %375, %376 : vector<2x1x1x64xf32>
    %378 = vector.extract_strided_slice %368 {offsets = [0, 0, 6, 0], sizes = [2, 1, 1, 64], strides = [1, 1, 1, 1]} : vector<2x1x8x64xf32> to vector<2x1x1x64xf32>
    %379 = vector.extract_strided_slice %368 {offsets = [0, 0, 7, 0], sizes = [2, 1, 1, 64], strides = [1, 1, 1, 1]} : vector<2x1x8x64xf32> to vector<2x1x1x64xf32>
    %380 = arith.maximumf %378, %379 : vector<2x1x1x64xf32>
    %381 = tpu.concatenate %371, %374, %377, %380 in 2 : vector<2x1x1x64xf32>, vector<2x1x1x64xf32>, vector<2x1x1x64xf32>, vector<2x1x1x64xf32> -> vector<2x1x4x64xf32>
    %382 = vector.extract_strided_slice %349 {offsets = [0, 4, 0, 0], sizes = [2, 1, 8, 64], strides = [1, 1, 1, 1]} : vector<2x8x8x64xf32> to vector<2x1x8x64xf32>
    %383 = vector.extract_strided_slice %349 {offsets = [0, 5, 0, 0], sizes = [2, 1, 8, 64], strides = [1, 1, 1, 1]} : vector<2x8x8x64xf32> to vector<2x1x8x64xf32>
    %384 = arith.maximumf %382, %383 : vector<2x1x8x64xf32>
    %385 = vector.extract_strided_slice %384 {offsets = [0, 0, 0, 0], sizes = [2, 1, 1, 64], strides = [1, 1, 1, 1]} : vector<2x1x8x64xf32> to vector<2x1x1x64xf32>
    %386 = vector.extract_strided_slice %384 {offsets = [0, 0, 1, 0], sizes = [2, 1, 1, 64], strides = [1, 1, 1, 1]} : vector<2x1x8x64xf32> to vector<2x1x1x64xf32>
    %387 = arith.maximumf %385, %386 : vector<2x1x1x64xf32>
    %388 = vector.extract_strided_slice %384 {offsets = [0, 0, 2, 0], sizes = [2, 1, 1, 64], strides = [1, 1, 1, 1]} : vector<2x1x8x64xf32> to vector<2x1x1x64xf32>
    %389 = vector.extract_strided_slice %384 {offsets = [0, 0, 3, 0], sizes = [2, 1, 1, 64], strides = [1, 1, 1, 1]} : vector<2x1x8x64xf32> to vector<2x1x1x64xf32>
    %390 = arith.maximumf %388, %389 : vector<2x1x1x64xf32>
    %391 = vector.extract_strided_slice %384 {offsets = [0, 0, 4, 0], sizes = [2, 1, 1, 64], strides = [1, 1, 1, 1]} : vector<2x1x8x64xf32> to vector<2x1x1x64xf32>
    %392 = vector.extract_strided_slice %384 {offsets = [0, 0, 5, 0], sizes = [2, 1, 1, 64], strides = [1, 1, 1, 1]} : vector<2x1x8x64xf32> to vector<2x1x1x64xf32>
    %393 = arith.maximumf %391, %392 : vector<2x1x1x64xf32>
    %394 = vector.extract_strided_slice %384 {offsets = [0, 0, 6, 0], sizes = [2, 1, 1, 64], strides = [1, 1, 1, 1]} : vector<2x1x8x64xf32> to vector<2x1x1x64xf32>
    %395 = vector.extract_strided_slice %384 {offsets = [0, 0, 7, 0], sizes = [2, 1, 1, 64], strides = [1, 1, 1, 1]} : vector<2x1x8x64xf32> to vector<2x1x1x64xf32>
    %396 = arith.maximumf %394, %395 : vector<2x1x1x64xf32>
    %397 = tpu.concatenate %387, %390, %393, %396 in 2 : vector<2x1x1x64xf32>, vector<2x1x1x64xf32>, vector<2x1x1x64xf32>, vector<2x1x1x64xf32> -> vector<2x1x4x64xf32>
    %398 = vector.extract_strided_slice %349 {offsets = [0, 6, 0, 0], sizes = [2, 1, 8, 64], strides = [1, 1, 1, 1]} : vector<2x8x8x64xf32> to vector<2x1x8x64xf32>
    %399 = vector.extract_strided_slice %349 {offsets = [0, 7, 0, 0], sizes = [2, 1, 8, 64], strides = [1, 1, 1, 1]} : vector<2x8x8x64xf32> to vector<2x1x8x64xf32>
    %400 = arith.maximumf %398, %399 : vector<2x1x8x64xf32>
    %401 = vector.extract_strided_slice %400 {offsets = [0, 0, 0, 0], sizes = [2, 1, 1, 64], strides = [1, 1, 1, 1]} : vector<2x1x8x64xf32> to vector<2x1x1x64xf32>
    %402 = vector.extract_strided_slice %400 {offsets = [0, 0, 1, 0], sizes = [2, 1, 1, 64], strides = [1, 1, 1, 1]} : vector<2x1x8x64xf32> to vector<2x1x1x64xf32>
    %403 = arith.maximumf %401, %402 : vector<2x1x1x64xf32>
    %404 = vector.extract_strided_slice %400 {offsets = [0, 0, 2, 0], sizes = [2, 1, 1, 64], strides = [1, 1, 1, 1]} : vector<2x1x8x64xf32> to vector<2x1x1x64xf32>
    %405 = vector.extract_strided_slice %400 {offsets = [0, 0, 3, 0], sizes = [2, 1, 1, 64], strides = [1, 1, 1, 1]} : vector<2x1x8x64xf32> to vector<2x1x1x64xf32>
    %406 = arith.maximumf %404, %405 : vector<2x1x1x64xf32>
    %407 = vector.extract_strided_slice %400 {offsets = [0, 0, 4, 0], sizes = [2, 1, 1, 64], strides = [1, 1, 1, 1]} : vector<2x1x8x64xf32> to vector<2x1x1x64xf32>
    %408 = vector.extract_strided_slice %400 {offsets = [0, 0, 5, 0], sizes = [2, 1, 1, 64], strides = [1, 1, 1, 1]} : vector<2x1x8x64xf32> to vector<2x1x1x64xf32>
    %409 = arith.maximumf %407, %408 : vector<2x1x1x64xf32>
    %410 = vector.extract_strided_slice %400 {offsets = [0, 0, 6, 0], sizes = [2, 1, 1, 64], strides = [1, 1, 1, 1]} : vector<2x1x8x64xf32> to vector<2x1x1x64xf32>
    %411 = vector.extract_strided_slice %400 {offsets = [0, 0, 7, 0], sizes = [2, 1, 1, 64], strides = [1, 1, 1, 1]} : vector<2x1x8x64xf32> to vector<2x1x1x64xf32>
    %412 = arith.maximumf %410, %411 : vector<2x1x1x64xf32>
    %413 = tpu.concatenate %403, %406, %409, %412 in 2 : vector<2x1x1x64xf32>, vector<2x1x1x64xf32>, vector<2x1x1x64xf32>, vector<2x1x1x64xf32> -> vector<2x1x4x64xf32>
    %414 = tpu.concatenate %365, %381, %397, %413 in 1 : vector<2x1x4x64xf32>, vector<2x1x4x64xf32>, vector<2x1x4x64xf32>, vector<2x1x4x64xf32> -> vector<2x4x4x64xf32>
    %c0_45 = arith.constant 0 : index
    %c0_46 = arith.constant 0 : index
    %415 = vector.load %arg7[%c0_45, %c0_46] : memref<2x2xf32, #tpu.memory_space<vmem>>, vector<2x2xf32>
    %c0_47 = arith.constant 0 : index
    %c0_48 = arith.constant 0 : index
    %416 = vector.load %arg8[%c0_47, %c0_48] : memref<2x32xf32, #tpu.memory_space<vmem>>, vector<2x32xf32>
    %417 = vector.extract_strided_slice %415 {offsets = [0, 0], sizes = [2, 1], strides = [1, 1]} : vector<2x2xf32> to vector<2x1xf32>
    %418 = vector.extract_strided_slice %416 {offsets = [0, 0], sizes = [1, 32], strides = [1, 1]} : vector<2x32xf32> to vector<1x32xf32>
    %419 = vector.broadcast %417 : vector<2x1xf32> to vector<2x32xf32>
    %420 = vector.broadcast %418 : vector<1x32xf32> to vector<2x32xf32>
    %421 = arith.mulf %419, %420 : vector<2x32xf32>
    %422 = vector.extract_strided_slice %415 {offsets = [0, 1], sizes = [2, 1], strides = [1, 1]} : vector<2x2xf32> to vector<2x1xf32>
    %423 = vector.extract_strided_slice %416 {offsets = [1, 0], sizes = [1, 32], strides = [1, 1]} : vector<2x32xf32> to vector<1x32xf32>
    %424 = vector.broadcast %422 : vector<2x1xf32> to vector<2x32xf32>
    %425 = vector.broadcast %423 : vector<1x32xf32> to vector<2x32xf32>
    %426 = arith.mulf %424, %425 : vector<2x32xf32>
    %427 = arith.addf %421, %426 : vector<2x32xf32>
    %c0_49 = arith.constant 0 : index
    %c0_50 = arith.constant 0 : index
    %428 = vector.load %arg9[%c0_49, %c0_50] : memref<1x32xf32, #tpu.memory_space<vmem>>, vector<1x32xf32>
    %429 = vector.broadcast %428 : vector<1x32xf32> to vector<2x32xf32>
    %430 = arith.addf %427, %429 : vector<2x32xf32>
    %cst_51 = arith.constant 0.000000e+00 : f32
    %431 = vector.broadcast %cst_51 : f32 to vector<2x32xf32>
    %432 = arith.maximumf %430, %431 : vector<2x32xf32>
    %433 = vector.extract_strided_slice %414 {offsets = [0, 0, 0, 0], sizes = [2, 1, 1, 64], strides = [1, 1, 1, 1]} : vector<2x4x4x64xf32> to vector<2x1x1x64xf32>
    %434 = vector.shape_cast %433 : vector<2x1x1x64xf32> to vector<2x64xf32>
    %435 = vector.extract_strided_slice %414 {offsets = [0, 0, 1, 0], sizes = [2, 1, 1, 64], strides = [1, 1, 1, 1]} : vector<2x4x4x64xf32> to vector<2x1x1x64xf32>
    %436 = vector.shape_cast %435 : vector<2x1x1x64xf32> to vector<2x64xf32>
    %437 = vector.extract_strided_slice %414 {offsets = [0, 0, 2, 0], sizes = [2, 1, 1, 64], strides = [1, 1, 1, 1]} : vector<2x4x4x64xf32> to vector<2x1x1x64xf32>
    %438 = vector.shape_cast %437 : vector<2x1x1x64xf32> to vector<2x64xf32>
    %439 = vector.extract_strided_slice %414 {offsets = [0, 0, 3, 0], sizes = [2, 1, 1, 64], strides = [1, 1, 1, 1]} : vector<2x4x4x64xf32> to vector<2x1x1x64xf32>
    %440 = vector.shape_cast %439 : vector<2x1x1x64xf32> to vector<2x64xf32>
    %441 = vector.extract_strided_slice %414 {offsets = [0, 1, 0, 0], sizes = [2, 1, 1, 64], strides = [1, 1, 1, 1]} : vector<2x4x4x64xf32> to vector<2x1x1x64xf32>
    %442 = vector.shape_cast %441 : vector<2x1x1x64xf32> to vector<2x64xf32>
    %443 = vector.extract_strided_slice %414 {offsets = [0, 1, 1, 0], sizes = [2, 1, 1, 64], strides = [1, 1, 1, 1]} : vector<2x4x4x64xf32> to vector<2x1x1x64xf32>
    %444 = vector.shape_cast %443 : vector<2x1x1x64xf32> to vector<2x64xf32>
    %445 = vector.extract_strided_slice %414 {offsets = [0, 1, 2, 0], sizes = [2, 1, 1, 64], strides = [1, 1, 1, 1]} : vector<2x4x4x64xf32> to vector<2x1x1x64xf32>
    %446 = vector.shape_cast %445 : vector<2x1x1x64xf32> to vector<2x64xf32>
    %447 = vector.extract_strided_slice %414 {offsets = [0, 1, 3, 0], sizes = [2, 1, 1, 64], strides = [1, 1, 1, 1]} : vector<2x4x4x64xf32> to vector<2x1x1x64xf32>
    %448 = vector.shape_cast %447 : vector<2x1x1x64xf32> to vector<2x64xf32>
    %449 = vector.extract_strided_slice %414 {offsets = [0, 2, 0, 0], sizes = [2, 1, 1, 64], strides = [1, 1, 1, 1]} : vector<2x4x4x64xf32> to vector<2x1x1x64xf32>
    %450 = vector.shape_cast %449 : vector<2x1x1x64xf32> to vector<2x64xf32>
    %451 = vector.extract_strided_slice %414 {offsets = [0, 2, 1, 0], sizes = [2, 1, 1, 64], strides = [1, 1, 1, 1]} : vector<2x4x4x64xf32> to vector<2x1x1x64xf32>
    %452 = vector.shape_cast %451 : vector<2x1x1x64xf32> to vector<2x64xf32>
    %453 = vector.extract_strided_slice %414 {offsets = [0, 2, 2, 0], sizes = [2, 1, 1, 64], strides = [1, 1, 1, 1]} : vector<2x4x4x64xf32> to vector<2x1x1x64xf32>
    %454 = vector.shape_cast %453 : vector<2x1x1x64xf32> to vector<2x64xf32>
    %455 = vector.extract_strided_slice %414 {offsets = [0, 2, 3, 0], sizes = [2, 1, 1, 64], strides = [1, 1, 1, 1]} : vector<2x4x4x64xf32> to vector<2x1x1x64xf32>
    %456 = vector.shape_cast %455 : vector<2x1x1x64xf32> to vector<2x64xf32>
    %457 = vector.extract_strided_slice %414 {offsets = [0, 3, 0, 0], sizes = [2, 1, 1, 64], strides = [1, 1, 1, 1]} : vector<2x4x4x64xf32> to vector<2x1x1x64xf32>
    %458 = vector.shape_cast %457 : vector<2x1x1x64xf32> to vector<2x64xf32>
    %459 = vector.extract_strided_slice %414 {offsets = [0, 3, 1, 0], sizes = [2, 1, 1, 64], strides = [1, 1, 1, 1]} : vector<2x4x4x64xf32> to vector<2x1x1x64xf32>
    %460 = vector.shape_cast %459 : vector<2x1x1x64xf32> to vector<2x64xf32>
    %461 = vector.extract_strided_slice %414 {offsets = [0, 3, 2, 0], sizes = [2, 1, 1, 64], strides = [1, 1, 1, 1]} : vector<2x4x4x64xf32> to vector<2x1x1x64xf32>
    %462 = vector.shape_cast %461 : vector<2x1x1x64xf32> to vector<2x64xf32>
    %463 = vector.extract_strided_slice %414 {offsets = [0, 3, 3, 0], sizes = [2, 1, 1, 64], strides = [1, 1, 1, 1]} : vector<2x4x4x64xf32> to vector<2x1x1x64xf32>
    %464 = vector.shape_cast %463 : vector<2x1x1x64xf32> to vector<2x64xf32>
    %465 = tpu.concatenate %434, %436, %438, %440, %442, %444, %446, %448, %450, %452, %454, %456, %458, %460, %462, %464 in 1 : vector<2x64xf32>, vector<2x64xf32>, vector<2x64xf32>, vector<2x64xf32>, vector<2x64xf32>, vector<2x64xf32>, vector<2x64xf32>, vector<2x64xf32>, vector<2x64xf32>, vector<2x64xf32>, vector<2x64xf32>, vector<2x64xf32>, vector<2x64xf32>, vector<2x64xf32>, vector<2x64xf32>, vector<2x64xf32> -> vector<2x1024xf32>
    %466 = tpu.concatenate %465, %432 in 1 : vector<2x1024xf32>, vector<2x32xf32> -> vector<2x1056xf32>
    %467 = arith.truncf %466 : vector<2x1056xf32> to vector<2x1056xbf16>
    %c0_52 = arith.constant 0 : index
    %c0_53 = arith.constant 0 : index
    %468 = vector.load %arg10[%c0_52, %c0_53] : memref<1056x32xbf16, #tpu.memory_space<vmem>>, vector<1056x32xbf16>
    %cst_54 = arith.constant dense<0.000000e+00> : vector<2x32xf32>
    %469 = tpu.matmul %467, %468, %cst_54 {dimension_numbers = #tpu.dot_dimension_numbers<[1], [0], [0], [1], [0, 0, 1, 1], [], []>} : vector<2x1056xbf16>, vector<1056x32xbf16>, vector<2x32xf32> -> vector<2x32xf32>
    %c0_55 = arith.constant 0 : index
    %c0_56 = arith.constant 0 : index
    %470 = vector.load %arg11[%c0_55, %c0_56] : memref<1x32xf32, #tpu.memory_space<vmem>>, vector<1x32xf32>
    %471 = vector.broadcast %470 : vector<1x32xf32> to vector<2x32xf32>
    %472 = arith.addf %469, %471 : vector<2x32xf32>
    %cst_57 = arith.constant 0.000000e+00 : f32
    %473 = vector.broadcast %cst_57 : f32 to vector<2x32xf32>
    %474 = arith.maximumf %472, %473 : vector<2x32xf32>
    %475 = arith.truncf %474 : vector<2x32xf32> to vector<2x32xbf16>
    %c0_58 = arith.constant 0 : index
    %c0_59 = arith.constant 0 : index
    %476 = vector.load %arg12[%c0_58, %c0_59] : memref<32x4xbf16, #tpu.memory_space<vmem>>, vector<32x4xbf16>
    %cst_60 = arith.constant dense<0.000000e+00> : vector<2x4xf32>
    %477 = tpu.matmul %475, %476, %cst_60 {dimension_numbers = #tpu.dot_dimension_numbers<[1], [0], [0], [1], [0, 0, 1, 1], [], []>} : vector<2x32xbf16>, vector<32x4xbf16>, vector<2x4xf32> -> vector<2x4xf32>
    %c0_61 = arith.constant 0 : index
    %c0_62 = arith.constant 0 : index
    %478 = vector.load %arg13[%c0_61, %c0_62] : memref<1x4xf32, #tpu.memory_space<vmem>>, vector<1x4xf32>
    %479 = vector.broadcast %478 : vector<1x4xf32> to vector<2x4xf32>
    %480 = arith.addf %477, %479 : vector<2x4xf32>
    %c0_63 = arith.constant 0 : index
    %c0_64 = arith.constant 0 : index
    %481 = vector.load %arg14[%c0_63, %c0_64] : memref<2x4xf32, #tpu.memory_space<vmem>>, vector<2x4xf32>
    tpu.vector_store %arg14[%c0_63, %c0_64], %480 {strides = array<i32>} : memref<2x4xf32, #tpu.memory_space<vmem>>, vector<2x4xf32>,
    return
  }
}

</mosaic_0001>

<llo_original>
// kernel: mulchan_forward.1
$region0: #{mulchan_forward.1}
  #allocation0 [shape = 'u32[]', space=smem, size = 0x4, offset = 0x4, fixed_abs, tag = 'smem constant byte address 0x4 - core index']
  #allocation1 [shape = 'u32[144,128]{1,0:T(1,128)}', space=vmem, size = 0x12000, scoped, tag = 'internal scratch']
  %s0 = inlined_call_operand.vmem [shape: f32[2,17,17,4], index: 0, kind: input, shape index: {}]
  %s1 = inlined_call_operand.vmem [shape: f32[4,32], index: 1, kind: input, shape index: {}]
  %s2 = inlined_call_operand.vmem [shape: f32[1,32], index: 2, kind: input, shape index: {}]
  %s3 = inlined_call_operand.vmem [shape: f32[1,32], index: 3, kind: input, shape index: {}]
  %s4 = inlined_call_operand.vmem [shape: bf16[32,256], index: 4, kind: input, shape index: {}]
  %s5 = inlined_call_operand.vmem [shape: f32[1,64], index: 5, kind: input, shape index: {}]
  %s6 = inlined_call_operand.vmem [shape: f32[1,64], index: 6, kind: input, shape index: {}]
  %s7 = inlined_call_operand.vmem [shape: f32[2,2], index: 7, kind: input, shape index: {}]
  %s8 = inlined_call_operand.vmem [shape: f32[2,32], index: 8, kind: input, shape index: {}]
  %s9 = inlined_call_operand.vmem [shape: f32[1,32], index: 9, kind: input, shape index: {}]
  %s10 = inlined_call_operand.vmem [shape: bf16[1056,32], index: 10, kind: input, shape index: {}]
  %s11 = inlined_call_operand.vmem [shape: f32[1,32], index: 11, kind: input, shape index: {}]
  %s12 = inlined_call_operand.vmem [shape: bf16[32,4], index: 12, kind: input, shape index: {}]
  %s13 = inlined_call_operand.vmem [shape: f32[1,4], index: 13, kind: input, shape index: {}]
  %s14 = inlined_call_operand.hbm [shape: f32[2,4], index: 14, kind: output, shape index: {}]
  %s15 = sld [smem:[#allocation0]]
  $region66: #{mulchan_forward.1} parent=0
    _
  %s17 = ssub.s32 1, %s15
  %s18 = scalar_select 0, %s17, %s15
  $region1: #{mulchan_forward.1} parent=0
    #allocation2 [shape = 'u8[1024]{0}', space=vmem, size = 0x400, scoped, tag = 'output window, operand 0, single buffered']
    #allocation3 [shape = 's32[1]{0}', space=sflag, size = 0x4, scoped, tag = 'scoped memory for mulchan_forward.1']
    %19 = vsyncpa [#allocation3], 0
    // Predicated region
    $region2: #{mulchan_forward.1} parent=1 // pred_check
      _
    $region3: #{mulchan_forward.1} parent=1 // pred_check_branch
      %21 = sbr.rel (0) target = $region5
    $region4: #{mulchan_forward.1} parent=1 // pred_region
      _
    $region5: #{mulchan_forward.1} parent=1 // pred_fallthru
      _
    // Predicated region
    $region6: #{mulchan_forward.1} parent=1 // pred_check
      _
    $region7: #{mulchan_forward.1} parent=1 // pred_check_branch
      %23 = sbr.rel (0) target = $region9
    $region8: #{mulchan_forward.1} parent=1 // pred_region
      _
    $region9: #{mulchan_forward.1} parent=1 // pred_fallthru
      _
    // Predicated region
    $region10: #{mulchan_forward.1} parent=1 // pred_check
      _
    $region11: #{mulchan_forward.1} parent=1 // pred_check_branch
      %25 = sbr.rel (0) target = $region13
    $region12: #{mulchan_forward.1} parent=1 // pred_region
      _
    $region13: #{mulchan_forward.1} parent=1 // pred_fallthru
      _
    // Predicated region
    $region14: #{mulchan_forward.1} parent=1 // pred_check
      _
    $region15: #{mulchan_forward.1} parent=1 // pred_check_branch
      %27 = sbr.rel (0) target = $region17
    $region16: #{mulchan_forward.1} parent=1 // pred_region
      _
    $region17: #{mulchan_forward.1} parent=1 // pred_fallthru
      _
    // Predicated region
    $region18: #{mulchan_forward.1} parent=1 // pred_check
      _
    $region19: #{mulchan_forward.1} parent=1 // pred_check_branch
      %29 = sbr.rel (0) target = $region21
    $region20: #{mulchan_forward.1} parent=1 // pred_region
      _
    $region21: #{mulchan_forward.1} parent=1 // pred_fallthru
      _
    // Predicated region
    $region22: #{mulchan_forward.1} parent=1 // pred_check
      _
    $region23: #{mulchan_forward.1} parent=1 // pred_check_branch
      %31 = sbr.rel (0) target = $region25
    $region24: #{mulchan_forward.1} parent=1 // pred_region
      _
    $region25: #{mulchan_forward.1} parent=1 // pred_fallthru
      _
    // Predicated region
    $region26: #{mulchan_forward.1} parent=1 // pred_check
      _
    $region27: #{mulchan_forward.1} parent=1 // pred_check_branch
      %33 = sbr.rel (0) target = $region29
    $region28: #{mulchan_forward.1} parent=1 // pred_region
      _
    $region29: #{mulchan_forward.1} parent=1 // pred_fallthru
      _
    // Predicated region
    $region30: #{mulchan_forward.1} parent=1 // pred_check
      _
    $region31: #{mulchan_forward.1} parent=1 // pred_check_branch
      %35 = sbr.rel (0) target = $region33
    $region32: #{mulchan_forward.1} parent=1 // pred_region
      _
    $region33: #{mulchan_forward.1} parent=1 // pred_fallthru
      _
    // Predicated region
    $region34: #{mulchan_forward.1} parent=1 // pred_check
      _
    $region35: #{mulchan_forward.1} parent=1 // pred_check_branch
      %37 = sbr.rel (0) target = $region37
    $region36: #{mulchan_forward.1} parent=1 // pred_region
      _
    $region37: #{mulchan_forward.1} parent=1 // pred_fallthru
      _
    // Predicated region
    $region38: #{mulchan_forward.1} parent=1 // pred_check
      _
    $region39: #{mulchan_forward.1} parent=1 // pred_check_branch
      %39 = sbr.rel (0) target = $region41
    $region40: #{mulchan_forward.1} parent=1 // pred_region
      _
    $region41: #{mulchan_forward.1} parent=1 // pred_fallthru
      _
    // Predicated region
    $region42: #{mulchan_forward.1} parent=1 // pred_check
      _
    $region43: #{mulchan_forward.1} parent=1 // pred_check_branch
      %41 = sbr.rel (0) target = $region45
    $region44: #{mulchan_forward.1} parent=1 // pred_region
      _
    $region45: #{mulchan_forward.1} parent=1 // pred_fallthru
      _
    // Predicated region
    $region46: #{mulchan_forward.1} parent=1 // pred_check
      _
    $region47: #{mulchan_forward.1} parent=1 // pred_check_branch
      %43 = sbr.rel (0) target = $region49
    $region48: #{mulchan_forward.1} parent=1 // pred_region
      _
    $region49: #{mulchan_forward.1} parent=1 // pred_fallthru
      _
    // Predicated region
    $region50: #{mulchan_forward.1} parent=1 // pred_check
      _
    $region51: #{mulchan_forward.1} parent=1 // pred_check_branch
      %45 = sbr.rel (0) target = $region53
    $region52: #{mulchan_forward.1} parent=1 // pred_region
      _
    $region53: #{mulchan_forward.1} parent=1 // pred_fallthru
      _
    // Predicated region
    $region54: #{mulchan_forward.1} parent=1 // pred_check
      _
    $region55: #{mulchan_forward.1} parent=1 // pred_check_branch
      %47 = sbr.rel (0) target = $region57
    $region56: #{mulchan_forward.1} parent=1 // pred_region
      _
    $region57: #{mulchan_forward.1} parent=1 // pred_fallthru
      _
    %v49 = vld [vmem:[%s0] sm:$0xff]
    %v50 = vld [vmem:[%s0 + $0x8] sm:$0xff]
    %v51 = vld [vmem:[%s0 + $0x10] sm:$0x1]
    %v52 = vld [vmem:[%s0 + $0x18] sm:$0xff]
    %v53 = vld [vmem:[%s0 + $0x20] sm:$0xff]
    %v54 = vld [vmem:[%s0 + $0x28] sm:$0x1]
    %v55 = vld [vmem:[%s0 + $0x30] sm:$0xff]
    %v56 = vld [vmem:[%s0 + $0x38] sm:$0xff]
    %v57 = vld [vmem:[%s0 + $0x40] sm:$0x1]
    %v58 = vld [vmem:[%s0 + $0x48] sm:$0xff]
    %v59 = vld [vmem:[%s0 + $0x50] sm:$0xff]
    %v60 = vld [vmem:[%s0 + $0x58] sm:$0x1]
    %v61 = vld [vmem:[%s0 + $0x60] sm:$0xff]
    %v62 = vld [vmem:[%s0 + $0x68] sm:$0xff]
    %v63 = vld [vmem:[%s0 + $0x70] sm:$0x1]
    %v64 = vld [vmem:[%s0 + $0x78] sm:$0xff]
    %v65 = vld [vmem:[%s0 + $0x80] sm:$0xff]
    %v66 = vld [vmem:[%s0 + $0x88] sm:$0x1]
    %v67 = vld [vmem:[%s0 + $0x90] sm:$0xff]
    %v68 = vld [vmem:[%s0 + $0x98] sm:$0xff]
    %v69 = vld [vmem:[%s0 + $0xa0] sm:$0x1]
    %v70 = vld [vmem:[%s0 + $0xa8] sm:$0xff]
    %v71 = vld [vmem:[%s0 + $0xb0] sm:$0xff]
    %v72 = vld [vmem:[%s0 + $0xb8] sm:$0x1]
    %v73 = vld [vmem:[%s0 + $0xc0] sm:$0xff]
    %v74 = vld [vmem:[%s0 + $0xc8] sm:$0xff]
    %v75 = vld [vmem:[%s0 + $0xd0] sm:$0x1]
    %v76 = vld [vmem:[%s0 + $0xd8] sm:$0xff]
    %v77 = vld [vmem:[%s0 + $0xe0] sm:$0xff]
    %v78 = vld [vmem:[%s0 + $0xe8] sm:$0x1]
    %v79 = vld [vmem:[%s0 + $0xf0] sm:$0xff]
    %v80 = vld [vmem:[%s0 + $0xf8] sm:$0xff]
    %v81 = vld [vmem:[%s0 + $0x100] sm:$0x1]
    %v82 = vld [vmem:[%s0 + $0x108] sm:$0xff]
    %v83 = vld [vmem:[%s0 + $0x110] sm:$0xff]
    %v84 = vld [vmem:[%s0 + $0x118] sm:$0x1]
    %v85 = vld [vmem:[%s0 + $0x120] sm:$0xff]
    %v86 = vld [vmem:[%s0 + $0x128] sm:$0xff]
    %v87 = vld [vmem:[%s0 + $0x130] sm:$0x1]
    %v88 = vld [vmem:[%s0 + $0x138] sm:$0xff]
    %v89 = vld [vmem:[%s0 + $0x140] sm:$0xff]
    %v90 = vld [vmem:[%s0 + $0x148] sm:$0x1]
    %v91 = vld [vmem:[%s0 + $0x150] sm:$0xff]
    %v92 = vld [vmem:[%s0 + $0x158] sm:$0xff]
    %v93 = vld [vmem:[%s0 + $0x160] sm:$0x1]
    %v94 = vld [vmem:[%s0 + $0x168] sm:$0xff]
    %v95 = vld [vmem:[%s0 + $0x170] sm:$0xff]
    %v96 = vld [vmem:[%s0 + $0x178] sm:$0x1]
    %v97 = vld [vmem:[%s0 + $0x180] sm:$0xff]
    %v98 = vld [vmem:[%s0 + $0x188] sm:$0xff]
    %v99 = vld [vmem:[%s0 + $0x190] sm:$0x1]
    %v100 = vld [vmem:[%s0 + $0x198] sm:$0xff]
    %v101 = vld [vmem:[%s0 + $0x1a0] sm:$0xff]
    %v102 = vld [vmem:[%s0 + $0x1a8] sm:$0x1]
    %v103 = vld [vmem:[%s0 + $0x1b0] sm:$0xff]
    %v104 = vld [vmem:[%s0 + $0x1b8] sm:$0xff]
    %v105 = vld [vmem:[%s0 + $0x1c0] sm:$0x1]
    %v106 = vld [vmem:[%s0 + $0x1c8] sm:$0xff]
    %v107 = vld [vmem:[%s0 + $0x1d0] sm:$0xff]
    %v108 = vld [vmem:[%s0 + $0x1d8] sm:$0x1]
    %v109 = vld [vmem:[%s0 + $0x1e0] sm:$0xff]
    %v110 = vld [vmem:[%s0 + $0x1e8] sm:$0xff]
    %v111 = vld [vmem:[%s0 + $0x1f0] sm:$0x1]
    %v112 = vld [vmem:[%s0 + $0x1f8] sm:$0xff]
    %v113 = vld [vmem:[%s0 + $0x200] sm:$0xff]
    %v114 = vld [vmem:[%s0 + $0x208] sm:$0x1]
    %v115 = vld [vmem:[%s0 + $0x210] sm:$0xff]
    %v116 = vld [vmem:[%s0 + $0x218] sm:$0xff]
    %v117 = vld [vmem:[%s0 + $0x220] sm:$0x1]
    %v118 = vld [vmem:[%s0 + $0x228] sm:$0xff]
    %v119 = vld [vmem:[%s0 + $0x230] sm:$0xff]
    %v120 = vld [vmem:[%s0 + $0x238] sm:$0x1]
    %v121 = vld [vmem:[%s0 + $0x240] sm:$0xff]
    %v122 = vld [vmem:[%s0 + $0x248] sm:$0xff]
    %v123 = vld [vmem:[%s0 + $0x250] sm:$0x1]
    %v124 = vld [vmem:[%s0 + $0x258] sm:$0xff]
    %v125 = vld [vmem:[%s0 + $0x260] sm:$0xff]
    %v126 = vld [vmem:[%s0 + $0x268] sm:$0x1]
    %v127 = vld [vmem:[%s0 + $0x270] sm:$0xff]
    %v128 = vld [vmem:[%s0 + $0x278] sm:$0xff]
    %v129 = vld [vmem:[%s0 + $0x280] sm:$0x1]
    %v130 = vld [vmem:[%s0 + $0x288] sm:$0xff]
    %v131 = vld [vmem:[%s0 + $0x290] sm:$0xff]
    %v132 = vld [vmem:[%s0 + $0x298] sm:$0x1]
    %v133 = vld [vmem:[%s0 + $0x2a0] sm:$0xff]
    %v134 = vld [vmem:[%s0 + $0x2a8] sm:$0xff]
    %v135 = vld [vmem:[%s0 + $0x2b0] sm:$0x1]
    %v136 = vld [vmem:[%s0 + $0x2b8] sm:$0xff]
    %v137 = vld [vmem:[%s0 + $0x2c0] sm:$0xff]
    %v138 = vld [vmem:[%s0 + $0x2c8] sm:$0x1]
    %v139 = vld [vmem:[%s0 + $0x2d0] sm:$0xff]
    %v140 = vld [vmem:[%s0 + $0x2d8] sm:$0xff]
    %v141 = vld [vmem:[%s0 + $0x2e0] sm:$0x1]
    %v142 = vld [vmem:[%s0 + $0x2e8] sm:$0xff]
    %v143 = vld [vmem:[%s0 + $0x2f0] sm:$0xff]
    %v144 = vld [vmem:[%s0 + $0x2f8] sm:$0x1]
    %v145 = vld [vmem:[%s0 + $0x300] sm:$0xff]
    %v146 = vld [vmem:[%s0 + $0x308] sm:$0xff]
    %v147 = vld [vmem:[%s0 + $0x310] sm:$0x1]
    %v148 = vld [vmem:[%s0 + $0x318] sm:$0xff]
    %v149 = vld [vmem:[%s0 + $0x320] sm:$0xff]
    %v150 = vld [vmem:[%s0 + $0x328] sm:$0x1]
    %v151 = vld [vmem:[%s1] sm:$0xf]
    %153 = vset.pattern.permute.xlu0 0
    %154 = vperm.xlu0 %153, %v49
    %v155 = vpop.permute.xlu0 %154
    %158 = vset.pattern.permute.xlu0 0
    %159 = vperm.xlu0 %158, %v50
    %v160 = vpop.permute.xlu0 %159
    %163 = vset.pattern.permute.xlu0 0
    %164 = vperm.xlu0 %163, %v51
    %v165 = vpop.permute.xlu0 %164
    %168 = vset.pattern.permute.xlu0 0
    %169 = vperm.xlu0 %168, %v52
    %v170 = vpop.permute.xlu0 %169
    %173 = vset.pattern.permute.xlu0 0
    %174 = vperm.xlu0 %173, %v53
    %v175 = vpop.permute.xlu0 %174
    %178 = vset.pattern.permute.xlu0 0
    %179 = vperm.xlu0 %178, %v54
    %v180 = vpop.permute.xlu0 %179
    %183 = vset.pattern.permute.xlu0 0
    %184 = vperm.xlu0 %183, %v55
    %v185 = vpop.permute.xlu0 %184
    %188 = vset.pattern.permute.xlu0 0
    %189 = vperm.xlu0 %188, %v56
    %v190 = vpop.permute.xlu0 %189
    %193 = vset.pattern.permute.xlu0 0
    %194 = vperm.xlu0 %193, %v57
    %v195 = vpop.permute.xlu0 %194
    %198 = vset.pattern.permute.xlu0 0
    %199 = vperm.xlu0 %198, %v58
    %v200 = vpop.permute.xlu0 %199
    %203 = vset.pattern.permute.xlu0 0
    %204 = vperm.xlu0 %203, %v59
    %v205 = vpop.permute.xlu0 %204
    %208 = vset.pattern.permute.xlu0 0
    %209 = vperm.xlu0 %208, %v60
    %v210 = vpop.permute.xlu0 %209
    %213 = vset.pattern.permute.xlu0 0
    %214 = vperm.xlu0 %213, %v61
    %v215 = vpop.permute.xlu0 %214
    %218 = vset.pattern.permute.xlu0 0
    %219 = vperm.xlu0 %218, %v62
    %v220 = vpop.permute.xlu0 %219
    %223 = vset.pattern.permute.xlu0 0
    %224 = vperm.xlu0 %223, %v63
    %v225 = vpop.permute.xlu0 %224
    %228 = vset.pattern.permute.xlu0 0
    %229 = vperm.xlu0 %228, %v64
    %v230 = vpop.permute.xlu0 %229
    %233 = vset.pattern.permute.xlu0 0
    %234 = vperm.xlu0 %233, %v65
    %v235 = vpop.permute.xlu0 %234
    %238 = vset.pattern.permute.xlu0 0
    %239 = vperm.xlu0 %238, %v66
    %v240 = vpop.permute.xlu0 %239
    %243 = vset.pattern.permute.xlu0 0
    %244 = vperm.xlu0 %243, %v67
    %v245 = vpop.permute.xlu0 %244
    %248 = vset.pattern.permute.xlu0 0
    %249 = vperm.xlu0 %248, %v68
    %v250 = vpop.permute.xlu0 %249
    %253 = vset.pattern.permute.xlu0 0
    %254 = vperm.xlu0 %253, %v69
    %v255 = vpop.permute.xlu0 %254
    %258 = vset.pattern.permute.xlu0 0
    %259 = vperm.xlu0 %258, %v70
    %v260 = vpop.permute.xlu0 %259
    %263 = vset.pattern.permute.xlu0 0
    %264 = vperm.xlu0 %263, %v71
    %v265 = vpop.permute.xlu0 %264
    %268 = vset.pattern.permute.xlu0 0
    %269 = vperm.xlu0 %268, %v72
    %v270 = vpop.permute.xlu0 %269
    %273 = vset.pattern.permute.xlu0 0
    %274 = vperm.xlu0 %273, %v73
    %v275 = vpop.permute.xlu0 %274
    %278 = vset.pattern.permute.xlu0 0
    %279 = vperm.xlu0 %278, %v74
    %v280 = vpop.permute.xlu0 %279
    %283 = vset.pattern.permute.xlu0 0
    %284 = vperm.xlu0 %283, %v75
    %v285 = vpop.permute.xlu0 %284
    %288 = vset.pattern.permute.xlu0 0
    %289 = vperm.xlu0 %288, %v76
    %v290 = vpop.permute.xlu0 %289
    %293 = vset.pattern.permute.xlu0 0
    %294 = vperm.xlu0 %293, %v77
    %v295 = vpop.permute.xlu0 %294
    %298 = vset.pattern.permute.xlu0 0
    %299 = vperm.xlu0 %298, %v78
    %v300 = vpop.permute.xlu0 %299
    %303 = vset.pattern.permute.xlu0 0
    %304 = vperm.xlu0 %303, %v79
    %v305 = vpop.permute.xlu0 %304
    %308 = vset.pattern.permute.xlu0 0
    %309 = vperm.xlu0 %308, %v80
    %v310 = vpop.permute.xlu0 %309
    %313 = vset.pattern.permute.xlu0 0
    %314 = vperm.xlu0 %313, %v81
    %v315 = vpop.permute.xlu0 %314
    %318 = vset.pattern.permute.xlu0 0
    %319 = vperm.xlu0 %318, %v82
    %v320 = vpop.permute.xlu0 %319
    %323 = vset.pattern.permute.xlu0 0
    %324 = vperm.xlu0 %323, %v83
    %v325 = vpop.permute.xlu0 %324
    %328 = vset.pattern.permute.xlu0 0
    %329 = vperm.xlu0 %328, %v84
    %v330 = vpop.permute.xlu0 %329
    %333 = vset.pattern.permute.xlu0 0
    %334 = vperm.xlu0 %333, %v85
    %v335 = vpop.permute.xlu0 %334
    %338 = vset.pattern.permute.xlu0 0
    %339 = vperm.xlu0 %338, %v86
    %v340 = vpop.permute.xlu0 %339
    %343 = vset.pattern.permute.xlu0 0
    %344 = vperm.xlu0 %343, %v87
    %v345 = vpop.permute.xlu0 %344
    %348 = vset.pattern.permute.xlu0 0
    %349 = vperm.xlu0 %348, %v88
    %v350 = vpop.permute.xlu0 %349
    %353 = vset.pattern.permute.xlu0 0
    %354 = vperm.xlu0 %353, %v89
    %v355 = vpop.permute.xlu0 %354
    %358 = vset.pattern.permute.xlu0 0
    %359 = vperm.xlu0 %358, %v90
    %v360 = vpop.permute.xlu0 %359
    %363 = vset.pattern.permute.xlu0 0
    %364 = vperm.xlu0 %363, %v91
    %v365 = vpop.permute.xlu0 %364
    %368 = vset.pattern.permute.xlu0 0
    %369 = vperm.xlu0 %368, %v92
    %v370 = vpop.permute.xlu0 %369
    %373 = vset.pattern.permute.xlu0 0
    %374 = vperm.xlu0 %373, %v93
    %v375 = vpop.permute.xlu0 %374
    %378 = vset.pattern.permute.xlu0 0
    %379 = vperm.xlu0 %378, %v94
    %v380 = vpop.permute.xlu0 %379
    %383 = vset.pattern.permute.xlu0 0
    %384 = vperm.xlu0 %383, %v95
    %v385 = vpop.permute.xlu0 %384
    %388 = vset.pattern.permute.xlu0 0
    %389 = vperm.xlu0 %388, %v96
    %v390 = vpop.permute.xlu0 %389
    %393 = vset.pattern.permute.xlu0 0
    %394 = vperm.xlu0 %393, %v97
    %v395 = vpop.permute.xlu0 %394
    %398 = vset.pattern.permute.xlu0 0
    %399 = vperm.xlu0 %398, %v98
    %v400 = vpop.permute.xlu0 %399
    %403 = vset.pattern.permute.xlu0 0
    %404 = vperm.xlu0 %403, %v99
    %v405 = vpop.permute.xlu0 %404
    %408 = vset.pattern.permute.xlu0 0
    %409 = vperm.xlu0 %408, %v100
    %v410 = vpop.permute.xlu0 %409
    %413 = vset.pattern.permute.xlu0 0
    %414 = vperm.xlu0 %413, %v101
    %v415 = vpop.permute.xlu0 %414
    %418 = vset.pattern.permute.xlu0 0
    %419 = vperm.xlu0 %418, %v102
    %v420 = vpop.permute.xlu0 %419
    %423 = vset.pattern.permute.xlu0 0
    %424 = vperm.xlu0 %423, %v103
    %v425 = vpop.permute.xlu0 %424
    %428 = vset.pattern.permute.xlu0 0
    %429 = vperm.xlu0 %428, %v104
    %v430 = vpop.permute.xlu0 %429
    %433 = vset.pattern.permute.xlu0 0
    %434 = vperm.xlu0 %433, %v105
    %v435 = vpop.permute.xlu0 %434
    %438 = vset.pattern.permute.xlu0 0
    %439 = vperm.xlu0 %438, %v106
    %v440 = vpop.permute.xlu0 %439
    %443 = vset.pattern.permute.xlu0 0
    %444 = vperm.xlu0 %443, %v107
    %v445 = vpop.permute.xlu0 %444
    %448 = vset.pattern.permute.xlu0 0
    %449 = vperm.xlu0 %448, %v108
    %v450 = vpop.permute.xlu0 %449
    %453 = vset.pattern.permute.xlu0 0
    %454 = vperm.xlu0 %453, %v109
    %v455 = vpop.permute.xlu0 %454
    %458 = vset.pattern.permute.xlu0 0
    %459 = vperm.xlu0 %458, %v110
    %v460 = vpop.permute.xlu0 %459
    %463 = vset.pattern.permute.xlu0 0
    %464 = vperm.xlu0 %463, %v111
    %v465 = vpop.permute.xlu0 %464
    %468 = vset.pattern.permute.xlu0 0
    %469 = vperm.xlu0 %468, %v112
    %v470 = vpop.permute.xlu0 %469
    %473 = vset.pattern.permute.xlu0 0
    %474 = vperm.xlu0 %473, %v113
    %v475 = vpop.permute.xlu0 %474
    %478 = vset.pattern.permute.xlu0 0
    %479 = vperm.xlu0 %478, %v114
    %v480 = vpop.permute.xlu0 %479
    %483 = vset.pattern.permute.xlu0 0
    %484 = vperm.xlu0 %483, %v115
    %v485 = vpop.permute.xlu0 %484
    %488 = vset.pattern.permute.xlu0 0
    %489 = vperm.xlu0 %488, %v116
    %v490 = vpop.permute.xlu0 %489
    %493 = vset.pattern.permute.xlu0 0
    %494 = vperm.xlu0 %493, %v117
    %v495 = vpop.permute.xlu0 %494
    %498 = vset.pattern.permute.xlu0 0
    %499 = vperm.xlu0 %498, %v118
    %v500 = vpop.permute.xlu0 %499
    %503 = vset.pattern.permute.xlu0 0
    %504 = vperm.xlu0 %503, %v119
    %v505 = vpop.permute.xlu0 %504
    %508 = vset.pattern.permute.xlu0 0
    %509 = vperm.xlu0 %508, %v120
    %v510 = vpop.permute.xlu0 %509
    %513 = vset.pattern.permute.xlu0 0
    %514 = vperm.xlu0 %513, %v121
    %v515 = vpop.permute.xlu0 %514
    %518 = vset.pattern.permute.xlu0 0
    %519 = vperm.xlu0 %518, %v122
    %v520 = vpop.permute.xlu0 %519
    %523 = vset.pattern.permute.xlu0 0
    %524 = vperm.xlu0 %523, %v123
    %v525 = vpop.permute.xlu0 %524
    %528 = vset.pattern.permute.xlu0 0
    %529 = vperm.xlu0 %528, %v124
    %v530 = vpop.permute.xlu0 %529
    %533 = vset.pattern.permute.xlu0 0
    %534 = vperm.xlu0 %533, %v125
    %v535 = vpop.permute.xlu0 %534
    %538 = vset.pattern.permute.xlu0 0
    %539 = vperm.xlu0 %538, %v126
    %v540 = vpop.permute.xlu0 %539
    %543 = vset.pattern.permute.xlu0 0
    %544 = vperm.xlu0 %543, %v127
    %v545 = vpop.permute.xlu0 %544
    %548 = vset.pattern.permute.xlu0 0
    %549 = vperm.xlu0 %548, %v128
    %v550 = vpop.permute.xlu0 %549
    %553 = vset.pattern.permute.xlu0 0
    %554 = vperm.xlu0 %553, %v129
    %v555 = vpop.permute.xlu0 %554
    %558 = vset.pattern.permute.xlu0 0
    %559 = vperm.xlu0 %558, %v130
    %v560 = vpop.permute.xlu0 %559
    %563 = vset.pattern.permute.xlu0 0
    %564 = vperm.xlu0 %563, %v131
    %v565 = vpop.permute.xlu0 %564
    %568 = vset.pattern.permute.xlu0 0
    %569 = vperm.xlu0 %568, %v132
    %v570 = vpop.permute.xlu0 %569
    %573 = vset.pattern.permute.xlu0 0
    %574 = vperm.xlu0 %573, %v133
    %v575 = vpop.permute.xlu0 %574
    %578 = vset.pattern.permute.xlu0 0
    %579 = vperm.xlu0 %578, %v134
    %v580 = vpop.permute.xlu0 %579
    %583 = vset.pattern.permute.xlu0 0
    %584 = vperm.xlu0 %583, %v135
    %v585 = vpop.permute.xlu0 %584
    %588 = vset.pattern.permute.xlu0 0
    %589 = vperm.xlu0 %588, %v136
    %v590 = vpop.permute.xlu0 %589
    %593 = vset.pattern.permute.xlu0 0
    %594 = vperm.xlu0 %593, %v137
    %v595 = vpop.permute.xlu0 %594
    %598 = vset.pattern.permute.xlu0 0
    %599 = vperm.xlu0 %598, %v138
    %v600 = vpop.permute.xlu0 %599
    %603 = vset.pattern.permute.xlu0 0
    %604 = vperm.xlu0 %603, %v139
    %v605 = vpop.permute.xlu0 %604
    %608 = vset.pattern.permute.xlu0 0
    %609 = vperm.xlu0 %608, %v140
    %v610 = vpop.permute.xlu0 %609
    %613 = vset.pattern.permute.xlu0 0
    %614 = vperm.xlu0 %613, %v141
    %v615 = vpop.permute.xlu0 %614
    %618 = vset.pattern.permute.xlu0 0
    %619 = vperm.xlu0 %618, %v142
    %v620 = vpop.permute.xlu0 %619
    %623 = vset.pattern.permute.xlu0 0
    %624 = vperm.xlu0 %623, %v143
    %v625 = vpop.permute.xlu0 %624
    %628 = vset.pattern.permute.xlu0 0
    %629 = vperm.xlu0 %628, %v144
    %v630 = vpop.permute.xlu0 %629
    %633 = vset.pattern.permute.xlu0 0
    %634 = vperm.xlu0 %633, %v145
    %v635 = vpop.permute.xlu0 %634
    %638 = vset.pattern.permute.xlu0 0
    %639 = vperm.xlu0 %638, %v146
    %v640 = vpop.permute.xlu0 %639
    %643 = vset.pattern.permute.xlu0 0
    %644 = vperm.xlu0 %643, %v147
    %v645 = vpop.permute.xlu0 %644
    %648 = vset.pattern.permute.xlu0 0
    %649 = vperm.xlu0 %648, %v148
    %v650 = vpop.permute.xlu0 %649
    %653 = vset.pattern.permute.xlu0 0
    %654 = vperm.xlu0 %653, %v149
    %v655 = vpop.permute.xlu0 %654
    %658 = vset.pattern.permute.xlu0 0
    %659 = vperm.xlu0 %658, %v150
    %v660 = vpop.permute.xlu0 %659
    %v662 = vlaneseq
    %v663 = vshrl.u32 %v662, 7
    %v664 = vsub.s32 0, %v663
    %v665 = vrot.slane %v151, %v664
    %v666 = vmul.f32 %v155, %v665
    %v667 = vmul.f32 %v160, %v665
    %v668 = vmul.f32 %v165, %v665
    %v669 = vmul.f32 %v170, %v665
    %v670 = vmul.f32 %v175, %v665
    %v671 = vmul.f32 %v180, %v665
    %v672 = vmul.f32 %v185, %v665
    %v673 = vmul.f32 %v190, %v665
    %v674 = vmul.f32 %v195, %v665
    %v675 = vmul.f32 %v200, %v665
    %v676 = vmul.f32 %v205, %v665
    %v677 = vmul.f32 %v210, %v665
    %v678 = vmul.f32 %v215, %v665
    %v679 = vmul.f32 %v220, %v665
    %v680 = vmul.f32 %v225, %v665
    %v681 = vmul.f32 %v230, %v665
    %v682 = vmul.f32 %v235, %v665
    %v683 = vmul.f32 %v240, %v665
    %v684 = vmul.f32 %v245, %v665
    %v685 = vmul.f32 %v250, %v665
    %v686 = vmul.f32 %v255, %v665
    %v687 = vmul.f32 %v260, %v665
    %v688 = vmul.f32 %v265, %v665
    %v689 = vmul.f32 %v270, %v665
    %v690 = vmul.f32 %v275, %v665
    %v691 = vmul.f32 %v280, %v665
    %v692 = vmul.f32 %v285, %v665
    %v693 = vmul.f32 %v290, %v665
    %v694 = vmul.f32 %v295, %v665
    %v695 = vmul.f32 %v300, %v665
    %v696 = vmul.f32 %v305, %v665
    %v697 = vmul.f32 %v310, %v665
    %v698 = vmul.f32 %v315, %v665
    %v699 = vmul.f32 %v320, %v665
    %v700 = vmul.f32 %v325, %v665
    %v701 = vmul.f32 %v330, %v665
    %v702 = vmul.f32 %v335, %v665
    %v703 = vmul.f32 %v340, %v665
    %v704 = vmul.f32 %v345, %v665
    %v705 = vmul.f32 %v350, %v665
    %v706 = vmul.f32 %v355, %v665
    %v707 = vmul.f32 %v360, %v665
    %v708 = vmul.f32 %v365, %v665
    %v709 = vmul.f32 %v370, %v665
    %v710 = vmul.f32 %v375, %v665
    %v711 = vmul.f32 %v380, %v665
    %v712 = vmul.f32 %v385, %v665
    %v713 = vmul.f32 %v390, %v665
    %v714 = vmul.f32 %v395, %v665
    %v715 = vmul.f32 %v400, %v665
    %v716 = vmul.f32 %v405, %v665
    %v717 = vmul.f32 %v410, %v665
    %v718 = vmul.f32 %v415, %v665
    %v719 = vmul.f32 %v420, %v665
    %v720 = vmul.f32 %v425, %v665
    %v721 = vmul.f32 %v430, %v665
    %v722 = vmul.f32 %v435, %v665
    %v723 = vmul.f32 %v440, %v665
    %v724 = vmul.f32 %v445, %v665
    %v725 = vmul.f32 %v450, %v665
    %v726 = vmul.f32 %v455, %v665
    %v727 = vmul.f32 %v460, %v665
    %v728 = vmul.f32 %v465, %v665
    %v729 = vmul.f32 %v470, %v665
    %v730 = vmul.f32 %v475, %v665
    %v731 = vmul.f32 %v480, %v665
    %v732 = vmul.f32 %v485, %v665
    %v733 = vmul.f32 %v490, %v665
    %v734 = vmul.f32 %v495, %v665
    %v735 = vmul.f32 %v500, %v665
    %v736 = vmul.f32 %v505, %v665
    %v737 = vmul.f32 %v510, %v665
    %v738 = vmul.f32 %v515, %v665
    %v739 = vmul.f32 %v520, %v665
    %v740 = vmul.f32 %v525, %v665
    %v741 = vmul.f32 %v530, %v665
    %v742 = vmul.f32 %v535, %v665
    %v743 = vmul.f32 %v540, %v665
    %v744 = vmul.f32 %v545, %v665
    %v745 = vmul.f32 %v550, %v665
    %v746 = vmul.f32 %v555, %v665
    %v747 = vmul.f32 %v560, %v665
    %v748 = vmul.f32 %v565, %v665
    %v749 = vmul.f32 %v570, %v665
    %v750 = vmul.f32 %v575, %v665
    %v751 = vmul.f32 %v580, %v665
    %v752 = vmul.f32 %v585, %v665
    %v753 = vmul.f32 %v590, %v665
    %v754 = vmul.f32 %v595, %v665
    %v755 = vmul.f32 %v600, %v665
    %v756 = vmul.f32 %v605, %v665
    %v757 = vmul.f32 %v610, %v665
    %v758 = vmul.f32 %v615, %v665
    %v759 = vmul.f32 %v620, %v665
    %v760 = vmul.f32 %v625, %v665
    %v761 = vmul.f32 %v630, %v665
    %v762 = vmul.f32 %v635, %v665
    %v763 = vmul.f32 %v640, %v665
    %v764 = vmul.f32 %v645, %v665
    %v765 = vmul.f32 %v650, %v665
    %v766 = vmul.f32 %v655, %v665
    %v767 = vmul.f32 %v660, %v665
    %768 = vset.pattern.permute.xlu0 1
    %769 = vperm.xlu0 %768, %v49
    %v770 = vpop.permute.xlu0 %769
    %772 = vset.pattern.permute.xlu0 1
    %773 = vperm.xlu0 %772, %v50
    %v774 = vpop.permute.xlu0 %773
    %776 = vset.pattern.permute.xlu0 1
    %777 = vperm.xlu0 %776, %v51
    %v778 = vpop.permute.xlu0 %777
    %780 = vset.pattern.permute.xlu0 1
    %781 = vperm.xlu0 %780, %v52
    %v782 = vpop.permute.xlu0 %781
    %784 = vset.pattern.permute.xlu0 1
    %785 = vperm.xlu0 %784, %v53
    %v786 = vpop.permute.xlu0 %785
    %788 = vset.pattern.permute.xlu0 1
    %789 = vperm.xlu0 %788, %v54
    %v790 = vpop.permute.xlu0 %789
    %792 = vset.pattern.permute.xlu0 1
    %793 = vperm.xlu0 %792, %v55
    %v794 = vpop.permute.xlu0 %793
    %796 = vset.pattern.permute.xlu0 1
    %797 = vperm.xlu0 %796, %v56
    %v798 = vpop.permute.xlu0 %797
    %800 = vset.pattern.permute.xlu0 1
    %801 = vperm.xlu0 %800, %v57
    %v802 = vpop.permute.xlu0 %801
    %804 = vset.pattern.permute.xlu0 1
    %805 = vperm.xlu0 %804, %v58
    %v806 = vpop.permute.xlu0 %805
    %808 = vset.pattern.permute.xlu0 1
    %809 = vperm.xlu0 %808, %v59
    %v810 = vpop.permute.xlu0 %809
    %812 = vset.pattern.permute.xlu0 1
    %813 = vperm.xlu0 %812, %v60
    %v814 = vpop.permute.xlu0 %813
    %816 = vset.pattern.permute.xlu0 1
    %817 = vperm.xlu0 %816, %v61
    %v818 = vpop.permute.xlu0 %817
    %820 = vset.pattern.permute.xlu0 1
    %821 = vperm.xlu0 %820, %v62
    %v822 = vpop.permute.xlu0 %821
    %824 = vset.pattern.permute.xlu0 1
    %825 = vperm.xlu0 %824, %v63
    %v826 = vpop.permute.xlu0 %825
    %828 = vset.pattern.permute.xlu0 1
    %829 = vperm.xlu0 %828, %v64
    %v830 = vpop.permute.xlu0 %829
    %832 = vset.pattern.permute.xlu0 1
    %833 = vperm.xlu0 %832, %v65
    %v834 = vpop.permute.xlu0 %833
    %836 = vset.pattern.permute.xlu0 1
    %837 = vperm.xlu0 %836, %v66
    %v838 = vpop.permute.xlu0 %837
    %840 = vset.pattern.permute.xlu0 1
    %841 = vperm.xlu0 %840, %v67
    %v842 = vpop.permute.xlu0 %841
    %844 = vset.pattern.permute.xlu0 1
    %845 = vperm.xlu0 %844, %v68
    %v846 = vpop.permute.xlu0 %845
    %848 = vset.pattern.permute.xlu0 1
    %849 = vperm.xlu0 %848, %v69
    %v850 = vpop.permute.xlu0 %849
    %852 = vset.pattern.permute.xlu0 1
    %853 = vperm.xlu0 %852, %v70
    %v854 = vpop.permute.xlu0 %853
    %856 = vset.pattern.permute.xlu0 1
    %857 = vperm.xlu0 %856, %v71
    %v858 = vpop.permute.xlu0 %857
    %860 = vset.pattern.permute.xlu0 1
    %861 = vperm.xlu0 %860, %v72
    %v862 = vpop.permute.xlu0 %861
    %864 = vset.pattern.permute.xlu0 1
    %865 = vperm.xlu0 %864, %v73
    %v866 = vpop.permute.xlu0 %865
    %868 = vset.pattern.permute.xlu0 1
    %869 = vperm.xlu0 %868, %v74
    %v870 = vpop.permute.xlu0 %869
    %872 = vset.pattern.permute.xlu0 1
    %873 = vperm.xlu0 %872, %v75
    %v874 = vpop.permute.xlu0 %873
    %876 = vset.pattern.permute.xlu0 1
    %877 = vperm.xlu0 %876, %v76
    %v878 = vpop.permute.xlu0 %877
    %880 = vset.pattern.permute.xlu0 1
    %881 = vperm.xlu0 %880, %v77
    %v882 = vpop.permute.xlu0 %881
    %884 = vset.pattern.permute.xlu0 1
    %885 = vperm.xlu0 %884, %v78
    %v886 = vpop.permute.xlu0 %885
    %888 = vset.pattern.permute.xlu0 1
    %889 = vperm.xlu0 %888, %v79
    %v890 = vpop.permute.xlu0 %889
    %892 = vset.pattern.permute.xlu0 1
    %893 = vperm.xlu0 %892, %v80
    %v894 = vpop.permute.xlu0 %893
    %896 = vset.pattern.permute.xlu0 1
    %897 = vperm.xlu0 %896, %v81
    %v898 = vpop.permute.xlu0 %897
    %900 = vset.pattern.permute.xlu0 1
    %901 = vperm.xlu0 %900, %v82
    %v902 = vpop.permute.xlu0 %901
    %904 = vset.pattern.permute.xlu0 1
    %905 = vperm.xlu0 %904, %v83
    %v906 = vpop.permute.xlu0 %905
    %908 = vset.pattern.permute.xlu0 1
    %909 = vperm.xlu0 %908, %v84
    %v910 = vpop.permute.xlu0 %909
    %912 = vset.pattern.permute.xlu0 1
    %913 = vperm.xlu0 %912, %v85
    %v914 = vpop.permute.xlu0 %913
    %916 = vset.pattern.permute.xlu0 1
    %917 = vperm.xlu0 %916, %v86
    %v918 = vpop.permute.xlu0 %917
    %920 = vset.pattern.permute.xlu0 1
    %921 = vperm.xlu0 %920, %v87
    %v922 = vpop.permute.xlu0 %921
    %924 = vset.pattern.permute.xlu0 1
    %925 = vperm.xlu0 %924, %v88
    %v926 = vpop.permute.xlu0 %925
    %928 = vset.pattern.permute.xlu0 1
    %929 = vperm.xlu0 %928, %v89
    %v930 = vpop.permute.xlu0 %929
    %932 = vset.pattern.permute.xlu0 1
    %933 = vperm.xlu0 %932, %v90
    %v934 = vpop.permute.xlu0 %933
    %936 = vset.pattern.permute.xlu0 1
    %937 = vperm.xlu0 %936, %v91
    %v938 = vpop.permute.xlu0 %937
    %940 = vset.pattern.permute.xlu0 1
    %941 = vperm.xlu0 %940, %v92
    %v942 = vpop.permute.xlu0 %941
    %944 = vset.pattern.permute.xlu0 1
    %945 = vperm.xlu0 %944, %v93
    %v946 = vpop.permute.xlu0 %945
    %948 = vset.pattern.permute.xlu0 1
    %949 = vperm.xlu0 %948, %v94
    %v950 = vpop.permute.xlu0 %949
    %952 = vset.pattern.permute.xlu0 1
    %953 = vperm.xlu0 %952, %v95
    %v954 = vpop.permute.xlu0 %953
    %956 = vset.pattern.permute.xlu0 1
    %957 = vperm.xlu0 %956, %v96
    %v958 = vpop.permute.xlu0 %957
    %960 = vset.pattern.permute.xlu0 1
    %961 = vperm.xlu0 %960, %v97
    %v962 = vpop.permute.xlu0 %961
    %964 = vset.pattern.permute.xlu0 1
    %965 = vperm.xlu0 %964, %v98
    %v966 = vpop.permute.xlu0 %965
    %968 = vset.pattern.permute.xlu0 1
    %969 = vperm.xlu0 %968, %v99
    %v970 = vpop.permute.xlu0 %969
    %972 = vset.pattern.permute.xlu0 1
    %973 = vperm.xlu0 %972, %v100
    %v974 = vpop.permute.xlu0 %973
    %976 = vset.pattern.permute.xlu0 1
    %977 = vperm.xlu0 %976, %v101
    %v978 = vpop.permute.xlu0 %977
    %980 = vset.pattern.permute.xlu0 1
    %981 = vperm.xlu0 %980, %v102
    %v982 = vpop.permute.xlu0 %981
    %984 = vset.pattern.permute.xlu0 1
    %985 = vperm.xlu0 %984, %v103
    %v986 = vpop.permute.xlu0 %985
    %988 = vset.pattern.permute.xlu0 1
    %989 = vperm.xlu0 %988, %v104
    %v990 = vpop.permute.xlu0 %989
    %992 = vset.pattern.permute.xlu0 1
    %993 = vperm.xlu0 %992, %v105
    %v994 = vpop.permute.xlu0 %993
    %996 = vset.pattern.permute.xlu0 1
    %997 = vperm.xlu0 %996, %v106
    %v998 = vpop.permute.xlu0 %997
    %1000 = vset.pattern.permute.xlu0 1
    %1001 = vperm.xlu0 %1000, %v107
    %v1002 = vpop.permute.xlu0 %1001
    %1004 = vset.pattern.permute.xlu0 1
    %1005 = vperm.xlu0 %1004, %v108
    %v1006 = vpop.permute.xlu0 %1005
    %1008 = vset.pattern.permute.xlu0 1
    %1009 = vperm.xlu0 %1008, %v109
    %v1010 = vpop.permute.xlu0 %1009
    %1012 = vset.pattern.permute.xlu0 1
    %1013 = vperm.xlu0 %1012, %v110
    %v1014 = vpop.permute.xlu0 %1013
    %1016 = vset.pattern.permute.xlu0 1
    %1017 = vperm.xlu0 %1016, %v111
    %v1018 = vpop.permute.xlu0 %1017
    %1020 = vset.pattern.permute.xlu0 1
    %1021 = vperm.xlu0 %1020, %v112
    %v1022 = vpop.permute.xlu0 %1021
    %1024 = vset.pattern.permute.xlu0 1
    %1025 = vperm.xlu0 %1024, %v113
    %v1026 = vpop.permute.xlu0 %1025
    %1028 = vset.pattern.permute.xlu0 1
    %1029 = vperm.xlu0 %1028, %v114
    %v1030 = vpop.permute.xlu0 %1029
    %1032 = vset.pattern.permute.xlu0 1
    %1033 = vperm.xlu0 %1032, %v115
    %v1034 = vpop.permute.xlu0 %1033
    %1036 = vset.pattern.permute.xlu0 1
    %1037 = vperm.xlu0 %1036, %v116
    %v1038 = vpop.permute.xlu0 %1037
    %1040 = vset.pattern.permute.xlu0 1
    %1041 = vperm.xlu0 %1040, %v117
    %v1042 = vpop.permute.xlu0 %1041
    %1044 = vset.pattern.permute.xlu0 1
    %1045 = vperm.xlu0 %1044, %v118
    %v1046 = vpop.permute.xlu0 %1045
    %1048 = vset.pattern.permute.xlu0 1
    %1049 = vperm.xlu0 %1048, %v119
    %v1050 = vpop.permute.xlu0 %1049
    %1052 = vset.pattern.permute.xlu0 1
    %1053 = vperm.xlu0 %1052, %v120
    %v1054 = vpop.permute.xlu0 %1053
    %1056 = vset.pattern.permute.xlu0 1
    %1057 = vperm.xlu0 %1056, %v121
    %v1058 = vpop.permute.xlu0 %1057
    %1060 = vset.pattern.permute.xlu0 1
    %1061 = vperm.xlu0 %1060, %v122
    %v1062 = vpop.permute.xlu0 %1061
    %1064 = vset.pattern.permute.xlu0 1
    %1065 = vperm.xlu0 %1064, %v123
    %v1066 = vpop.permute.xlu0 %1065
    %1068 = vset.pattern.permute.xlu0 1
    %1069 = vperm.xlu0 %1068, %v124
    %v1070 = vpop.permute.xlu0 %1069
    %1072 = vset.pattern.permute.xlu0 1
    %1073 = vperm.xlu0 %1072, %v125
    %v1074 = vpop.permute.xlu0 %1073
    %1076 = vset.pattern.permute.xlu0 1
    %1077 = vperm.xlu0 %1076, %v126
    %v1078 = vpop.permute.xlu0 %1077
    %1080 = vset.pattern.permute.xlu0 1
    %1081 = vperm.xlu0 %1080, %v127
    %v1082 = vpop.permute.xlu0 %1081
    %1084 = vset.pattern.permute.xlu0 1
    %1085 = vperm.xlu0 %1084, %v128
    %v1086 = vpop.permute.xlu0 %1085
    %1088 = vset.pattern.permute.xlu0 1
    %1089 = vperm.xlu0 %1088, %v129
    %v1090 = vpop.permute.xlu0 %1089
    %1092 = vset.pattern.permute.xlu0 1
    %1093 = vperm.xlu0 %1092, %v130
    %v1094 = vpop.permute.xlu0 %1093
    %1096 = vset.pattern.permute.xlu0 1
    %1097 = vperm.xlu0 %1096, %v131
    %v1098 = vpop.permute.xlu0 %1097
    %1100 = vset.pattern.permute.xlu0 1
    %1101 = vperm.xlu0 %1100, %v132
    %v1102 = vpop.permute.xlu0 %1101
    %1104 = vset.pattern.permute.xlu0 1
    %1105 = vperm.xlu0 %1104, %v133
    %v1106 = vpop.permute.xlu0 %1105
    %1108 = vset.pattern.permute.xlu0 1
    %1109 = vperm.xlu0 %1108, %v134
    %v1110 = vpop.permute.xlu0 %1109
    %1112 = vset.pattern.permute.xlu0 1
    %1113 = vperm.xlu0 %1112, %v135
    %v1114 = vpop.permute.xlu0 %1113
    %1116 = vset.pattern.permute.xlu0 1
    %1117 = vperm.xlu0 %1116, %v136
    %v1118 = vpop.permute.xlu0 %1117
    %1120 = vset.pattern.permute.xlu0 1
    %1121 = vperm.xlu0 %1120, %v137
    %v1122 = vpop.permute.xlu0 %1121
    %1124 = vset.pattern.permute.xlu0 1
    %1125 = vperm.xlu0 %1124, %v138
    %v1126 = vpop.permute.xlu0 %1125
    %1128 = vset.pattern.permute.xlu0 1
    %1129 = vperm.xlu0 %1128, %v139
    %v1130 = vpop.permute.xlu0 %1129
    %1132 = vset.pattern.permute.xlu0 1
    %1133 = vperm.xlu0 %1132, %v140
    %v1134 = vpop.permute.xlu0 %1133
    %1136 = vset.pattern.permute.xlu0 1
    %1137 = vperm.xlu0 %1136, %v141
    %v1138 = vpop.permute.xlu0 %1137
    %1140 = vset.pattern.permute.xlu0 1
    %1141 = vperm.xlu0 %1140, %v142
    %v1142 = vpop.permute.xlu0 %1141
    %1144 = vset.pattern.permute.xlu0 1
    %1145 = vperm.xlu0 %1144, %v143
    %v1146 = vpop.permute.xlu0 %1145
    %1148 = vset.pattern.permute.xlu0 1
    %1149 = vperm.xlu0 %1148, %v144
    %v1150 = vpop.permute.xlu0 %1149
    %1152 = vset.pattern.permute.xlu0 1
    %1153 = vperm.xlu0 %1152, %v145
    %v1154 = vpop.permute.xlu0 %1153
    %1156 = vset.pattern.permute.xlu0 1
    %1157 = vperm.xlu0 %1156, %v146
    %v1158 = vpop.permute.xlu0 %1157
    %1160 = vset.pattern.permute.xlu0 1
    %1161 = vperm.xlu0 %1160, %v147
    %v1162 = vpop.permute.xlu0 %1161
    %1164 = vset.pattern.permute.xlu0 1
    %1165 = vperm.xlu0 %1164, %v148
    %v1166 = vpop.permute.xlu0 %1165
    %1168 = vset.pattern.permute.xlu0 1
    %1169 = vperm.xlu0 %1168, %v149
    %v1170 = vpop.permute.xlu0 %1169
    %1172 = vset.pattern.permute.xlu0 1
    %1173 = vperm.xlu0 %1172, %v150
    %v1174 = vpop.permute.xlu0 %1173
    %v1176 = vlaneseq
    %v1177 = vshrl.u32 %v1176, 7
    %v1178 = vsub.s32 1, %v1177
    %v1179 = vrot.slane %v151, %v1178
    %v1180 = vmul.f32 %v770, %v1179
    %v1181 = vmul.f32 %v774, %v1179
    %v1182 = vmul.f32 %v778, %v1179
    %v1183 = vmul.f32 %v782, %v1179
    %v1184 = vmul.f32 %v786, %v1179
    %v1185 = vmul.f32 %v790, %v1179
    %v1186 = vmul.f32 %v794, %v1179
    %v1187 = vmul.f32 %v798, %v1179
    %v1188 = vmul.f32 %v802, %v1179
    %v1189 = vmul.f32 %v806, %v1179
    %v1190 = vmul.f32 %v810, %v1179
    %v1191 = vmul.f32 %v814, %v1179
    %v1192 = vmul.f32 %v818, %v1179
    %v1193 = vmul.f32 %v822, %v1179
    %v1194 = vmul.f32 %v826, %v1179
    %v1195 = vmul.f32 %v830, %v1179
    %v1196 = vmul.f32 %v834, %v1179
    %v1197 = vmul.f32 %v838, %v1179
    %v1198 = vmul.f32 %v842, %v1179
    %v1199 = vmul.f32 %v846, %v1179
    %v1200 = vmul.f32 %v850, %v1179
    %v1201 = vmul.f32 %v854, %v1179
    %v1202 = vmul.f32 %v858, %v1179
    %v1203 = vmul.f32 %v862, %v1179
    %v1204 = vmul.f32 %v866, %v1179
    %v1205 = vmul.f32 %v870, %v1179
    %v1206 = vmul.f32 %v874, %v1179
    %v1207 = vmul.f32 %v878, %v1179
    %v1208 = vmul.f32 %v882, %v1179
    %v1209 = vmul.f32 %v886, %v1179
    %v1210 = vmul.f32 %v890, %v1179
    %v1211 = vmul.f32 %v894, %v1179
    %v1212 = vmul.f32 %v898, %v1179
    %v1213 = vmul.f32 %v902, %v1179
    %v1214 = vmul.f32 %v906, %v1179
    %v1215 = vmul.f32 %v910, %v1179
    %v1216 = vmul.f32 %v914, %v1179
    %v1217 = vmul.f32 %v918, %v1179
    %v1218 = vmul.f32 %v922, %v1179
    %v1219 = vmul.f32 %v926, %v1179
    %v1220 = vmul.f32 %v930, %v1179
    %v1221 = vmul.f32 %v934, %v1179
    %v1222 = vmul.f32 %v938, %v1179
    %v1223 = vmul.f32 %v942, %v1179
    %v1224 = vmul.f32 %v946, %v1179
    %v1225 = vmul.f32 %v950, %v1179
    %v1226 = vmul.f32 %v954, %v1179
    %v1227 = vmul.f32 %v958, %v1179
    %v1228 = vmul.f32 %v962, %v1179
    %v1229 = vmul.f32 %v966, %v1179
    %v1230 = vmul.f32 %v970, %v1179
    %v1231 = vmul.f32 %v974, %v1179
    %v1232 = vmul.f32 %v978, %v1179
    %v1233 = vmul.f32 %v982, %v1179
    %v1234 = vmul.f32 %v986, %v1179
    %v1235 = vmul.f32 %v990, %v1179
    %v1236 = vmul.f32 %v994, %v1179
    %v1237 = vmul.f32 %v998, %v1179
    %v1238 = vmul.f32 %v1002, %v1179
    %v1239 = vmul.f32 %v1006, %v1179
    %v1240 = vmul.f32 %v1010, %v1179
    %v1241 = vmul.f32 %v1014, %v1179
    %v1242 = vmul.f32 %v1018, %v1179
    %v1243 = vmul.f32 %v1022, %v1179
    %v1244 = vmul.f32 %v1026, %v1179
    %v1245 = vmul.f32 %v1030, %v1179
    %v1246 = vmul.f32 %v1034, %v1179
    %v1247 = vmul.f32 %v1038, %v1179
    %v1248 = vmul.f32 %v1042, %v1179
    %v1249 = vmul.f32 %v1046, %v1179
    %v1250 = vmul.f32 %v1050, %v1179
    %v1251 = vmul.f32 %v1054, %v1179
    %v1252 = vmul.f32 %v1058, %v1179
    %v1253 = vmul.f32 %v1062, %v1179
    %v1254 = vmul.f32 %v1066, %v1179
    %v1255 = vmul.f32 %v1070, %v1179
    %v1256 = vmul.f32 %v1074, %v1179
    %v1257 = vmul.f32 %v1078, %v1179
    %v1258 = vmul.f32 %v1082, %v1179
    %v1259 = vmul.f32 %v1086, %v1179
    %v1260 = vmul.f32 %v1090, %v1179
    %v1261 = vmul.f32 %v1094, %v1179
    %v1262 = vmul.f32 %v1098, %v1179
    %v1263 = vmul.f32 %v1102, %v1179
    %v1264 = vmul.f32 %v1106, %v1179
    %v1265 = vmul.f32 %v1110, %v1179
    %v1266 = vmul.f32 %v1114, %v1179
    %v1267 = vmul.f32 %v1118, %v1179
    %v1268 = vmul.f32 %v1122, %v1179
    %v1269 = vmul.f32 %v1126, %v1179
    %v1270 = vmul.f32 %v1130, %v1179
    %v1271 = vmul.f32 %v1134, %v1179
    %v1272 = vmul.f32 %v1138, %v1179
    %v1273 = vmul.f32 %v1142, %v1179
    %v1274 = vmul.f32 %v1146, %v1179
    %v1275 = vmul.f32 %v1150, %v1179
    %v1276 = vmul.f32 %v1154, %v1179
    %v1277 = vmul.f32 %v1158, %v1179
    %v1278 = vmul.f32 %v1162, %v1179
    %v1279 = vmul.f32 %v1166, %v1179
    %v1280 = vmul.f32 %v1170, %v1179
    %v1281 = vmul.f32 %v1174, %v1179
    %v1282 = vadd.f32 %v666, %v1180
    %v1283 = vadd.f32 %v667, %v1181
    %v1284 = vadd.f32 %v668, %v1182
    %v1285 = vadd.f32 %v669, %v1183
    %v1286 = vadd.f32 %v670, %v1184
    %v1287 = vadd.f32 %v671, %v1185
    %v1288 = vadd.f32 %v672, %v1186
    %v1289 = vadd.f32 %v673, %v1187
    %v1290 = vadd.f32 %v674, %v1188
    %v1291 = vadd.f32 %v675, %v1189
    %v1292 = vadd.f32 %v676, %v1190
    %v1293 = vadd.f32 %v677, %v1191
    %v1294 = vadd.f32 %v678, %v1192
    %v1295 = vadd.f32 %v679, %v1193
    %v1296 = vadd.f32 %v680, %v1194
    %v1297 = vadd.f32 %v681, %v1195
    %v1298 = vadd.f32 %v682, %v1196
    %v1299 = vadd.f32 %v683, %v1197
    %v1300 = vadd.f32 %v684, %v1198
    %v1301 = vadd.f32 %v685, %v1199
    %v1302 = vadd.f32 %v686, %v1200
    %v1303 = vadd.f32 %v687, %v1201
    %v1304 = vadd.f32 %v688, %v1202
    %v1305 = vadd.f32 %v689, %v1203
    %v1306 = vadd.f32 %v690, %v1204
    %v1307 = vadd.f32 %v691, %v1205
    %v1308 = vadd.f32 %v692, %v1206
    %v1309 = vadd.f32 %v693, %v1207
    %v1310 = vadd.f32 %v694, %v1208
    %v1311 = vadd.f32 %v695, %v1209
    %v1312 = vadd.f32 %v696, %v1210
    %v1313 = vadd.f32 %v697, %v1211
    %v1314 = vadd.f32 %v698, %v1212
    %v1315 = vadd.f32 %v699, %v1213
    %v1316 = vadd.f32 %v700, %v1214
    %v1317 = vadd.f32 %v701, %v1215
    %v1318 = vadd.f32 %v702, %v1216
    %v1319 = vadd.f32 %v703, %v1217
    %v1320 = vadd.f32 %v704, %v1218
    %v1321 = vadd.f32 %v705, %v1219
    %v1322 = vadd.f32 %v706, %v1220
    %v1323 = vadd.f32 %v707, %v1221
    %v1324 = vadd.f32 %v708, %v1222
    %v1325 = vadd.f32 %v709, %v1223
    %v1326 = vadd.f32 %v710, %v1224
    %v1327 = vadd.f32 %v711, %v1225
    %v1328 = vadd.f32 %v712, %v1226
    %v1329 = vadd.f32 %v713, %v1227
    %v1330 = vadd.f32 %v714, %v1228
    %v1331 = vadd.f32 %v715, %v1229
    %v1332 = vadd.f32 %v716, %v1230
    %v1333 = vadd.f32 %v717, %v1231
    %v1334 = vadd.f32 %v718, %v1232
    %v1335 = vadd.f32 %v719, %v1233
    %v1336 = vadd.f32 %v720, %v1234
    %v1337 = vadd.f32 %v721, %v1235
    %v1338 = vadd.f32 %v722, %v1236
    %v1339 = vadd.f32 %v723, %v1237
    %v1340 = vadd.f32 %v724, %v1238
    %v1341 = vadd.f32 %v725, %v1239
    %v1342 = vadd.f32 %v726, %v1240
    %v1343 = vadd.f32 %v727, %v1241
    %v1344 = vadd.f32 %v728, %v1242
    %v1345 = vadd.f32 %v729, %v1243
    %v1346 = vadd.f32 %v730, %v1244
    %v1347 = vadd.f32 %v731, %v1245
    %v1348 = vadd.f32 %v732, %v1246
    %v1349 = vadd.f32 %v733, %v1247
    %v1350 = vadd.f32 %v734, %v1248
    %v1351 = vadd.f32 %v735, %v1249
    %v1352 = vadd.f32 %v736, %v1250
    %v1353 = vadd.f32 %v737, %v1251
    %v1354 = vadd.f32 %v738, %v1252
    %v1355 = vadd.f32 %v739, %v1253
    %v1356 = vadd.f32 %v740, %v1254
    %v1357 = vadd.f32 %v741, %v1255
    %v1358 = vadd.f32 %v742, %v1256
    %v1359 = vadd.f32 %v743, %v1257
    %v1360 = vadd.f32 %v744, %v1258
    %v1361 = vadd.f32 %v745, %v1259
    %v1362 = vadd.f32 %v746, %v1260
    %v1363 = vadd.f32 %v747, %v1261
    %v1364 = vadd.f32 %v748, %v1262
    %v1365 = vadd.f32 %v749, %v1263
    %v1366 = vadd.f32 %v750, %v1264
    %v1367 = vadd.f32 %v751, %v1265
    %v1368 = vadd.f32 %v752, %v1266
    %v1369 = vadd.f32 %v753, %v1267
    %v1370 = vadd.f32 %v754, %v1268
    %v1371 = vadd.f32 %v755, %v1269
    %v1372 = vadd.f32 %v756, %v1270
    %v1373 = vadd.f32 %v757, %v1271
    %v1374 = vadd.f32 %v758, %v1272
    %v1375 = vadd.f32 %v759, %v1273
    %v1376 = vadd.f32 %v760, %v1274
    %v1377 = vadd.f32 %v761, %v1275
    %v1378 = vadd.f32 %v762, %v1276
    %v1379 = vadd.f32 %v763, %v1277
    %v1380 = vadd.f32 %v764, %v1278
    %v1381 = vadd.f32 %v765, %v1279
    %v1382 = vadd.f32 %v766, %v1280
    %v1383 = vadd.f32 %v767, %v1281
    %1384 = vset.pattern.permute.xlu0 2
    %1385 = vperm.xlu0 %1384, %v49
    %v1386 = vpop.permute.xlu0 %1385
    %1388 = vset.pattern.permute.xlu0 2
    %1389 = vperm.xlu0 %1388, %v50
    %v1390 = vpop.permute.xlu0 %1389
    %1392 = vset.pattern.permute.xlu0 2
    %1393 = vperm.xlu0 %1392, %v51
    %v1394 = vpop.permute.xlu0 %1393
    %1396 = vset.pattern.permute.xlu0 2
    %1397 = vperm.xlu0 %1396, %v52
    %v1398 = vpop.permute.xlu0 %1397
    %1400 = vset.pattern.permute.xlu0 2
    %1401 = vperm.xlu0 %1400, %v53
    %v1402 = vpop.permute.xlu0 %1401
    %1404 = vset.pattern.permute.xlu0 2
    %1405 = vperm.xlu0 %1404, %v54
    %v1406 = vpop.permute.xlu0 %1405
    %1408 = vset.pattern.permute.xlu0 2
    %1409 = vperm.xlu0 %1408, %v55
    %v1410 = vpop.permute.xlu0 %1409
    %1412 = vset.pattern.permute.xlu0 2
    %1413 = vperm.xlu0 %1412, %v56
    %v1414 = vpop.permute.xlu0 %1413
    %1416 = vset.pattern.permute.xlu0 2
    %1417 = vperm.xlu0 %1416, %v57
    %v1418 = vpop.permute.xlu0 %1417
    %1420 = vset.pattern.permute.xlu0 2
    %1421 = vperm.xlu0 %1420, %v58
    %v1422 = vpop.permute.xlu0 %1421
    %1424 = vset.pattern.permute.xlu0 2
    %1425 = vperm.xlu0 %1424, %v59
    %v1426 = vpop.permute.xlu0 %1425
    %1428 = vset.pattern.permute.xlu0 2
    %1429 = vperm.xlu0 %1428, %v60
    %v1430 = vpop.permute.xlu0 %1429
    %1432 = vset.pattern.permute.xlu0 2
    %1433 = vperm.xlu0 %1432, %v61
    %v1434 = vpop.permute.xlu0 %1433
    %1436 = vset.pattern.permute.xlu0 2
    %1437 = vperm.xlu0 %1436, %v62
    %v1438 = vpop.permute.xlu0 %1437
    %1440 = vset.pattern.permute.xlu0 2
    %1441 = vperm.xlu0 %1440, %v63
    %v1442 = vpop.permute.xlu0 %1441
    %1444 = vset.pattern.permute.xlu0 2
    %1445 = vperm.xlu0 %1444, %v64
    %v1446 = vpop.permute.xlu0 %1445
    %1448 = vset.pattern.permute.xlu0 2
    %1449 = vperm.xlu0 %1448, %v65
    %v1450 = vpop.permute.xlu0 %1449
    %1452 = vset.pattern.permute.xlu0 2
    %1453 = vperm.xlu0 %1452, %v66
    %v1454 = vpop.permute.xlu0 %1453
    %1456 = vset.pattern.permute.xlu0 2
    %1457 = vperm.xlu0 %1456, %v67
    %v1458 = vpop.permute.xlu0 %1457
    %1460 = vset.pattern.permute.xlu0 2
    %1461 = vperm.xlu0 %1460, %v68
    %v1462 = vpop.permute.xlu0 %1461
    %1464 = vset.pattern.permute.xlu0 2
    %1465 = vperm.xlu0 %1464, %v69
    %v1466 = vpop.permute.xlu0 %1465
    %1468 = vset.pattern.permute.xlu0 2
    %1469 = vperm.xlu0 %1468, %v70
    %v1470 = vpop.permute.xlu0 %1469
    %1472 = vset.pattern.permute.xlu0 2
    %1473 = vperm.xlu0 %1472, %v71
    %v1474 = vpop.permute.xlu0 %1473
    %1476 = vset.pattern.permute.xlu0 2
    %1477 = vperm.xlu0 %1476, %v72
    %v1478 = vpop.permute.xlu0 %1477
    %1480 = vset.pattern.permute.xlu0 2
    %1481 = vperm.xlu0 %1480, %v73
    %v1482 = vpop.permute.xlu0 %1481
    %1484 = vset.pattern.permute.xlu0 2
    %1485 = vperm.xlu0 %1484, %v74
    %v1486 = vpop.permute.xlu0 %1485
    %1488 = vset.pattern.permute.xlu0 2
    %1489 = vperm.xlu0 %1488, %v75
    %v1490 = vpop.permute.xlu0 %1489
    %1492 = vset.pattern.permute.xlu0 2
    %1493 = vperm.xlu0 %1492, %v76
    %v1494 = vpop.permute.xlu0 %1493
    %1496 = vset.pattern.permute.xlu0 2
    %1497 = vperm.xlu0 %1496, %v77
    %v1498 = vpop.permute.xlu0 %1497
    %1500 = vset.pattern.permute.xlu0 2
    %1501 = vperm.xlu0 %1500, %v78
    %v1502 = vpop.permute.xlu0 %1501
    %1504 = vset.pattern.permute.xlu0 2
    %1505 = vperm.xlu0 %1504, %v79
    %v1506 = vpop.permute.xlu0 %1505
    %1508 = vset.pattern.permute.xlu0 2
    %1509 = vperm.xlu0 %1508, %v80
    %v1510 = vpop.permute.xlu0 %1509
    %1512 = vset.pattern.permute.xlu0 2
    %1513 = vperm.xlu0 %1512, %v81
    %v1514 = vpop.permute.xlu0 %1513
    %1516 = vset.pattern.permute.xlu0 2
    %1517 = vperm.xlu0 %1516, %v82
    %v1518 = vpop.permute.xlu0 %1517
    %1520 = vset.pattern.permute.xlu0 2
    %1521 = vperm.xlu0 %1520, %v83
    %v1522 = vpop.permute.xlu0 %1521
    %1524 = vset.pattern.permute.xlu0 2
    %1525 = vperm.xlu0 %1524, %v84
    %v1526 = vpop.permute.xlu0 %1525
    %1528 = vset.pattern.permute.xlu0 2
    %1529 = vperm.xlu0 %1528, %v85
    %v1530 = vpop.permute.xlu0 %1529
    %1532 = vset.pattern.permute.xlu0 2
    %1533 = vperm.xlu0 %1532, %v86
    %v1534 = vpop.permute.xlu0 %1533
    %1536 = vset.pattern.permute.xlu0 2
    %1537 = vperm.xlu0 %1536, %v87
    %v1538 = vpop.permute.xlu0 %1537
    %1540 = vset.pattern.permute.xlu0 2
    %1541 = vperm.xlu0 %1540, %v88
    %v1542 = vpop.permute.xlu0 %1541
    %1544 = vset.pattern.permute.xlu0 2
    %1545 = vperm.xlu0 %1544, %v89
    %v1546 = vpop.permute.xlu0 %1545
    %1548 = vset.pattern.permute.xlu0 2
    %1549 = vperm.xlu0 %1548, %v90
    %v1550 = vpop.permute.xlu0 %1549
    %1552 = vset.pattern.permute.xlu0 2
    %1553 = vperm.xlu0 %1552, %v91
    %v1554 = vpop.permute.xlu0 %1553
    %1556 = vset.pattern.permute.xlu0 2
    %1557 = vperm.xlu0 %1556, %v92
    %v1558 = vpop.permute.xlu0 %1557
    %1560 = vset.pattern.permute.xlu0 2
    %1561 = vperm.xlu0 %1560, %v93
    %v1562 = vpop.permute.xlu0 %1561
    %1564 = vset.pattern.permute.xlu0 2
    %1565 = vperm.xlu0 %1564, %v94
    %v1566 = vpop.permute.xlu0 %1565
    %1568 = vset.pattern.permute.xlu0 2
    %1569 = vperm.xlu0 %1568, %v95
    %v1570 = vpop.permute.xlu0 %1569
    %1572 = vset.pattern.permute.xlu0 2
    %1573 = vperm.xlu0 %1572, %v96
    %v1574 = vpop.permute.xlu0 %1573
    %1576 = vset.pattern.permute.xlu0 2
    %1577 = vperm.xlu0 %1576, %v97
    %v1578 = vpop.permute.xlu0 %1577
    %1580 = vset.pattern.permute.xlu0 2
    %1581 = vperm.xlu0 %1580, %v98
    %v1582 = vpop.permute.xlu0 %1581
    %1584 = vset.pattern.permute.xlu0 2
    %1585 = vperm.xlu0 %1584, %v99
    %v1586 = vpop.permute.xlu0 %1585
    %1588 = vset.pattern.permute.xlu0 2
    %1589 = vperm.xlu0 %1588, %v100
    %v1590 = vpop.permute.xlu0 %1589
    %1592 = vset.pattern.permute.xlu0 2
    %1593 = vperm.xlu0 %1592, %v101
    %v1594 = vpop.permute.xlu0 %1593
    %1596 = vset.pattern.permute.xlu0 2
    %1597 = vperm.xlu0 %1596, %v102
    %v1598 = vpop.permute.xlu0 %1597
    %1600 = vset.pattern.permute.xlu0 2
    %1601 = vperm.xlu0 %1600, %v103
    %v1602 = vpop.permute.xlu0 %1601
    %1604 = vset.pattern.permute.xlu0 2
    %1605 = vperm.xlu0 %1604, %v104
    %v1606 = vpop.permute.xlu0 %1605
    %1608 = vset.pattern.permute.xlu0 2
    %1609 = vperm.xlu0 %1608, %v105
    %v1610 = vpop.permute.xlu0 %1609
    %1612 = vset.pattern.permute.xlu0 2
    %1613 = vperm.xlu0 %1612, %v106
    %v1614 = vpop.permute.xlu0 %1613
    %1616 = vset.pattern.permute.xlu0 2
    %1617 = vperm.xlu0 %1616, %v107
    %v1618 = vpop.permute.xlu0 %1617
    %1620 = vset.pattern.permute.xlu0 2
    %1621 = vperm.xlu0 %1620, %v108
    %v1622 = vpop.permute.xlu0 %1621
    %1624 = vset.pattern.permute.xlu0 2
    %1625 = vperm.xlu0 %1624, %v109
    %v1626 = vpop.permute.xlu0 %1625
    %1628 = vset.pattern.permute.xlu0 2
    %1629 = vperm.xlu0 %1628, %v110
    %v1630 = vpop.permute.xlu0 %1629
    %1632 = vset.pattern.permute.xlu0 2
    %1633 = vperm.xlu0 %1632, %v111
    %v1634 = vpop.permute.xlu0 %1633
    %1636 = vset.pattern.permute.xlu0 2
    %1637 = vperm.xlu0 %1636, %v112
    %v1638 = vpop.permute.xlu0 %1637
    %1640 = vset.pattern.permute.xlu0 2
    %1641 = vperm.xlu0 %1640, %v113
    %v1642 = vpop.permute.xlu0 %1641
    %1644 = vset.pattern.permute.xlu0 2
    %1645 = vperm.xlu0 %1644, %v114
    %v1646 = vpop.permute.xlu0 %1645
    %1648 = vset.pattern.permute.xlu0 2
    %1649 = vperm.xlu0 %1648, %v115
    %v1650 = vpop.permute.xlu0 %1649
    %1652 = vset.pattern.permute.xlu0 2
    %1653 = vperm.xlu0 %1652, %v116
    %v1654 = vpop.permute.xlu0 %1653
    %1656 = vset.pattern.permute.xlu0 2
    %1657 = vperm.xlu0 %1656, %v117
    %v1658 = vpop.permute.xlu0 %1657
    %1660 = vset.pattern.permute.xlu0 2
    %1661 = vperm.xlu0 %1660, %v118
    %v1662 = vpop.permute.xlu0 %1661
    %1664 = vset.pattern.permute.xlu0 2
    %1665 = vperm.xlu0 %1664, %v119
    %v1666 = vpop.permute.xlu0 %1665
    %1668 = vset.pattern.permute.xlu0 2
    %1669 = vperm.xlu0 %1668, %v120
    %v1670 = vpop.permute.xlu0 %1669
    %1672 = vset.pattern.permute.xlu0 2
    %1673 = vperm.xlu0 %1672, %v121
    %v1674 = vpop.permute.xlu0 %1673
    %1676 = vset.pattern.permute.xlu0 2
    %1677 = vperm.xlu0 %1676, %v122
    %v1678 = vpop.permute.xlu0 %1677
    %1680 = vset.pattern.permute.xlu0 2
    %1681 = vperm.xlu0 %1680, %v123
    %v1682 = vpop.permute.xlu0 %1681
    %1684 = vset.pattern.permute.xlu0 2
    %1685 = vperm.xlu0 %1684, %v124
    %v1686 = vpop.permute.xlu0 %1685
    %1688 = vset.pattern.permute.xlu0 2
    %1689 = vperm.xlu0 %1688, %v125
    %v1690 = vpop.permute.xlu0 %1689
    %1692 = vset.pattern.permute.xlu0 2
    %1693 = vperm.xlu0 %1692, %v126
    %v1694 = vpop.permute.xlu0 %1693
    %1696 = vset.pattern.permute.xlu0 2
    %1697 = vperm.xlu0 %1696, %v127
    %v1698 = vpop.permute.xlu0 %1697
    %1700 = vset.pattern.permute.xlu0 2
    %1701 = vperm.xlu0 %1700, %v128
    %v1702 = vpop.permute.xlu0 %1701
    %1704 = vset.pattern.permute.xlu0 2
    %1705 = vperm.xlu0 %1704, %v129
    %v1706 = vpop.permute.xlu0 %1705
    %1708 = vset.pattern.permute.xlu0 2
    %1709 = vperm.xlu0 %1708, %v130
    %v1710 = vpop.permute.xlu0 %1709
    %1712 = vset.pattern.permute.xlu0 2
    %1713 = vperm.xlu0 %1712, %v131
    %v1714 = vpop.permute.xlu0 %1713
    %1716 = vset.pattern.permute.xlu0 2
    %1717 = vperm.xlu0 %1716, %v132
    %v1718 = vpop.permute.xlu0 %1717
    %1720 = vset.pattern.permute.xlu0 2
    %1721 = vperm.xlu0 %1720, %v133
    %v1722 = vpop.permute.xlu0 %1721
    %1724 = vset.pattern.permute.xlu0 2
    %1725 = vperm.xlu0 %1724, %v134
    %v1726 = vpop.permute.xlu0 %1725
    %1728 = vset.pattern.permute.xlu0 2
    %1729 = vperm.xlu0 %1728, %v135
    %v1730 = vpop.permute.xlu0 %1729
    %1732 = vset.pattern.permute.xlu0 2
    %1733 = vperm.xlu0 %1732, %v136
    %v1734 = vpop.permute.xlu0 %1733
    %1736 = vset.pattern.permute.xlu0 2
    %1737 = vperm.xlu0 %1736, %v137
    %v1738 = vpop.permute.xlu0 %1737
    %1740 = vset.pattern.permute.xlu0 2
    %1741 = vperm.xlu0 %1740, %v138
    %v1742 = vpop.permute.xlu0 %1741
    %1744 = vset.pattern.permute.xlu0 2
    %1745 = vperm.xlu0 %1744, %v139
    %v1746 = vpop.permute.xlu0 %1745
    %1748 = vset.pattern.permute.xlu0 2
    %1749 = vperm.xlu0 %1748, %v140
    %v1750 = vpop.permute.xlu0 %1749
    %1752 = vset.pattern.permute.xlu0 2
    %1753 = vperm.xlu0 %1752, %v141
    %v1754 = vpop.permute.xlu0 %1753
    %1756 = vset.pattern.permute.xlu0 2
    %1757 = vperm.xlu0 %1756, %v142
    %v1758 = vpop.permute.xlu0 %1757
    %1760 = vset.pattern.permute.xlu0 2
    %1761 = vperm.xlu0 %1760, %v143
    %v1762 = vpop.permute.xlu0 %1761
    %1764 = vset.pattern.permute.xlu0 2
    %1765 = vperm.xlu0 %1764, %v144
    %v1766 = vpop.permute.xlu0 %1765
    %1768 = vset.pattern.permute.xlu0 2
    %1769 = vperm.xlu0 %1768, %v145
    %v1770 = vpop.permute.xlu0 %1769
    %1772 = vset.pattern.permute.xlu0 2
    %1773 = vperm.xlu0 %1772, %v146
    %v1774 = vpop.permute.xlu0 %1773
    %1776 = vset.pattern.permute.xlu0 2
    %1777 = vperm.xlu0 %1776, %v147
    %v1778 = vpop.permute.xlu0 %1777
    %1780 = vset.pattern.permute.xlu0 2
    %1781 = vperm.xlu0 %1780, %v148
    %v1782 = vpop.permute.xlu0 %1781
    %1784 = vset.pattern.permute.xlu0 2
    %1785 = vperm.xlu0 %1784, %v149
    %v1786 = vpop.permute.xlu0 %1785
    %1788 = vset.pattern.permute.xlu0 2
    %1789 = vperm.xlu0 %1788, %v150
    %v1790 = vpop.permute.xlu0 %1789
    %v1792 = vlaneseq
    %v1793 = vshrl.u32 %v1792, 7
    %v1794 = vsub.s32 2, %v1793
    %v1795 = vrot.slane %v151, %v1794
    %v1796 = vmul.f32 %v1386, %v1795
    %v1797 = vmul.f32 %v1390, %v1795
    %v1798 = vmul.f32 %v1394, %v1795
    %v1799 = vmul.f32 %v1398, %v1795
    %v1800 = vmul.f32 %v1402, %v1795
    %v1801 = vmul.f32 %v1406, %v1795
    %v1802 = vmul.f32 %v1410, %v1795
    %v1803 = vmul.f32 %v1414, %v1795
    %v1804 = vmul.f32 %v1418, %v1795
    %v1805 = vmul.f32 %v1422, %v1795
    %v1806 = vmul.f32 %v1426, %v1795
    %v1807 = vmul.f32 %v1430, %v1795
    %v1808 = vmul.f32 %v1434, %v1795
    %v1809 = vmul.f32 %v1438, %v1795
    %v1810 = vmul.f32 %v1442, %v1795
    %v1811 = vmul.f32 %v1446, %v1795
    %v1812 = vmul.f32 %v1450, %v1795
    %v1813 = vmul.f32 %v1454, %v1795
    %v1814 = vmul.f32 %v1458, %v1795
    %v1815 = vmul.f32 %v1462, %v1795
    %v1816 = vmul.f32 %v1466, %v1795
    %v1817 = vmul.f32 %v1470, %v1795
    %v1818 = vmul.f32 %v1474, %v1795
    %v1819 = vmul.f32 %v1478, %v1795
    %v1820 = vmul.f32 %v1482, %v1795
    %v1821 = vmul.f32 %v1486, %v1795
    %v1822 = vmul.f32 %v1490, %v1795
    %v1823 = vmul.f32 %v1494, %v1795
    %v1824 = vmul.f32 %v1498, %v1795
    %v1825 = vmul.f32 %v1502, %v1795
    %v1826 = vmul.f32 %v1506, %v1795
    %v1827 = vmul.f32 %v1510, %v1795
    %v1828 = vmul.f32 %v1514, %v1795
    %v1829 = vmul.f32 %v1518, %v1795
    %v1830 = vmul.f32 %v1522, %v1795
    %v1831 = vmul.f32 %v1526, %v1795
    %v1832 = vmul.f32 %v1530, %v1795
    %v1833 = vmul.f32 %v1534, %v1795
    %v1834 = vmul.f32 %v1538, %v1795
    %v1835 = vmul.f32 %v1542, %v1795
    %v1836 = vmul.f32 %v1546, %v1795
    %v1837 = vmul.f32 %v1550, %v1795
    %v1838 = vmul.f32 %v1554, %v1795
    %v1839 = vmul.f32 %v1558, %v1795
    %v1840 = vmul.f32 %v1562, %v1795
    %v1841 = vmul.f32 %v1566, %v1795
    %v1842 = vmul.f32 %v1570, %v1795
    %v1843 = vmul.f32 %v1574, %v1795
    %v1844 = vmul.f32 %v1578, %v1795
    %v1845 = vmul.f32 %v1582, %v1795
    %v1846 = vmul.f32 %v1586, %v1795
    %v1847 = vmul.f32 %v1590, %v1795
    %v1848 = vmul.f32 %v1594, %v1795
    %v1849 = vmul.f32 %v1598, %v1795
    %v1850 = vmul.f32 %v1602, %v1795
    %v1851 = vmul.f32 %v1606, %v1795
    %v1852 = vmul.f32 %v1610, %v1795
    %v1853 = vmul.f32 %v1614, %v1795
    %v1854 = vmul.f32 %v1618, %v1795
    %v1855 = vmul.f32 %v1622, %v1795
    %v1856 = vmul.f32 %v1626, %v1795
    %v1857 = vmul.f32 %v1630, %v1795
    %v1858 = vmul.f32 %v1634, %v1795
    %v1859 = vmul.f32 %v1638, %v1795
    %v1860 = vmul.f32 %v1642, %v1795
    %v1861 = vmul.f32 %v1646, %v1795
    %v1862 = vmul.f32 %v1650, %v1795
    %v1863 = vmul.f32 %v1654, %v1795
    %v1864 = vmul.f32 %v1658, %v1795
    %v1865 = vmul.f32 %v1662, %v1795
    %v1866 = vmul.f32 %v1666, %v1795
    %v1867 = vmul.f32 %v1670, %v1795
    %v1868 = vmul.f32 %v1674, %v1795
    %v1869 = vmul.f32 %v1678, %v1795
    %v1870 = vmul.f32 %v1682, %v1795
    %v1871 = vmul.f32 %v1686, %v1795
    %v1872 = vmul.f32 %v1690, %v1795
    %v1873 = vmul.f32 %v1694, %v1795
    %v1874 = vmul.f32 %v1698, %v1795
    %v1875 = vmul.f32 %v1702, %v1795
    %v1876 = vmul.f32 %v1706, %v1795
    %v1877 = vmul.f32 %v1710, %v1795
    %v1878 = vmul.f32 %v1714, %v1795
    %v1879 = vmul.f32 %v1718, %v1795
    %v1880 = vmul.f32 %v1722, %v1795
    %v1881 = vmul.f32 %v1726, %v1795
    %v1882 = vmul.f32 %v1730, %v1795
    %v1883 = vmul.f32 %v1734, %v1795
    %v1884 = vmul.f32 %v1738, %v1795
    %v1885 = vmul.f32 %v1742, %v1795
    %v1886 = vmul.f32 %v1746, %v1795
    %v1887 = vmul.f32 %v1750, %v1795
    %v1888 = vmul.f32 %v1754, %v1795
    %v1889 = vmul.f32 %v1758, %v1795
    %v1890 = vmul.f32 %v1762, %v1795
    %v1891 = vmul.f32 %v1766, %v1795
    %v1892 = vmul.f32 %v1770, %v1795
    %v1893 = vmul.f32 %v1774, %v1795
    %v1894 = vmul.f32 %v1778, %v1795
    %v1895 = vmul.f32 %v1782, %v1795
    %v1896 = vmul.f32 %v1786, %v1795
    %v1897 = vmul.f32 %v1790, %v1795
    %v1898 = vadd.f32 %v1282, %v1796
    %v1899 = vadd.f32 %v1283, %v1797
    %v1900 = vadd.f32 %v1284, %v1798
    %v1901 = vadd.f32 %v1285, %v1799
    %v1902 = vadd.f32 %v1286, %v1800
    %v1903 = vadd.f32 %v1287, %v1801
    %v1904 = vadd.f32 %v1288, %v1802
    %v1905 = vadd.f32 %v1289, %v1803
    %v1906 = vadd.f32 %v1290, %v1804
    %v1907 = vadd.f32 %v1291, %v1805
    %v1908 = vadd.f32 %v1292, %v1806
    %v1909 = vadd.f32 %v1293, %v1807
    %v1910 = vadd.f32 %v1294, %v1808
    %v1911 = vadd.f32 %v1295, %v1809
    %v1912 = vadd.f32 %v1296, %v1810
    %v1913 = vadd.f32 %v1297, %v1811
    %v1914 = vadd.f32 %v1298, %v1812
    %v1915 = vadd.f32 %v1299, %v1813
    %v1916 = vadd.f32 %v1300, %v1814
    %v1917 = vadd.f32 %v1301, %v1815
    %v1918 = vadd.f32 %v1302, %v1816
    %v1919 = vadd.f32 %v1303, %v1817
    %v1920 = vadd.f32 %v1304, %v1818
    %v1921 = vadd.f32 %v1305, %v1819
    %v1922 = vadd.f32 %v1306, %v1820
    %v1923 = vadd.f32 %v1307, %v1821
    %v1924 = vadd.f32 %v1308, %v1822
    %v1925 = vadd.f32 %v1309, %v1823
    %v1926 = vadd.f32 %v1310, %v1824
    %v1927 = vadd.f32 %v1311, %v1825
    %v1928 = vadd.f32 %v1312, %v1826
    %v1929 = vadd.f32 %v1313, %v1827
    %v1930 = vadd.f32 %v1314, %v1828
    %v1931 = vadd.f32 %v1315, %v1829
    %v1932 = vadd.f32 %v1316, %v1830
    %v1933 = vadd.f32 %v1317, %v1831
    %v1934 = vadd.f32 %v1318, %v1832
    %v1935 = vadd.f32 %v1319, %v1833
    %v1936 = vadd.f32 %v1320, %v1834
    %v1937 = vadd.f32 %v1321, %v1835
    %v1938 = vadd.f32 %v1322, %v1836
    %v1939 = vadd.f32 %v1323, %v1837
    %v1940 = vadd.f32 %v1324, %v1838
    %v1941 = vadd.f32 %v1325, %v1839
    %v1942 = vadd.f32 %v1326, %v1840
    %v1943 = vadd.f32 %v1327, %v1841
    %v1944 = vadd.f32 %v1328, %v1842
    %v1945 = vadd.f32 %v1329, %v1843
    %v1946 = vadd.f32 %v1330, %v1844
    %v1947 = vadd.f32 %v1331, %v1845
    %v1948 = vadd.f32 %v1332, %v1846
    %v1949 = vadd.f32 %v1333, %v1847
    %v1950 = vadd.f32 %v1334, %v1848
    %v1951 = vadd.f32 %v1335, %v1849
    %v1952 = vadd.f32 %v1336, %v1850
    %v1953 = vadd.f32 %v1337, %v1851
    %v1954 = vadd.f32 %v1338, %v1852
    %v1955 = vadd.f32 %v1339, %v1853
    %v1956 = vadd.f32 %v1340, %v1854
    %v1957 = vadd.f32 %v1341, %v1855
    %v1958 = vadd.f32 %v1342, %v1856
    %v1959 = vadd.f32 %v1343, %v1857
    %v1960 = vadd.f32 %v1344, %v1858
    %v1961 = vadd.f32 %v1345, %v1859
    %v1962 = vadd.f32 %v1346, %v1860
    %v1963 = vadd.f32 %v1347, %v1861
    %v1964 = vadd.f32 %v1348, %v1862
    %v1965 = vadd.f32 %v1349, %v1863
    %v1966 = vadd.f32 %v1350, %v1864
    %v1967 = vadd.f32 %v1351, %v1865
    %v1968 = vadd.f32 %v1352, %v1866
    %v1969 = vadd.f32 %v1353, %v1867
    %v1970 = vadd.f32 %v1354, %v1868
    %v1971 = vadd.f32 %v1355, %v1869
    %v1972 = vadd.f32 %v1356, %v1870
    %v1973 = vadd.f32 %v1357, %v1871
    %v1974 = vadd.f32 %v1358, %v1872
    %v1975 = vadd.f32 %v1359, %v1873
    %v1976 = vadd.f32 %v1360, %v1874
    %v1977 = vadd.f32 %v1361, %v1875
    %v1978 = vadd.f32 %v1362, %v1876
    %v1979 = vadd.f32 %v1363, %v1877
    %v1980 = vadd.f32 %v1364, %v1878
    %v1981 = vadd.f32 %v1365, %v1879
    %v1982 = vadd.f32 %v1366, %v1880
    %v1983 = vadd.f32 %v1367, %v1881
    %v1984 = vadd.f32 %v1368, %v1882
    %v1985 = vadd.f32 %v1369, %v1883
    %v1986 = vadd.f32 %v1370, %v1884
    %v1987 = vadd.f32 %v1371, %v1885
    %v1988 = vadd.f32 %v1372, %v1886
    %v1989 = vadd.f32 %v1373, %v1887
    %v1990 = vadd.f32 %v1374, %v1888
    %v1991 = vadd.f32 %v1375, %v1889
    %v1992 = vadd.f32 %v1376, %v1890
    %v1993 = vadd.f32 %v1377, %v1891
    %v1994 = vadd.f32 %v1378, %v1892
    %v1995 = vadd.f32 %v1379, %v1893
    %v1996 = vadd.f32 %v1380, %v1894
    %v1997 = vadd.f32 %v1381, %v1895
    %v1998 = vadd.f32 %v1382, %v1896
    %v1999 = vadd.f32 %v1383, %v1897
    %2000 = vset.pattern.permute.xlu0 3
    %2001 = vperm.xlu0 %2000, %v49
    %v2002 = vpop.permute.xlu0 %2001
    %2004 = vset.pattern.permute.xlu0 3
    %2005 = vperm.xlu0 %2004, %v50
    %v2006 = vpop.permute.xlu0 %2005
    %2008 = vset.pattern.permute.xlu0 3
    %2009 = vperm.xlu0 %2008, %v51
    %v2010 = vpop.permute.xlu0 %2009
    %2012 = vset.pattern.permute.xlu0 3
    %2013 = vperm.xlu0 %2012, %v52
    %v2014 = vpop.permute.xlu0 %2013
    %2016 = vset.pattern.permute.xlu0 3
    %2017 = vperm.xlu0 %2016, %v53
    %v2018 = vpop.permute.xlu0 %2017
    %2020 = vset.pattern.permute.xlu0 3
    %2021 = vperm.xlu0 %2020, %v54
    %v2022 = vpop.permute.xlu0 %2021
    %2024 = vset.pattern.permute.xlu0 3
    %2025 = vperm.xlu0 %2024, %v55
    %v2026 = vpop.permute.xlu0 %2025
    %2028 = vset.pattern.permute.xlu0 3
    %2029 = vperm.xlu0 %2028, %v56
    %v2030 = vpop.permute.xlu0 %2029
    %2032 = vset.pattern.permute.xlu0 3
    %2033 = vperm.xlu0 %2032, %v57
    %v2034 = vpop.permute.xlu0 %2033
    %2036 = vset.pattern.permute.xlu0 3
    %2037 = vperm.xlu0 %2036, %v58
    %v2038 = vpop.permute.xlu0 %2037
    %2040 = vset.pattern.permute.xlu0 3
    %2041 = vperm.xlu0 %2040, %v59
    %v2042 = vpop.permute.xlu0 %2041
    %2044 = vset.pattern.permute.xlu0 3
    %2045 = vperm.xlu0 %2044, %v60
    %v2046 = vpop.permute.xlu0 %2045
    %2048 = vset.pattern.permute.xlu0 3
    %2049 = vperm.xlu0 %2048, %v61
    %v2050 = vpop.permute.xlu0 %2049
    %2052 = vset.pattern.permute.xlu0 3
    %2053 = vperm.xlu0 %2052, %v62
    %v2054 = vpop.permute.xlu0 %2053
    %2056 = vset.pattern.permute.xlu0 3
    %2057 = vperm.xlu0 %2056, %v63
    %v2058 = vpop.permute.xlu0 %2057
    %2060 = vset.pattern.permute.xlu0 3
    %2061 = vperm.xlu0 %2060, %v64
    %v2062 = vpop.permute.xlu0 %2061
    %2064 = vset.pattern.permute.xlu0 3
    %2065 = vperm.xlu0 %2064, %v65
    %v2066 = vpop.permute.xlu0 %2065
    %2068 = vset.pattern.permute.xlu0 3
    %2069 = vperm.xlu0 %2068, %v66
    %v2070 = vpop.permute.xlu0 %2069
    %2072 = vset.pattern.permute.xlu0 3
    %2073 = vperm.xlu0 %2072, %v67
    %v2074 = vpop.permute.xlu0 %2073
    %2076 = vset.pattern.permute.xlu0 3
    %2077 = vperm.xlu0 %2076, %v68
    %v2078 = vpop.permute.xlu0 %2077
    %2080 = vset.pattern.permute.xlu0 3
    %2081 = vperm.xlu0 %2080, %v69
    %v2082 = vpop.permute.xlu0 %2081
    %2084 = vset.pattern.permute.xlu0 3
    %2085 = vperm.xlu0 %2084, %v70
    %v2086 = vpop.permute.xlu0 %2085
    %2088 = vset.pattern.permute.xlu0 3
    %2089 = vperm.xlu0 %2088, %v71
    %v2090 = vpop.permute.xlu0 %2089
    %2092 = vset.pattern.permute.xlu0 3
    %2093 = vperm.xlu0 %2092, %v72
    %v2094 = vpop.permute.xlu0 %2093
    %2096 = vset.pattern.permute.xlu0 3
    %2097 = vperm.xlu0 %2096, %v73
    %v2098 = vpop.permute.xlu0 %2097
    %2100 = vset.pattern.permute.xlu0 3
    %2101 = vperm.xlu0 %2100, %v74
    %v2102 = vpop.permute.xlu0 %2101
    %2104 = vset.pattern.permute.xlu0 3
    %2105 = vperm.xlu0 %2104, %v75
    %v2106 = vpop.permute.xlu0 %2105
    %2108 = vset.pattern.permute.xlu0 3
    %2109 = vperm.xlu0 %2108, %v76
    %v2110 = vpop.permute.xlu0 %2109
    %2112 = vset.pattern.permute.xlu0 3
    %2113 = vperm.xlu0 %2112, %v77
    %v2114 = vpop.permute.xlu0 %2113
    %2116 = vset.pattern.permute.xlu0 3
    %2117 = vperm.xlu0 %2116, %v78
    %v2118 = vpop.permute.xlu0 %2117
    %2120 = vset.pattern.permute.xlu0 3
    %2121 = vperm.xlu0 %2120, %v79
    %v2122 = vpop.permute.xlu0 %2121
    %2124 = vset.pattern.permute.xlu0 3
    %2125 = vperm.xlu0 %2124, %v80
    %v2126 = vpop.permute.xlu0 %2125
    %2128 = vset.pattern.permute.xlu0 3
    %2129 = vperm.xlu0 %2128, %v81
    %v2130 = vpop.permute.xlu0 %2129
    %2132 = vset.pattern.permute.xlu0 3
    %2133 = vperm.xlu0 %2132, %v82
    %v2134 = vpop.permute.xlu0 %2133
    %2136 = vset.pattern.permute.xlu0 3
    %2137 = vperm.xlu0 %2136, %v83
    %v2138 = vpop.permute.xlu0 %2137
    %2140 = vset.pattern.permute.xlu0 3
    %2141 = vperm.xlu0 %2140, %v84
    %v2142 = vpop.permute.xlu0 %2141
    %2144 = vset.pattern.permute.xlu0 3
    %2145 = vperm.xlu0 %2144, %v85
    %v2146 = vpop.permute.xlu0 %2145
    %2148 = vset.pattern.permute.xlu0 3
    %2149 = vperm.xlu0 %2148, %v86
    %v2150 = vpop.permute.xlu0 %2149
    %2152 = vset.pattern.permute.xlu0 3
    %2153 = vperm.xlu0 %2152, %v87
    %v2154 = vpop.permute.xlu0 %2153
    %2156 = vset.pattern.permute.xlu0 3
    %2157 = vperm.xlu0 %2156, %v88
    %v2158 = vpop.permute.xlu0 %2157
    %2160 = vset.pattern.permute.xlu0 3
    %2161 = vperm.xlu0 %2160, %v89
    %v2162 = vpop.permute.xlu0 %2161
    %2164 = vset.pattern.permute.xlu0 3
    %2165 = vperm.xlu0 %2164, %v90
    %v2166 = vpop.permute.xlu0 %2165
    %2168 = vset.pattern.permute.xlu0 3
    %2169 = vperm.xlu0 %2168, %v91
    %v2170 = vpop.permute.xlu0 %2169
    %2172 = vset.pattern.permute.xlu0 3
    %2173 = vperm.xlu0 %2172, %v92
    %v2174 = vpop.permute.xlu0 %2173
    %2176 = vset.pattern.permute.xlu0 3
    %2177 = vperm.xlu0 %2176, %v93
    %v2178 = vpop.permute.xlu0 %2177
    %2180 = vset.pattern.permute.xlu0 3
    %2181 = vperm.xlu0 %2180, %v94
    %v2182 = vpop.permute.xlu0 %2181
    %2184 = vset.pattern.permute.xlu0 3
    %2185 = vperm.xlu0 %2184, %v95
    %v2186 = vpop.permute.xlu0 %2185
    %2188 = vset.pattern.permute.xlu0 3
    %2189 = vperm.xlu0 %2188, %v96
    %v2190 = vpop.permute.xlu0 %2189
    %2192 = vset.pattern.permute.xlu0 3
    %2193 = vperm.xlu0 %2192, %v97
    %v2194 = vpop.permute.xlu0 %2193
    %2196 = vset.pattern.permute.xlu0 3
    %2197 = vperm.xlu0 %2196, %v98
    %v2198 = vpop.permute.xlu0 %2197
    %2200 = vset.pattern.permute.xlu0 3
    %2201 = vperm.xlu0 %2200, %v99
    %v2202 = vpop.permute.xlu0 %2201
    %2204 = vset.pattern.permute.xlu0 3
    %2205 = vperm.xlu0 %2204, %v100
    %v2206 = vpop.permute.xlu0 %2205
    %2208 = vset.pattern.permute.xlu0 3
    %2209 = vperm.xlu0 %2208, %v101
    %v2210 = vpop.permute.xlu0 %2209
    %2212 = vset.pattern.permute.xlu0 3
    %2213 = vperm.xlu0 %2212, %v102
    %v2214 = vpop.permute.xlu0 %2213
    %2216 = vset.pattern.permute.xlu0 3
    %2217 = vperm.xlu0 %2216, %v103
    %v2218 = vpop.permute.xlu0 %2217
    %2220 = vset.pattern.permute.xlu0 3
    %2221 = vperm.xlu0 %2220, %v104
    %v2222 = vpop.permute.xlu0 %2221
    %2224 = vset.pattern.permute.xlu0 3
    %2225 = vperm.xlu0 %2224, %v105
    %v2226 = vpop.permute.xlu0 %2225
    %2228 = vset.pattern.permute.xlu0 3
    %2229 = vperm.xlu0 %2228, %v106
    %v2230 = vpop.permute.xlu0 %2229
    %2232 = vset.pattern.permute.xlu0 3
    %2233 = vperm.xlu0 %2232, %v107
    %v2234 = vpop.permute.xlu0 %2233
    %2236 = vset.pattern.permute.xlu0 3
    %2237 = vperm.xlu0 %2236, %v108
    %v2238 = vpop.permute.xlu0 %2237
    %2240 = vset.pattern.permute.xlu0 3
    %2241 = vperm.xlu0 %2240, %v109
    %v2242 = vpop.permute.xlu0 %2241
    %2244 = vset.pattern.permute.xlu0 3
    %2245 = vperm.xlu0 %2244, %v110
    %v2246 = vpop.permute.xlu0 %2245
    %2248 = vset.pattern.permute.xlu0 3
    %2249 = vperm.xlu0 %2248, %v111
    %v2250 = vpop.permute.xlu0 %2249
    %2252 = vset.pattern.permute.xlu0 3
    %2253 = vperm.xlu0 %2252, %v112
    %v2254 = vpop.permute.xlu0 %2253
    %2256 = vset.pattern.permute.xlu0 3
    %2257 = vperm.xlu0 %2256, %v113
    %v2258 = vpop.permute.xlu0 %2257
    %2260 = vset.pattern.permute.xlu0 3
    %2261 = vperm.xlu0 %2260, %v114
    %v2262 = vpop.permute.xlu0 %2261
    %2264 = vset.pattern.permute.xlu0 3
    %2265 = vperm.xlu0 %2264, %v115
    %v2266 = vpop.permute.xlu0 %2265
    %2268 = vset.pattern.permute.xlu0 3
    %2269 = vperm.xlu0 %2268, %v116
    %v2270 = vpop.permute.xlu0 %2269
    %2272 = vset.pattern.permute.xlu0 3
    %2273 = vperm.xlu0 %2272, %v117
    %v2274 = vpop.permute.xlu0 %2273
    %2276 = vset.pattern.permute.xlu0 3
    %2277 = vperm.xlu0 %2276, %v118
    %v2278 = vpop.permute.xlu0 %2277
    %2280 = vset.pattern.permute.xlu0 3
    %2281 = vperm.xlu0 %2280, %v119
    %v2282 = vpop.permute.xlu0 %2281
    %2284 = vset.pattern.permute.xlu0 3
    %2285 = vperm.xlu0 %2284, %v120
    %v2286 = vpop.permute.xlu0 %2285
    %2288 = vset.pattern.permute.xlu0 3
    %2289 = vperm.xlu0 %2288, %v121
    %v2290 = vpop.permute.xlu0 %2289
    %2292 = vset.pattern.permute.xlu0 3
    %2293 = vperm.xlu0 %2292, %v122
    %v2294 = vpop.permute.xlu0 %2293
    %2296 = vset.pattern.permute.xlu0 3
    %2297 = vperm.xlu0 %2296, %v123
    %v2298 = vpop.permute.xlu0 %2297
    %2300 = vset.pattern.permute.xlu0 3
    %2301 = vperm.xlu0 %2300, %v124
    %v2302 = vpop.permute.xlu0 %2301
    %2304 = vset.pattern.permute.xlu0 3
    %2305 = vperm.xlu0 %2304, %v125
    %v2306 = vpop.permute.xlu0 %2305
    %2308 = vset.pattern.permute.xlu0 3
    %2309 = vperm.xlu0 %2308, %v126
    %v2310 = vpop.permute.xlu0 %2309
    %2312 = vset.pattern.permute.xlu0 3
    %2313 = vperm.xlu0 %2312, %v127
    %v2314 = vpop.permute.xlu0 %2313
    %2316 = vset.pattern.permute.xlu0 3
    %2317 = vperm.xlu0 %2316, %v128
    %v2318 = vpop.permute.xlu0 %2317
    %2320 = vset.pattern.permute.xlu0 3
    %2321 = vperm.xlu0 %2320, %v129
    %v2322 = vpop.permute.xlu0 %2321
    %2324 = vset.pattern.permute.xlu0 3
    %2325 = vperm.xlu0 %2324, %v130
    %v2326 = vpop.permute.xlu0 %2325
    %2328 = vset.pattern.permute.xlu0 3
    %2329 = vperm.xlu0 %2328, %v131
    %v2330 = vpop.permute.xlu0 %2329
    %2332 = vset.pattern.permute.xlu0 3
    %2333 = vperm.xlu0 %2332, %v132
    %v2334 = vpop.permute.xlu0 %2333
    %2336 = vset.pattern.permute.xlu0 3
    %2337 = vperm.xlu0 %2336, %v133
    %v2338 = vpop.permute.xlu0 %2337
    %2340 = vset.pattern.permute.xlu0 3
    %2341 = vperm.xlu0 %2340, %v134
    %v2342 = vpop.permute.xlu0 %2341
    %2344 = vset.pattern.permute.xlu0 3
    %2345 = vperm.xlu0 %2344, %v135
    %v2346 = vpop.permute.xlu0 %2345
    %2348 = vset.pattern.permute.xlu0 3
    %2349 = vperm.xlu0 %2348, %v136
    %v2350 = vpop.permute.xlu0 %2349
    %2352 = vset.pattern.permute.xlu0 3
    %2353 = vperm.xlu0 %2352, %v137
    %v2354 = vpop.permute.xlu0 %2353
    %2356 = vset.pattern.permute.xlu0 3
    %2357 = vperm.xlu0 %2356, %v138
    %v2358 = vpop.permute.xlu0 %2357
    %2360 = vset.pattern.permute.xlu0 3
    %2361 = vperm.xlu0 %2360, %v139
    %v2362 = vpop.permute.xlu0 %2361
    %2364 = vset.pattern.permute.xlu0 3
    %2365 = vperm.xlu0 %2364, %v140
    %v2366 = vpop.permute.xlu0 %2365
    %2368 = vset.pattern.permute.xlu0 3
    %2369 = vperm.xlu0 %2368, %v141
    %v2370 = vpop.permute.xlu0 %2369
    %2372 = vset.pattern.permute.xlu0 3
    %2373 = vperm.xlu0 %2372, %v142
    %v2374 = vpop.permute.xlu0 %2373
    %2376 = vset.pattern.permute.xlu0 3
    %2377 = vperm.xlu0 %2376, %v143
    %v2378 = vpop.permute.xlu0 %2377
    %2380 = vset.pattern.permute.xlu0 3
    %2381 = vperm.xlu0 %2380, %v144
    %v2382 = vpop.permute.xlu0 %2381
    %2384 = vset.pattern.permute.xlu0 3
    %2385 = vperm.xlu0 %2384, %v145
    %v2386 = vpop.permute.xlu0 %2385
    %2388 = vset.pattern.permute.xlu0 3
    %2389 = vperm.xlu0 %2388, %v146
    %v2390 = vpop.permute.xlu0 %2389
    %2392 = vset.pattern.permute.xlu0 3
    %2393 = vperm.xlu0 %2392, %v147
    %v2394 = vpop.permute.xlu0 %2393
    %2396 = vset.pattern.permute.xlu0 3
    %2397 = vperm.xlu0 %2396, %v148
    %v2398 = vpop.permute.xlu0 %2397
    %2400 = vset.pattern.permute.xlu0 3
    %2401 = vperm.xlu0 %2400, %v149
    %v2402 = vpop.permute.xlu0 %2401
    %2404 = vset.pattern.permute.xlu0 3
    %2405 = vperm.xlu0 %2404, %v150
    %v2406 = vpop.permute.xlu0 %2405
    %v2408 = vlaneseq
    %v2409 = vshrl.u32 %v2408, 7
    %v2410 = vsub.s32 3, %v2409
    %v2411 = vrot.slane %v151, %v2410
    %v2412 = vmul.f32 %v2002, %v2411
    %v2413 = vmul.f32 %v2006, %v2411
    %v2414 = vmul.f32 %v2010, %v2411
    %v2415 = vmul.f32 %v2014, %v2411
    %v2416 = vmul.f32 %v2018, %v2411
    %v2417 = vmul.f32 %v2022, %v2411
    %v2418 = vmul.f32 %v2026, %v2411
    %v2419 = vmul.f32 %v2030, %v2411
    %v2420 = vmul.f32 %v2034, %v2411
    %v2421 = vmul.f32 %v2038, %v2411
    %v2422 = vmul.f32 %v2042, %v2411
    %v2423 = vmul.f32 %v2046, %v2411
    %v2424 = vmul.f32 %v2050, %v2411
    %v2425 = vmul.f32 %v2054, %v2411
    %v2426 = vmul.f32 %v2058, %v2411
    %v2427 = vmul.f32 %v2062, %v2411
    %v2428 = vmul.f32 %v2066, %v2411
    %v2429 = vmul.f32 %v2070, %v2411
    %v2430 = vmul.f32 %v2074, %v2411
    %v2431 = vmul.f32 %v2078, %v2411
    %v2432 = vmul.f32 %v2082, %v2411
    %v2433 = vmul.f32 %v2086, %v2411
    %v2434 = vmul.f32 %v2090, %v2411
    %v2435 = vmul.f32 %v2094, %v2411
    %v2436 = vmul.f32 %v2098, %v2411
    %v2437 = vmul.f32 %v2102, %v2411
    %v2438 = vmul.f32 %v2106, %v2411
    %v2439 = vmul.f32 %v2110, %v2411
    %v2440 = vmul.f32 %v2114, %v2411
    %v2441 = vmul.f32 %v2118, %v2411
    %v2442 = vmul.f32 %v2122, %v2411
    %v2443 = vmul.f32 %v2126, %v2411
    %v2444 = vmul.f32 %v2130, %v2411
    %v2445 = vmul.f32 %v2134, %v2411
    %v2446 = vmul.f32 %v2138, %v2411
    %v2447 = vmul.f32 %v2142, %v2411
    %v2448 = vmul.f32 %v2146, %v2411
    %v2449 = vmul.f32 %v2150, %v2411
    %v2450 = vmul.f32 %v2154, %v2411
    %v2451 = vmul.f32 %v2158, %v2411
    %v2452 = vmul.f32 %v2162, %v2411
    %v2453 = vmul.f32 %v2166, %v2411
    %v2454 = vmul.f32 %v2170, %v2411
    %v2455 = vmul.f32 %v2174, %v2411
    %v2456 = vmul.f32 %v2178, %v2411
    %v2457 = vmul.f32 %v2182, %v2411
    %v2458 = vmul.f32 %v2186, %v2411
    %v2459 = vmul.f32 %v2190, %v2411
    %v2460 = vmul.f32 %v2194, %v2411
    %v2461 = vmul.f32 %v2198, %v2411
    %v2462 = vmul.f32 %v2202, %v2411
    %v2463 = vmul.f32 %v2206, %v2411
    %v2464 = vmul.f32 %v2210, %v2411
    %v2465 = vmul.f32 %v2214, %v2411
    %v2466 = vmul.f32 %v2218, %v2411
    %v2467 = vmul.f32 %v2222, %v2411
    %v2468 = vmul.f32 %v2226, %v2411
    %v2469 = vmul.f32 %v2230, %v2411
    %v2470 = vmul.f32 %v2234, %v2411
    %v2471 = vmul.f32 %v2238, %v2411
    %v2472 = vmul.f32 %v2242, %v2411
    %v2473 = vmul.f32 %v2246, %v2411
    %v2474 = vmul.f32 %v2250, %v2411
    %v2475 = vmul.f32 %v2254, %v2411
    %v2476 = vmul.f32 %v2258, %v2411
    %v2477 = vmul.f32 %v2262, %v2411
    %v2478 = vmul.f32 %v2266, %v2411
    %v2479 = vmul.f32 %v2270, %v2411
    %v2480 = vmul.f32 %v2274, %v2411
    %v2481 = vmul.f32 %v2278, %v2411
    %v2482 = vmul.f32 %v2282, %v2411
    %v2483 = vmul.f32 %v2286, %v2411
    %v2484 = vmul.f32 %v2290, %v2411
    %v2485 = vmul.f32 %v2294, %v2411
    %v2486 = vmul.f32 %v2298, %v2411
    %v2487 = vmul.f32 %v2302, %v2411
    %v2488 = vmul.f32 %v2306, %v2411
    %v2489 = vmul.f32 %v2310, %v2411
    %v2490 = vmul.f32 %v2314, %v2411
    %v2491 = vmul.f32 %v2318, %v2411
    %v2492 = vmul.f32 %v2322, %v2411
    %v2493 = vmul.f32 %v2326, %v2411
    %v2494 = vmul.f32 %v2330, %v2411
    %v2495 = vmul.f32 %v2334, %v2411
    %v2496 = vmul.f32 %v2338, %v2411
    %v2497 = vmul.f32 %v2342, %v2411
    %v2498 = vmul.f32 %v2346, %v2411
    %v2499 = vmul.f32 %v2350, %v2411
    %v2500 = vmul.f32 %v2354, %v2411
    %v2501 = vmul.f32 %v2358, %v2411
    %v2502 = vmul.f32 %v2362, %v2411
    %v2503 = vmul.f32 %v2366, %v2411
    %v2504 = vmul.f32 %v2370, %v2411
    %v2505 = vmul.f32 %v2374, %v2411
    %v2506 = vmul.f32 %v2378, %v2411
    %v2507 = vmul.f32 %v2382, %v2411
    %v2508 = vmul.f32 %v2386, %v2411
    %v2509 = vmul.f32 %v2390, %v2411
    %v2510 = vmul.f32 %v2394, %v2411
    %v2511 = vmul.f32 %v2398, %v2411
    %v2512 = vmul.f32 %v2402, %v2411
    %v2513 = vmul.f32 %v2406, %v2411
    %v2514 = vadd.f32 %v1898, %v2412
    %v2515 = vadd.f32 %v1899, %v2413
    %v2516 = vadd.f32 %v1900, %v2414
    %v2517 = vadd.f32 %v1901, %v2415
    %v2518 = vadd.f32 %v1902, %v2416
    %v2519 = vadd.f32 %v1903, %v2417
    %v2520 = vadd.f32 %v1904, %v2418
    %v2521 = vadd.f32 %v1905, %v2419
    %v2522 = vadd.f32 %v1906, %v2420
    %v2523 = vadd.f32 %v1907, %v2421
    %v2524 = vadd.f32 %v1908, %v2422
    %v2525 = vadd.f32 %v1909, %v2423
    %v2526 = vadd.f32 %v1910, %v2424
    %v2527 = vadd.f32 %v1911, %v2425
    %v2528 = vadd.f32 %v1912, %v2426
    %v2529 = vadd.f32 %v1913, %v2427
    %v2530 = vadd.f32 %v1914, %v2428
    %v2531 = vadd.f32 %v1915, %v2429
    %v2532 = vadd.f32 %v1916, %v2430
    %v2533 = vadd.f32 %v1917, %v2431
    %v2534 = vadd.f32 %v1918, %v2432
    %v2535 = vadd.f32 %v1919, %v2433
    %v2536 = vadd.f32 %v1920, %v2434
    %v2537 = vadd.f32 %v1921, %v2435
    %v2538 = vadd.f32 %v1922, %v2436
    %v2539 = vadd.f32 %v1923, %v2437
    %v2540 = vadd.f32 %v1924, %v2438
    %v2541 = vadd.f32 %v1925, %v2439
    %v2542 = vadd.f32 %v1926, %v2440
    %v2543 = vadd.f32 %v1927, %v2441
    %v2544 = vadd.f32 %v1928, %v2442
    %v2545 = vadd.f32 %v1929, %v2443
    %v2546 = vadd.f32 %v1930, %v2444
    %v2547 = vadd.f32 %v1931, %v2445
    %v2548 = vadd.f32 %v1932, %v2446
    %v2549 = vadd.f32 %v1933, %v2447
    %v2550 = vadd.f32 %v1934, %v2448
    %v2551 = vadd.f32 %v1935, %v2449
    %v2552 = vadd.f32 %v1936, %v2450
    %v2553 = vadd.f32 %v1937, %v2451
    %v2554 = vadd.f32 %v1938, %v2452
    %v2555 = vadd.f32 %v1939, %v2453
    %v2556 = vadd.f32 %v1940, %v2454
    %v2557 = vadd.f32 %v1941, %v2455
    %v2558 = vadd.f32 %v1942, %v2456
    %v2559 = vadd.f32 %v1943, %v2457
    %v2560 = vadd.f32 %v1944, %v2458
    %v2561 = vadd.f32 %v1945, %v2459
    %v2562 = vadd.f32 %v1946, %v2460
    %v2563 = vadd.f32 %v1947, %v2461
    %v2564 = vadd.f32 %v1948, %v2462
    %v2565 = vadd.f32 %v1949, %v2463
    %v2566 = vadd.f32 %v1950, %v2464
    %v2567 = vadd.f32 %v1951, %v2465
    %v2568 = vadd.f32 %v1952, %v2466
    %v2569 = vadd.f32 %v1953, %v2467
    %v2570 = vadd.f32 %v1954, %v2468
    %v2571 = vadd.f32 %v1955, %v2469
    %v2572 = vadd.f32 %v1956, %v2470
    %v2573 = vadd.f32 %v1957, %v2471
    %v2574 = vadd.f32 %v1958, %v2472
    %v2575 = vadd.f32 %v1959, %v2473
    %v2576 = vadd.f32 %v1960, %v2474
    %v2577 = vadd.f32 %v1961, %v2475
    %v2578 = vadd.f32 %v1962, %v2476
    %v2579 = vadd.f32 %v1963, %v2477
    %v2580 = vadd.f32 %v1964, %v2478
    %v2581 = vadd.f32 %v1965, %v2479
    %v2582 = vadd.f32 %v1966, %v2480
    %v2583 = vadd.f32 %v1967, %v2481
    %v2584 = vadd.f32 %v1968, %v2482
    %v2585 = vadd.f32 %v1969, %v2483
    %v2586 = vadd.f32 %v1970, %v2484
    %v2587 = vadd.f32 %v1971, %v2485
    %v2588 = vadd.f32 %v1972, %v2486
    %v2589 = vadd.f32 %v1973, %v2487
    %v2590 = vadd.f32 %v1974, %v2488
    %v2591 = vadd.f32 %v1975, %v2489
    %v2592 = vadd.f32 %v1976, %v2490
    %v2593 = vadd.f32 %v1977, %v2491
    %v2594 = vadd.f32 %v1978, %v2492
    %v2595 = vadd.f32 %v1979, %v2493
    %v2596 = vadd.f32 %v1980, %v2494
    %v2597 = vadd.f32 %v1981, %v2495
    %v2598 = vadd.f32 %v1982, %v2496
    %v2599 = vadd.f32 %v1983, %v2497
    %v2600 = vadd.f32 %v1984, %v2498
    %v2601 = vadd.f32 %v1985, %v2499
    %v2602 = vadd.f32 %v1986, %v2500
    %v2603 = vadd.f32 %v1987, %v2501
    %v2604 = vadd.f32 %v1988, %v2502
    %v2605 = vadd.f32 %v1989, %v2503
    %v2606 = vadd.f32 %v1990, %v2504
    %v2607 = vadd.f32 %v1991, %v2505
    %v2608 = vadd.f32 %v1992, %v2506
    %v2609 = vadd.f32 %v1993, %v2507
    %v2610 = vadd.f32 %v1994, %v2508
    %v2611 = vadd.f32 %v1995, %v2509
    %v2612 = vadd.f32 %v1996, %v2510
    %v2613 = vadd.f32 %v1997, %v2511
    %v2614 = vadd.f32 %v1998, %v2512
    %v2615 = vadd.f32 %v1999, %v2513
    %v2616 = vld [vmem:[%s2] sm:$0x1]
    %v2617 = vld [vmem:[%s3] sm:$0x1]
    %vm2618 = vcmask 261120
    %v2619 = vsel %vm2618, %v2514, 0.0
    %v2620 = vsel %vm2618, %v2565, 0.0
    %v2621 = vadd.f32 %v2619, %v2620
    %v2622 = vsel %vm2618, %v2515, 0.0
    %v2623 = vsel %vm2618, %v2566, 0.0
    %v2624 = vadd.f32 %v2622, %v2623
    %vm2625 = vcmask 253952
    %v2626 = vsel %vm2625, %v2516, 0.0
    %v2627 = vsel %vm2625, %v2567, 0.0
    %v2628 = vadd.f32 %v2626, %v2627
    %v2629 = vsel %vm2618, %v2517, 0.0
    %v2630 = vsel %vm2618, %v2568, 0.0
    %v2631 = vadd.f32 %v2629, %v2630
    %v2632 = vsel %vm2618, %v2518, 0.0
    %v2633 = vsel %vm2618, %v2569, 0.0
    %v2634 = vadd.f32 %v2632, %v2633
    %v2635 = vsel %vm2625, %v2519, 0.0
    %v2636 = vsel %vm2625, %v2570, 0.0
    %v2637 = vadd.f32 %v2635, %v2636
    %v2638 = vsel %vm2618, %v2520, 0.0
    %v2639 = vsel %vm2618, %v2571, 0.0
    %v2640 = vadd.f32 %v2638, %v2639
    %v2641 = vsel %vm2618, %v2521, 0.0
    %v2642 = vsel %vm2618, %v2572, 0.0
    %v2643 = vadd.f32 %v2641, %v2642
    %v2644 = vsel %vm2625, %v2522, 0.0
    %v2645 = vsel %vm2625, %v2573, 0.0
    %v2646 = vadd.f32 %v2644, %v2645
    %v2647 = vsel %vm2618, %v2523, 0.0
    %v2648 = vsel %vm2618, %v2574, 0.0
    %v2649 = vadd.f32 %v2647, %v2648
    %v2650 = vsel %vm2618, %v2524, 0.0
    %v2651 = vsel %vm2618, %v2575, 0.0
    %v2652 = vadd.f32 %v2650, %v2651
    %v2653 = vsel %vm2625, %v2525, 0.0
    %v2654 = vsel %vm2625, %v2576, 0.0
    %v2655 = vadd.f32 %v2653, %v2654
    %v2656 = vsel %vm2618, %v2526, 0.0
    %v2657 = vsel %vm2618, %v2577, 0.0
    %v2658 = vadd.f32 %v2656, %v2657
    %v2659 = vsel %vm2618, %v2527, 0.0
    %v2660 = vsel %vm2618, %v2578, 0.0
    %v2661 = vadd.f32 %v2659, %v2660
    %v2662 = vsel %vm2625, %v2528, 0.0
    %v2663 = vsel %vm2625, %v2579, 0.0
    %v2664 = vadd.f32 %v2662, %v2663
    %v2665 = vsel %vm2618, %v2529, 0.0
    %v2666 = vsel %vm2618, %v2580, 0.0
    %v2667 = vadd.f32 %v2665, %v2666
    %v2668 = vsel %vm2618, %v2530, 0.0
    %v2669 = vsel %vm2618, %v2581, 0.0
    %v2670 = vadd.f32 %v2668, %v2669
    %v2671 = vsel %vm2625, %v2531, 0.0
    %v2672 = vsel %vm2625, %v2582, 0.0
    %v2673 = vadd.f32 %v2671, %v2672
    %v2674 = vsel %vm2618, %v2532, 0.0
    %v2675 = vsel %vm2618, %v2583, 0.0
    %v2676 = vadd.f32 %v2674, %v2675
    %v2677 = vsel %vm2618, %v2533, 0.0
    %v2678 = vsel %vm2618, %v2584, 0.0
    %v2679 = vadd.f32 %v2677, %v2678
    %v2680 = vsel %vm2625, %v2534, 0.0
    %v2681 = vsel %vm2625, %v2585, 0.0
    %v2682 = vadd.f32 %v2680, %v2681
    %v2683 = vsel %vm2618, %v2535, 0.0
    %v2684 = vsel %vm2618, %v2586, 0.0
    %v2685 = vadd.f32 %v2683, %v2684
    %v2686 = vsel %vm2618, %v2536, 0.0
    %v2687 = vsel %vm2618, %v2587, 0.0
    %v2688 = vadd.f32 %v2686, %v2687
    %v2689 = vsel %vm2625, %v2537, 0.0
    %v2690 = vsel %vm2625, %v2588, 0.0
    %v2691 = vadd.f32 %v2689, %v2690
    %v2692 = vsel %vm2618, %v2538, 0.0
    %v2693 = vsel %vm2618, %v2589, 0.0
    %v2694 = vadd.f32 %v2692, %v2693
    %v2695 = vsel %vm2618, %v2539, 0.0
    %v2696 = vsel %vm2618, %v2590, 0.0
    %v2697 = vadd.f32 %v2695, %v2696
    %v2698 = vsel %vm2625, %v2540, 0.0
    %v2699 = vsel %vm2625, %v2591, 0.0
    %v2700 = vadd.f32 %v2698, %v2699
    %v2701 = vsel %vm2618, %v2541, 0.0
    %v2702 = vsel %vm2618, %v2592, 0.0
    %v2703 = vadd.f32 %v2701, %v2702
    %v2704 = vsel %vm2618, %v2542, 0.0
    %v2705 = vsel %vm2618, %v2593, 0.0
    %v2706 = vadd.f32 %v2704, %v2705
    %v2707 = vsel %vm2625, %v2543, 0.0
    %v2708 = vsel %vm2625, %v2594, 0.0
    %v2709 = vadd.f32 %v2707, %v2708
    %v2710 = vsel %vm2618, %v2544, 0.0
    %v2711 = vsel %vm2618, %v2595, 0.0
    %v2712 = vadd.f32 %v2710, %v2711
    %v2713 = vsel %vm2618, %v2545, 0.0
    %v2714 = vsel %vm2618, %v2596, 0.0
    %v2715 = vadd.f32 %v2713, %v2714
    %v2716 = vsel %vm2625, %v2546, 0.0
    %v2717 = vsel %vm2625, %v2597, 0.0
    %v2718 = vadd.f32 %v2716, %v2717
    %v2719 = vsel %vm2618, %v2547, 0.0
    %v2720 = vsel %vm2618, %v2598, 0.0
    %v2721 = vadd.f32 %v2719, %v2720
    %v2722 = vsel %vm2618, %v2548, 0.0
    %v2723 = vsel %vm2618, %v2599, 0.0
    %v2724 = vadd.f32 %v2722, %v2723
    %v2725 = vsel %vm2625, %v2549, 0.0
    %v2726 = vsel %vm2625, %v2600, 0.0
    %v2727 = vadd.f32 %v2725, %v2726
    %v2728 = vsel %vm2618, %v2550, 0.0
    %v2729 = vsel %vm2618, %v2601, 0.0
    %v2730 = vadd.f32 %v2728, %v2729
    %v2731 = vsel %vm2618, %v2551, 0.0
    %v2732 = vsel %vm2618, %v2602, 0.0
    %v2733 = vadd.f32 %v2731, %v2732
    %v2734 = vsel %vm2625, %v2552, 0.0
    %v2735 = vsel %vm2625, %v2603, 0.0
    %v2736 = vadd.f32 %v2734, %v2735
    %v2737 = vsel %vm2618, %v2553, 0.0
    %v2738 = vsel %vm2618, %v2604, 0.0
    %v2739 = vadd.f32 %v2737, %v2738
    %v2740 = vsel %vm2618, %v2554, 0.0
    %v2741 = vsel %vm2618, %v2605, 0.0
    %v2742 = vadd.f32 %v2740, %v2741
    %v2743 = vsel %vm2625, %v2555, 0.0
    %v2744 = vsel %vm2625, %v2606, 0.0
    %v2745 = vadd.f32 %v2743, %v2744
    %v2746 = vsel %vm2618, %v2556, 0.0
    %v2747 = vsel %vm2618, %v2607, 0.0
    %v2748 = vadd.f32 %v2746, %v2747
    %v2749 = vsel %vm2618, %v2557, 0.0
    %v2750 = vsel %vm2618, %v2608, 0.0
    %v2751 = vadd.f32 %v2749, %v2750
    %v2752 = vsel %vm2625, %v2558, 0.0
    %v2753 = vsel %vm2625, %v2609, 0.0
    %v2754 = vadd.f32 %v2752, %v2753
    %v2755 = vsel %vm2618, %v2559, 0.0
    %v2756 = vsel %vm2618, %v2610, 0.0
    %v2757 = vadd.f32 %v2755, %v2756
    %v2758 = vsel %vm2618, %v2560, 0.0
    %v2759 = vsel %vm2618, %v2611, 0.0
    %v2760 = vadd.f32 %v2758, %v2759
    %v2761 = vsel %vm2625, %v2561, 0.0
    %v2762 = vsel %vm2625, %v2612, 0.0
    %v2763 = vadd.f32 %v2761, %v2762
    %v2764 = vsel %vm2618, %v2562, 0.0
    %v2765 = vsel %vm2618, %v2613, 0.0
    %v2766 = vadd.f32 %v2764, %v2765
    %v2767 = vsel %vm2618, %v2563, 0.0
    %v2768 = vsel %vm2618, %v2614, 0.0
    %v2769 = vadd.f32 %v2767, %v2768
    %v2770 = vsel %vm2625, %v2564, 0.0
    %v2771 = vsel %vm2625, %v2615, 0.0
    %v2772 = vadd.f32 %v2770, %v2771
    %v2773 = vsel %vm2618, %v2621, 0.0
    %v2774 = vsel %vm2618, %v2631, 0.0
    %v2775 = vadd.f32 %v2773, %v2774
    %v2776 = vsel %vm2618, %v2640, 0.0
    %v2777 = vadd.f32 %v2775, %v2776
    %v2778 = vsel %vm2618, %v2649, 0.0
    %v2779 = vadd.f32 %v2777, %v2778
    %v2780 = vsel %vm2618, %v2658, 0.0
    %v2781 = vadd.f32 %v2779, %v2780
    %v2782 = vsel %vm2618, %v2667, 0.0
    %v2783 = vadd.f32 %v2781, %v2782
    %v2784 = vsel %vm2618, %v2676, 0.0
    %v2785 = vadd.f32 %v2783, %v2784
    %v2786 = vsel %vm2618, %v2685, 0.0
    %v2787 = vadd.f32 %v2785, %v2786
    %v2788 = vsel %vm2618, %v2694, 0.0
    %v2789 = vadd.f32 %v2787, %v2788
    %v2790 = vsel %vm2618, %v2703, 0.0
    %v2791 = vadd.f32 %v2789, %v2790
    %v2792 = vsel %vm2618, %v2712, 0.0
    %v2793 = vadd.f32 %v2791, %v2792
    %v2794 = vsel %vm2618, %v2721, 0.0
    %v2795 = vadd.f32 %v2793, %v2794
    %v2796 = vsel %vm2618, %v2730, 0.0
    %v2797 = vadd.f32 %v2795, %v2796
    %v2798 = vsel %vm2618, %v2739, 0.0
    %v2799 = vadd.f32 %v2797, %v2798
    %v2800 = vsel %vm2618, %v2748, 0.0
    %v2801 = vadd.f32 %v2799, %v2800
    %v2802 = vsel %vm2618, %v2757, 0.0
    %v2803 = vadd.f32 %v2801, %v2802
    %v2804 = vsel %vm2618, %v2766, 0.0
    %v2805 = vadd.f32 %v2803, %v2804
    %v2806 = vsel %vm2618, %v2624, 0.0
    %v2807 = vsel %vm2618, %v2634, 0.0
    %v2808 = vadd.f32 %v2806, %v2807
    %v2809 = vsel %vm2618, %v2643, 0.0
    %v2810 = vadd.f32 %v2808, %v2809
    %v2811 = vsel %vm2618, %v2652, 0.0
    %v2812 = vadd.f32 %v2810, %v2811
    %v2813 = vsel %vm2618, %v2661, 0.0
    %v2814 = vadd.f32 %v2812, %v2813
    %v2815 = vsel %vm2618, %v2670, 0.0
    %v2816 = vadd.f32 %v2814, %v2815
    %v2817 = vsel %vm2618, %v2679, 0.0
    %v2818 = vadd.f32 %v2816, %v2817
    %v2819 = vsel %vm2618, %v2688, 0.0
    %v2820 = vadd.f32 %v2818, %v2819
    %v2821 = vsel %vm2618, %v2697, 0.0
    %v2822 = vadd.f32 %v2820, %v2821
    %v2823 = vsel %vm2618, %v2706, 0.0
    %v2824 = vadd.f32 %v2822, %v2823
    %v2825 = vsel %vm2618, %v2715, 0.0
    %v2826 = vadd.f32 %v2824, %v2825
    %v2827 = vsel %vm2618, %v2724, 0.0
    %v2828 = vadd.f32 %v2826, %v2827
    %v2829 = vsel %vm2618, %v2733, 0.0
    %v2830 = vadd.f32 %v2828, %v2829
    %v2831 = vsel %vm2618, %v2742, 0.0
    %v2832 = vadd.f32 %v2830, %v2831
    %v2833 = vsel %vm2618, %v2751, 0.0
    %v2834 = vadd.f32 %v2832, %v2833
    %v2835 = vsel %vm2618, %v2760, 0.0
    %v2836 = vadd.f32 %v2834, %v2835
    %v2837 = vsel %vm2618, %v2769, 0.0
    %v2838 = vadd.f32 %v2836, %v2837
    %v2839 = vsel %vm2625, %v2628, 0.0
    %v2840 = vsel %vm2625, %v2637, 0.0
    %v2841 = vadd.f32 %v2839, %v2840
    %v2842 = vsel %vm2625, %v2646, 0.0
    %v2843 = vadd.f32 %v2841, %v2842
    %v2844 = vsel %vm2625, %v2655, 0.0
    %v2845 = vadd.f32 %v2843, %v2844
    %v2846 = vsel %vm2625, %v2664, 0.0
    %v2847 = vadd.f32 %v2845, %v2846
    %v2848 = vsel %vm2625, %v2673, 0.0
    %v2849 = vadd.f32 %v2847, %v2848
    %v2850 = vsel %vm2625, %v2682, 0.0
    %v2851 = vadd.f32 %v2849, %v2850
    %v2852 = vsel %vm2625, %v2691, 0.0
    %v2853 = vadd.f32 %v2851, %v2852
    %v2854 = vsel %vm2625, %v2700, 0.0
    %v2855 = vadd.f32 %v2853, %v2854
    %v2856 = vsel %vm2625, %v2709, 0.0
    %v2857 = vadd.f32 %v2855, %v2856
    %v2858 = vsel %vm2625, %v2718, 0.0
    %v2859 = vadd.f32 %v2857, %v2858
    %v2860 = vsel %vm2625, %v2727, 0.0
    %v2861 = vadd.f32 %v2859, %v2860
    %v2862 = vsel %vm2625, %v2736, 0.0
    %v2863 = vadd.f32 %v2861, %v2862
    %v2864 = vsel %vm2625, %v2745, 0.0
    %v2865 = vadd.f32 %v2863, %v2864
    %v2866 = vsel %vm2625, %v2754, 0.0
    %v2867 = vadd.f32 %v2865, %v2866
    %v2868 = vsel %vm2625, %v2763, 0.0
    %v2869 = vadd.f32 %v2867, %v2868
    %v2870 = vsel %vm2625, %v2772, 0.0
    %v2871 = vadd.f32 %v2869, %v2870
    %v2872 = vsel %vm2618, %v2805, 0.0
    %v2873 = vsel %vm2618, %v2838, 0.0
    %v2874 = vadd.f32 %v2872, %v2873
    %v2875 = vsel %vm2625, %v2871, 0.0
    %v2876 = vadd.f32 %v2874, %v2875
    %v2877 = vrot.slane %v2876, 4
    %v2878 = vadd.f32 %v2876, %v2877
    %v2879 = vrot.slane %v2878, 2
    %v2880 = vadd.f32 %v2878, %v2879
    %v2881 = vrot.slane %v2880, 1
    %v2882 = vadd.f32 %v2880, %v2881
    %v2883 = vmul.f32 %v2514, %v2514
    %v2884 = vmul.f32 %v2515, %v2515
    %v2885 = vmul.f32 %v2516, %v2516
    %v2886 = vmul.f32 %v2517, %v2517
    %v2887 = vmul.f32 %v2518, %v2518
    %v2888 = vmul.f32 %v2519, %v2519
    %v2889 = vmul.f32 %v2520, %v2520
    %v2890 = vmul.f32 %v2521, %v2521
    %v2891 = vmul.f32 %v2522, %v2522
    %v2892 = vmul.f32 %v2523, %v2523
    %v2893 = vmul.f32 %v2524, %v2524
    %v2894 = vmul.f32 %v2525, %v2525
    %v2895 = vmul.f32 %v2526, %v2526
    %v2896 = vmul.f32 %v2527, %v2527
    %v2897 = vmul.f32 %v2528, %v2528
    %v2898 = vmul.f32 %v2529, %v2529
    %v2899 = vmul.f32 %v2530, %v2530
    %v2900 = vmul.f32 %v2531, %v2531
    %v2901 = vmul.f32 %v2532, %v2532
    %v2902 = vmul.f32 %v2533, %v2533
    %v2903 = vmul.f32 %v2534, %v2534
    %v2904 = vmul.f32 %v2535, %v2535
    %v2905 = vmul.f32 %v2536, %v2536
    %v2906 = vmul.f32 %v2537, %v2537
    %v2907 = vmul.f32 %v2538, %v2538
    %v2908 = vmul.f32 %v2539, %v2539
    %v2909 = vmul.f32 %v2540, %v2540
    %v2910 = vmul.f32 %v2541, %v2541
    %v2911 = vmul.f32 %v2542, %v2542
    %v2912 = vmul.f32 %v2543, %v2543
    %v2913 = vmul.f32 %v2544, %v2544
    %v2914 = vmul.f32 %v2545, %v2545
    %v2915 = vmul.f32 %v2546, %v2546
    %v2916 = vmul.f32 %v2547, %v2547
    %v2917 = vmul.f32 %v2548, %v2548
    %v2918 = vmul.f32 %v2549, %v2549
    %v2919 = vmul.f32 %v2550, %v2550
    %v2920 = vmul.f32 %v2551, %v2551
    %v2921 = vmul.f32 %v2552, %v2552
    %v2922 = vmul.f32 %v2553, %v2553
    %v2923 = vmul.f32 %v2554, %v2554
    %v2924 = vmul.f32 %v2555, %v2555
    %v2925 = vmul.f32 %v2556, %v2556
    %v2926 = vmul.f32 %v2557, %v2557
    %v2927 = vmul.f32 %v2558, %v2558
    %v2928 = vmul.f32 %v2559, %v2559
    %v2929 = vmul.f32 %v2560, %v2560
    %v2930 = vmul.f32 %v2561, %v2561
    %v2931 = vmul.f32 %v2562, %v2562
    %v2932 = vmul.f32 %v2563, %v2563
    %v2933 = vmul.f32 %v2564, %v2564
    %v2934 = vmul.f32 %v2565, %v2565
    %v2935 = vmul.f32 %v2566, %v2566
    %v2936 = vmul.f32 %v2567, %v2567
    %v2937 = vmul.f32 %v2568, %v2568
    %v2938 = vmul.f32 %v2569, %v2569
    %v2939 = vmul.f32 %v2570, %v2570
    %v2940 = vmul.f32 %v2571, %v2571
    %v2941 = vmul.f32 %v2572, %v2572
    %v2942 = vmul.f32 %v2573, %v2573
    %v2943 = vmul.f32 %v2574, %v2574
    %v2944 = vmul.f32 %v2575, %v2575
    %v2945 = vmul.f32 %v2576, %v2576
    %v2946 = vmul.f32 %v2577, %v2577
    %v2947 = vmul.f32 %v2578, %v2578
    %v2948 = vmul.f32 %v2579, %v2579
    %v2949 = vmul.f32 %v2580, %v2580
    %v2950 = vmul.f32 %v2581, %v2581
    %v2951 = vmul.f32 %v2582, %v2582
    %v2952 = vmul.f32 %v2583, %v2583
    %v2953 = vmul.f32 %v2584, %v2584
    %v2954 = vmul.f32 %v2585, %v2585
    %v2955 = vmul.f32 %v2586, %v2586
    %v2956 = vmul.f32 %v2587, %v2587
    %v2957 = vmul.f32 %v2588, %v2588
    %v2958 = vmul.f32 %v2589, %v2589
    %v2959 = vmul.f32 %v2590, %v2590
    %v2960 = vmul.f32 %v2591, %v2591
    %v2961 = vmul.f32 %v2592, %v2592
    %v2962 = vmul.f32 %v2593, %v2593
    %v2963 = vmul.f32 %v2594, %v2594
    %v2964 = vmul.f32 %v2595, %v2595
    %v2965 = vmul.f32 %v2596, %v2596
    %v2966 = vmul.f32 %v2597, %v2597
    %v2967 = vmul.f32 %v2598, %v2598
    %v2968 = vmul.f32 %v2599, %v2599
    %v2969 = vmul.f32 %v2600, %v2600
    %v2970 = vmul.f32 %v2601, %v2601
    %v2971 = vmul.f32 %v2602, %v2602
    %v2972 = vmul.f32 %v2603, %v2603
    %v2973 = vmul.f32 %v2604, %v2604
    %v2974 = vmul.f32 %v2605, %v2605
    %v2975 = vmul.f32 %v2606, %v2606
    %v2976 = vmul.f32 %v2607, %v2607
    %v2977 = vmul.f32 %v2608, %v2608
    %v2978 = vmul.f32 %v2609, %v2609
    %v2979 = vmul.f32 %v2610, %v2610
    %v2980 = vmul.f32 %v2611, %v2611
    %v2981 = vmul.f32 %v2612, %v2612
    %v2982 = vmul.f32 %v2613, %v2613
    %v2983 = vmul.f32 %v2614, %v2614
    %v2984 = vmul.f32 %v2615, %v2615
    %v2985 = vsel %vm2618, %v2883, 0.0
    %v2986 = vsel %vm2618, %v2934, 0.0
    %v2987 = vadd.f32 %v2985, %v2986
    %v2988 = vsel %vm2618, %v2884, 0.0
    %v2989 = vsel %vm2618, %v2935, 0.0
    %v2990 = vadd.f32 %v2988, %v2989
    %v2991 = vsel %vm2625, %v2885, 0.0
    %v2992 = vsel %vm2625, %v2936, 0.0
    %v2993 = vadd.f32 %v2991, %v2992
    %v2994 = vsel %vm2618, %v2886, 0.0
    %v2995 = vsel %vm2618, %v2937, 0.0
    %v2996 = vadd.f32 %v2994, %v2995
    %v2997 = vsel %vm2618, %v2887, 0.0
    %v2998 = vsel %vm2618, %v2938, 0.0
    %v2999 = vadd.f32 %v2997, %v2998
    %v3000 = vsel %vm2625, %v2888, 0.0
    %v3001 = vsel %vm2625, %v2939, 0.0
    %v3002 = vadd.f32 %v3000, %v3001
    %v3003 = vsel %vm2618, %v2889, 0.0
    %v3004 = vsel %vm2618, %v2940, 0.0
    %v3005 = vadd.f32 %v3003, %v3004
    %v3006 = vsel %vm2618, %v2890, 0.0
    %v3007 = vsel %vm2618, %v2941, 0.0
    %v3008 = vadd.f32 %v3006, %v3007
    %v3009 = vsel %vm2625, %v2891, 0.0
    %v3010 = vsel %vm2625, %v2942, 0.0
    %v3011 = vadd.f32 %v3009, %v3010
    %v3012 = vsel %vm2618, %v2892, 0.0
    %v3013 = vsel %vm2618, %v2943, 0.0
    %v3014 = vadd.f32 %v3012, %v3013
    %v3015 = vsel %vm2618, %v2893, 0.0
    %v3016 = vsel %vm2618, %v2944, 0.0
    %v3017 = vadd.f32 %v3015, %v3016
    %v3018 = vsel %vm2625, %v2894, 0.0
    %v3019 = vsel %vm2625, %v2945, 0.0
    %v3020 = vadd.f32 %v3018, %v3019
    %v3021 = vsel %vm2618, %v2895, 0.0
    %v3022 = vsel %vm2618, %v2946, 0.0
    %v3023 = vadd.f32 %v3021, %v3022
    %v3024 = vsel %vm2618, %v2896, 0.0
    %v3025 = vsel %vm2618, %v2947, 0.0
    %v3026 = vadd.f32 %v3024, %v3025
    %v3027 = vsel %vm2625, %v2897, 0.0
    %v3028 = vsel %vm2625, %v2948, 0.0
    %v3029 = vadd.f32 %v3027, %v3028
    %v3030 = vsel %vm2618, %v2898, 0.0
    %v3031 = vsel %vm2618, %v2949, 0.0
    %v3032 = vadd.f32 %v3030, %v3031
    %v3033 = vsel %vm2618, %v2899, 0.0
    %v3034 = vsel %vm2618, %v2950, 0.0
    %v3035 = vadd.f32 %v3033, %v3034
    %v3036 = vsel %vm2625, %v2900, 0.0
    %v3037 = vsel %vm2625, %v2951, 0.0
    %v3038 = vadd.f32 %v3036, %v3037
    %v3039 = vsel %vm2618, %v2901, 0.0
    %v3040 = vsel %vm2618, %v2952, 0.0
    %v3041 = vadd.f32 %v3039, %v3040
    %v3042 = vsel %vm2618, %v2902, 0.0
    %v3043 = vsel %vm2618, %v2953, 0.0
    %v3044 = vadd.f32 %v3042, %v3043
    %v3045 = vsel %vm2625, %v2903, 0.0
    %v3046 = vsel %vm2625, %v2954, 0.0
    %v3047 = vadd.f32 %v3045, %v3046
    %v3048 = vsel %vm2618, %v2904, 0.0
    %v3049 = vsel %vm2618, %v2955, 0.0
    %v3050 = vadd.f32 %v3048, %v3049
    %v3051 = vsel %vm2618, %v2905, 0.0
    %v3052 = vsel %vm2618, %v2956, 0.0
    %v3053 = vadd.f32 %v3051, %v3052
    %v3054 = vsel %vm2625, %v2906, 0.0
    %v3055 = vsel %vm2625, %v2957, 0.0
    %v3056 = vadd.f32 %v3054, %v3055
    %v3057 = vsel %vm2618, %v2907, 0.0
    %v3058 = vsel %vm2618, %v2958, 0.0
    %v3059 = vadd.f32 %v3057, %v3058
    %v3060 = vsel %vm2618, %v2908, 0.0
    %v3061 = vsel %vm2618, %v2959, 0.0
    %v3062 = vadd.f32 %v3060, %v3061
    %v3063 = vsel %vm2625, %v2909, 0.0
    %v3064 = vsel %vm2625, %v2960, 0.0
    %v3065 = vadd.f32 %v3063, %v3064
    %v3066 = vsel %vm2618, %v2910, 0.0
    %v3067 = vsel %vm2618, %v2961, 0.0
    %v3068 = vadd.f32 %v3066, %v3067
    %v3069 = vsel %vm2618, %v2911, 0.0
    %v3070 = vsel %vm2618, %v2962, 0.0
    %v3071 = vadd.f32 %v3069, %v3070
    %v3072 = vsel %vm2625, %v2912, 0.0
    %v3073 = vsel %vm2625, %v2963, 0.0
    %v3074 = vadd.f32 %v3072, %v3073
    %v3075 = vsel %vm2618, %v2913, 0.0
    %v3076 = vsel %vm2618, %v2964, 0.0
    %v3077 = vadd.f32 %v3075, %v3076
    %v3078 = vsel %vm2618, %v2914, 0.0
    %v3079 = vsel %vm2618, %v2965, 0.0
    %v3080 = vadd.f32 %v3078, %v3079
    %v3081 = vsel %vm2625, %v2915, 0.0
    %v3082 = vsel %vm2625, %v2966, 0.0
    %v3083 = vadd.f32 %v3081, %v3082
    %v3084 = vsel %vm2618, %v2916, 0.0
    %v3085 = vsel %vm2618, %v2967, 0.0
    %v3086 = vadd.f32 %v3084, %v3085
    %v3087 = vsel %vm2618, %v2917, 0.0
    %v3088 = vsel %vm2618, %v2968, 0.0
    %v3089 = vadd.f32 %v3087, %v3088
    %v3090 = vsel %vm2625, %v2918, 0.0
    %v3091 = vsel %vm2625, %v2969, 0.0
    %v3092 = vadd.f32 %v3090, %v3091
    %v3093 = vsel %vm2618, %v2919, 0.0
    %v3094 = vsel %vm2618, %v2970, 0.0
    %v3095 = vadd.f32 %v3093, %v3094
    %v3096 = vsel %vm2618, %v2920, 0.0
    %v3097 = vsel %vm2618, %v2971, 0.0
    %v3098 = vadd.f32 %v3096, %v3097
    %v3099 = vsel %vm2625, %v2921, 0.0
    %v3100 = vsel %vm2625, %v2972, 0.0
    %v3101 = vadd.f32 %v3099, %v3100
    %v3102 = vsel %vm2618, %v2922, 0.0
    %v3103 = vsel %vm2618, %v2973, 0.0
    %v3104 = vadd.f32 %v3102, %v3103
    %v3105 = vsel %vm2618, %v2923, 0.0
    %v3106 = vsel %vm2618, %v2974, 0.0
    %v3107 = vadd.f32 %v3105, %v3106
    %v3108 = vsel %vm2625, %v2924, 0.0
    %v3109 = vsel %vm2625, %v2975, 0.0
    %v3110 = vadd.f32 %v3108, %v3109
    %v3111 = vsel %vm2618, %v2925, 0.0
    %v3112 = vsel %vm2618, %v2976, 0.0
    %v3113 = vadd.f32 %v3111, %v3112
    %v3114 = vsel %vm2618, %v2926, 0.0
    %v3115 = vsel %vm2618, %v2977, 0.0
    %v3116 = vadd.f32 %v3114, %v3115
    %v3117 = vsel %vm2625, %v2927, 0.0
    %v3118 = vsel %vm2625, %v2978, 0.0
    %v3119 = vadd.f32 %v3117, %v3118
    %v3120 = vsel %vm2618, %v2928, 0.0
    %v3121 = vsel %vm2618, %v2979, 0.0
    %v3122 = vadd.f32 %v3120, %v3121
    %v3123 = vsel %vm2618, %v2929, 0.0
    %v3124 = vsel %vm2618, %v2980, 0.0
    %v3125 = vadd.f32 %v3123, %v3124
    %v3126 = vsel %vm2625, %v2930, 0.0
    %v3127 = vsel %vm2625, %v2981, 0.0
    %v3128 = vadd.f32 %v3126, %v3127
    %v3129 = vsel %vm2618, %v2931, 0.0
    %v3130 = vsel %vm2618, %v2982, 0.0
    %v3131 = vadd.f32 %v3129, %v3130
    %v3132 = vsel %vm2618, %v2932, 0.0
    %v3133 = vsel %vm2618, %v2983, 0.0
    %v3134 = vadd.f32 %v3132, %v3133
    %v3135 = vsel %vm2625, %v2933, 0.0
    %v3136 = vsel %vm2625, %v2984, 0.0
    %v3137 = vadd.f32 %v3135, %v3136
    %v3138 = vsel %vm2618, %v2987, 0.0
    %v3139 = vsel %vm2618, %v2996, 0.0
    %v3140 = vadd.f32 %v3138, %v3139
    %v3141 = vsel %vm2618, %v3005, 0.0
    %v3142 = vadd.f32 %v3140, %v3141
    %v3143 = vsel %vm2618, %v3014, 0.0
    %v3144 = vadd.f32 %v3142, %v3143
    %v3145 = vsel %vm2618, %v3023, 0.0
    %v3146 = vadd.f32 %v3144, %v3145
    %v3147 = vsel %vm2618, %v3032, 0.0
    %v3148 = vadd.f32 %v3146, %v3147
    %v3149 = vsel %vm2618, %v3041, 0.0
    %v3150 = vadd.f32 %v3148, %v3149
    %v3151 = vsel %vm2618, %v3050, 0.0
    %v3152 = vadd.f32 %v3150, %v3151
    %v3153 = vsel %vm2618, %v3059, 0.0
    %v3154 = vadd.f32 %v3152, %v3153
    %v3155 = vsel %vm2618, %v3068, 0.0
    %v3156 = vadd.f32 %v3154, %v3155
    %v3157 = vsel %vm2618, %v3077, 0.0
    %v3158 = vadd.f32 %v3156, %v3157
    %v3159 = vsel %vm2618, %v3086, 0.0
    %v3160 = vadd.f32 %v3158, %v3159
    %v3161 = vsel %vm2618, %v3095, 0.0
    %v3162 = vadd.f32 %v3160, %v3161
    %v3163 = vsel %vm2618, %v3104, 0.0
    %v3164 = vadd.f32 %v3162, %v3163
    %v3165 = vsel %vm2618, %v3113, 0.0
    %v3166 = vadd.f32 %v3164, %v3165
    %v3167 = vsel %vm2618, %v3122, 0.0
    %v3168 = vadd.f32 %v3166, %v3167
    %v3169 = vsel %vm2618, %v3131, 0.0
    %v3170 = vadd.f32 %v3168, %v3169
    %v3171 = vsel %vm2618, %v2990, 0.0
    %v3172 = vsel %vm2618, %v2999, 0.0
    %v3173 = vadd.f32 %v3171, %v3172
    %v3174 = vsel %vm2618, %v3008, 0.0
    %v3175 = vadd.f32 %v3173, %v3174
    %v3176 = vsel %vm2618, %v3017, 0.0
    %v3177 = vadd.f32 %v3175, %v3176
    %v3178 = vsel %vm2618, %v3026, 0.0
    %v3179 = vadd.f32 %v3177, %v3178
    %v3180 = vsel %vm2618, %v3035, 0.0
    %v3181 = vadd.f32 %v3179, %v3180
    %v3182 = vsel %vm2618, %v3044, 0.0
    %v3183 = vadd.f32 %v3181, %v3182
    %v3184 = vsel %vm2618, %v3053, 0.0
    %v3185 = vadd.f32 %v3183, %v3184
    %v3186 = vsel %vm2618, %v3062, 0.0
    %v3187 = vadd.f32 %v3185, %v3186
    %v3188 = vsel %vm2618, %v3071, 0.0
    %v3189 = vadd.f32 %v3187, %v3188
    %v3190 = vsel %vm2618, %v3080, 0.0
    %v3191 = vadd.f32 %v3189, %v3190
    %v3192 = vsel %vm2618, %v3089, 0.0
    %v3193 = vadd.f32 %v3191, %v3192
    %v3194 = vsel %vm2618, %v3098, 0.0
    %v3195 = vadd.f32 %v3193, %v3194
    %v3196 = vsel %vm2618, %v3107, 0.0
    %v3197 = vadd.f32 %v3195, %v3196
    %v3198 = vsel %vm2618, %v3116, 0.0
    %v3199 = vadd.f32 %v3197, %v3198
    %v3200 = vsel %vm2618, %v3125, 0.0
    %v3201 = vadd.f32 %v3199, %v3200
    %v3202 = vsel %vm2618, %v3134, 0.0
    %v3203 = vadd.f32 %v3201, %v3202
    %v3204 = vsel %vm2625, %v2993, 0.0
    %v3205 = vsel %vm2625, %v3002, 0.0
    %v3206 = vadd.f32 %v3204, %v3205
    %v3207 = vsel %vm2625, %v3011, 0.0
    %v3208 = vadd.f32 %v3206, %v3207
    %v3209 = vsel %vm2625, %v3020, 0.0
    %v3210 = vadd.f32 %v3208, %v3209
    %v3211 = vsel %vm2625, %v3029, 0.0
    %v3212 = vadd.f32 %v3210, %v3211
    %v3213 = vsel %vm2625, %v3038, 0.0
    %v3214 = vadd.f32 %v3212, %v3213
    %v3215 = vsel %vm2625, %v3047, 0.0
    %v3216 = vadd.f32 %v3214, %v3215
    %v3217 = vsel %vm2625, %v3056, 0.0
    %v3218 = vadd.f32 %v3216, %v3217
    %v3219 = vsel %vm2625, %v3065, 0.0
    %v3220 = vadd.f32 %v3218, %v3219
    %v3221 = vsel %vm2625, %v3074, 0.0
    %v3222 = vadd.f32 %v3220, %v3221
    %v3223 = vsel %vm2625, %v3083, 0.0
    %v3224 = vadd.f32 %v3222, %v3223
    %v3225 = vsel %vm2625, %v3092, 0.0
    %v3226 = vadd.f32 %v3224, %v3225
    %v3227 = vsel %vm2625, %v3101, 0.0
    %v3228 = vadd.f32 %v3226, %v3227
    %v3229 = vsel %vm2625, %v3110, 0.0
    %v3230 = vadd.f32 %v3228, %v3229
    %v3231 = vsel %vm2625, %v3119, 0.0
    %v3232 = vadd.f32 %v3230, %v3231
    %v3233 = vsel %vm2625, %v3128, 0.0
    %v3234 = vadd.f32 %v3232, %v3233
    %v3235 = vsel %vm2625, %v3137, 0.0
    %v3236 = vadd.f32 %v3234, %v3235
    %v3237 = vsel %vm2618, %v3170, 0.0
    %v3238 = vsel %vm2618, %v3203, 0.0
    %v3239 = vadd.f32 %v3237, %v3238
    %v3240 = vsel %vm2625, %v3236, 0.0
    %v3241 = vadd.f32 %v3239, %v3240
    %v3242 = vrot.slane %v3241, 4
    %v3243 = vadd.f32 %v3241, %v3242
    %v3244 = vrot.slane %v3243, 2
    %v3245 = vadd.f32 %v3243, %v3244
    %v3246 = vrot.slane %v3245, 1
    %v3247 = vadd.f32 %v3245, %v3246
    %v3248 = vmul.f32 %v2882, 0.0017301039
    %v3249 = vmul.f32 %v3247, 0.0017301039
    %v3250 = vmul.f32 %v3248, %v3248
    %v3251 = vsub.f32 %v3249, %v3250
    %v3252 = vmax.f32 %v3251, 0.0
    %v3253 = vadd.f32 %v3252, 1e-05
    %v3254 = vrsqrt.pop %v3253
    %v3255 = vmul.f32 %v2616, %v3254
    %v3256 = vmul.f32 %v3248, %v3255
    %v3257 = vsub.f32 %v2617, %v3256
    %v3259 = vlaneseq
    %v3260 = vshrl.u32 %v3259, 7
    %v3261 = vsub.s32 0, %v3260
    %v3262 = vrot.slane %v3255, %v3261
    %v3264 = vmul.f32 %v2514, %v3262
    %v3265 = vmul.f32 %v2515, %v3262
    %v3266 = vmul.f32 %v2517, %v3262
    %v3267 = vmul.f32 %v2518, %v3262
    %v3268 = vmul.f32 %v2520, %v3262
    %v3269 = vmul.f32 %v2521, %v3262
    %v3270 = vmul.f32 %v2523, %v3262
    %v3271 = vmul.f32 %v2524, %v3262
    %v3272 = vmul.f32 %v2526, %v3262
    %v3273 = vmul.f32 %v2527, %v3262
    %v3274 = vmul.f32 %v2529, %v3262
    %v3275 = vmul.f32 %v2530, %v3262
    %v3276 = vmul.f32 %v2532, %v3262
    %v3277 = vmul.f32 %v2533, %v3262
    %v3278 = vmul.f32 %v2535, %v3262
    %v3279 = vmul.f32 %v2536, %v3262
    %v3280 = vmul.f32 %v2538, %v3262
    %v3281 = vmul.f32 %v2539, %v3262
    %v3282 = vmul.f32 %v2541, %v3262
    %v3283 = vmul.f32 %v2542, %v3262
    %v3284 = vmul.f32 %v2544, %v3262
    %v3285 = vmul.f32 %v2545, %v3262
    %v3286 = vmul.f32 %v2547, %v3262
    %v3287 = vmul.f32 %v2548, %v3262
    %v3288 = vmul.f32 %v2550, %v3262
    %v3289 = vmul.f32 %v2551, %v3262
    %v3290 = vmul.f32 %v2553, %v3262
    %v3291 = vmul.f32 %v2554, %v3262
    %v3292 = vmul.f32 %v2556, %v3262
    %v3293 = vmul.f32 %v2557, %v3262
    %v3294 = vmul.f32 %v2559, %v3262
    %v3295 = vmul.f32 %v2560, %v3262
    %v3296 = vmul.f32 %v2565, %v3262
    %v3297 = vmul.f32 %v2566, %v3262
    %v3298 = vmul.f32 %v2568, %v3262
    %v3299 = vmul.f32 %v2569, %v3262
    %v3300 = vmul.f32 %v2571, %v3262
    %v3301 = vmul.f32 %v2572, %v3262
    %v3302 = vmul.f32 %v2574, %v3262
    %v3303 = vmul.f32 %v2575, %v3262
    %v3304 = vmul.f32 %v2577, %v3262
    %v3305 = vmul.f32 %v2578, %v3262
    %v3306 = vmul.f32 %v2580, %v3262
    %v3307 = vmul.f32 %v2581, %v3262
    %v3308 = vmul.f32 %v2583, %v3262
    %v3309 = vmul.f32 %v2584, %v3262
    %v3310 = vmul.f32 %v2586, %v3262
    %v3311 = vmul.f32 %v2587, %v3262
    %v3312 = vmul.f32 %v2589, %v3262
    %v3313 = vmul.f32 %v2590, %v3262
    %v3314 = vmul.f32 %v2592, %v3262
    %v3315 = vmul.f32 %v2593, %v3262
    %v3316 = vmul.f32 %v2595, %v3262
    %v3317 = vmul.f32 %v2596, %v3262
    %v3318 = vmul.f32 %v2598, %v3262
    %v3319 = vmul.f32 %v2599, %v3262
    %v3320 = vmul.f32 %v2601, %v3262
    %v3321 = vmul.f32 %v2602, %v3262
    %v3322 = vmul.f32 %v2604, %v3262
    %v3323 = vmul.f32 %v2605, %v3262
    %v3324 = vmul.f32 %v2607, %v3262
    %v3325 = vmul.f32 %v2608, %v3262
    %v3326 = vmul.f32 %v2610, %v3262
    %v3327 = vmul.f32 %v2611, %v3262
    %v3329 = vlaneseq
    %v3330 = vshrl.u32 %v3329, 7
    %v3331 = vsub.s32 0, %v3330
    %v3332 = vrot.slane %v3257, %v3331
    %v3334 = vadd.f32 %v3264, %v3332
    %v3335 = vadd.f32 %v3265, %v3332
    %v3336 = vadd.f32 %v3266, %v3332
    %v3337 = vadd.f32 %v3267, %v3332
    %v3338 = vadd.f32 %v3268, %v3332
    %v3339 = vadd.f32 %v3269, %v3332
    %v3340 = vadd.f32 %v3270, %v3332
    %v3341 = vadd.f32 %v3271, %v3332
    %v3342 = vadd.f32 %v3272, %v3332
    %v3343 = vadd.f32 %v3273, %v3332
    %v3344 = vadd.f32 %v3274, %v3332
    %v3345 = vadd.f32 %v3275, %v3332
    %v3346 = vadd.f32 %v3276, %v3332
    %v3347 = vadd.f32 %v3277, %v3332
    %v3348 = vadd.f32 %v3278, %v3332
    %v3349 = vadd.f32 %v3279, %v3332
    %v3350 = vadd.f32 %v3280, %v3332
    %v3351 = vadd.f32 %v3281, %v3332
    %v3352 = vadd.f32 %v3282, %v3332
    %v3353 = vadd.f32 %v3283, %v3332
    %v3354 = vadd.f32 %v3284, %v3332
    %v3355 = vadd.f32 %v3285, %v3332
    %v3356 = vadd.f32 %v3286, %v3332
    %v3357 = vadd.f32 %v3287, %v3332
    %v3358 = vadd.f32 %v3288, %v3332
    %v3359 = vadd.f32 %v3289, %v3332
    %v3360 = vadd.f32 %v3290, %v3332
    %v3361 = vadd.f32 %v3291, %v3332
    %v3362 = vadd.f32 %v3292, %v3332
    %v3363 = vadd.f32 %v3293, %v3332
    %v3364 = vadd.f32 %v3294, %v3332
    %v3365 = vadd.f32 %v3295, %v3332
    %v3366 = vadd.f32 %v3296, %v3332
    %v3367 = vadd.f32 %v3297, %v3332
    %v3368 = vadd.f32 %v3298, %v3332
    %v3369 = vadd.f32 %v3299, %v3332
    %v3370 = vadd.f32 %v3300, %v3332
    %v3371 = vadd.f32 %v3301, %v3332
    %v3372 = vadd.f32 %v3302, %v3332
    %v3373 = vadd.f32 %v3303, %v3332
    %v3374 = vadd.f32 %v3304, %v3332
    %v3375 = vadd.f32 %v3305, %v3332
    %v3376 = vadd.f32 %v3306, %v3332
    %v3377 = vadd.f32 %v3307, %v3332
    %v3378 = vadd.f32 %v3308, %v3332
    %v3379 = vadd.f32 %v3309, %v3332
    %v3380 = vadd.f32 %v3310, %v3332
    %v3381 = vadd.f32 %v3311, %v3332
    %v3382 = vadd.f32 %v3312, %v3332
    %v3383 = vadd.f32 %v3313, %v3332
    %v3384 = vadd.f32 %v3314, %v3332
    %v3385 = vadd.f32 %v3315, %v3332
    %v3386 = vadd.f32 %v3316, %v3332
    %v3387 = vadd.f32 %v3317, %v3332
    %v3388 = vadd.f32 %v3318, %v3332
    %v3389 = vadd.f32 %v3319, %v3332
    %v3390 = vadd.f32 %v3320, %v3332
    %v3391 = vadd.f32 %v3321, %v3332
    %v3392 = vadd.f32 %v3322, %v3332
    %v3393 = vadd.f32 %v3323, %v3332
    %v3394 = vadd.f32 %v3324, %v3332
    %v3395 = vadd.f32 %v3325, %v3332
    %v3396 = vadd.f32 %v3326, %v3332
    %v3397 = vadd.f32 %v3327, %v3332
    %v3398 = vmax.f32 %v3334, 0.0
    %v3399 = vmax.f32 %v3335, 0.0
    %v3400 = vmax.f32 %v3336, 0.0
    %v3401 = vmax.f32 %v3337, 0.0
    %v3402 = vmax.f32 %v3338, 0.0
    %v3403 = vmax.f32 %v3339, 0.0
    %v3404 = vmax.f32 %v3340, 0.0
    %v3405 = vmax.f32 %v3341, 0.0
    %v3406 = vmax.f32 %v3342, 0.0
    %v3407 = vmax.f32 %v3343, 0.0
    %v3408 = vmax.f32 %v3344, 0.0
    %v3409 = vmax.f32 %v3345, 0.0
    %v3410 = vmax.f32 %v3346, 0.0
    %v3411 = vmax.f32 %v3347, 0.0
    %v3412 = vmax.f32 %v3348, 0.0
    %v3413 = vmax.f32 %v3349, 0.0
    %v3414 = vmax.f32 %v3350, 0.0
    %v3415 = vmax.f32 %v3351, 0.0
    %v3416 = vmax.f32 %v3352, 0.0
    %v3417 = vmax.f32 %v3353, 0.0
    %v3418 = vmax.f32 %v3354, 0.0
    %v3419 = vmax.f32 %v3355, 0.0
    %v3420 = vmax.f32 %v3356, 0.0
    %v3421 = vmax.f32 %v3357, 0.0
    %v3422 = vmax.f32 %v3358, 0.0
    %v3423 = vmax.f32 %v3359, 0.0
    %v3424 = vmax.f32 %v3360, 0.0
    %v3425 = vmax.f32 %v3361, 0.0
    %v3426 = vmax.f32 %v3362, 0.0
    %v3427 = vmax.f32 %v3363, 0.0
    %v3428 = vmax.f32 %v3364, 0.0
    %v3429 = vmax.f32 %v3365, 0.0
    %v3430 = vmax.f32 %v3366, 0.0
    %v3431 = vmax.f32 %v3367, 0.0
    %v3432 = vmax.f32 %v3368, 0.0
    %v3433 = vmax.f32 %v3369, 0.0
    %v3434 = vmax.f32 %v3370, 0.0
    %v3435 = vmax.f32 %v3371, 0.0
    %v3436 = vmax.f32 %v3372, 0.0
    %v3437 = vmax.f32 %v3373, 0.0
    %v3438 = vmax.f32 %v3374, 0.0
    %v3439 = vmax.f32 %v3375, 0.0
    %v3440 = vmax.f32 %v3376, 0.0
    %v3441 = vmax.f32 %v3377, 0.0
    %v3442 = vmax.f32 %v3378, 0.0
    %v3443 = vmax.f32 %v3379, 0.0
    %v3444 = vmax.f32 %v3380, 0.0
    %v3445 = vmax.f32 %v3381, 0.0
    %v3446 = vmax.f32 %v3382, 0.0
    %v3447 = vmax.f32 %v3383, 0.0
    %v3448 = vmax.f32 %v3384, 0.0
    %v3449 = vmax.f32 %v3385, 0.0
    %v3450 = vmax.f32 %v3386, 0.0
    %v3451 = vmax.f32 %v3387, 0.0
    %v3452 = vmax.f32 %v3388, 0.0
    %v3453 = vmax.f32 %v3389, 0.0
    %v3454 = vmax.f32 %v3390, 0.0
    %v3455 = vmax.f32 %v3391, 0.0
    %v3456 = vmax.f32 %v3392, 0.0
    %v3457 = vmax.f32 %v3393, 0.0
    %v3458 = vmax.f32 %v3394, 0.0
    %v3459 = vmax.f32 %v3395, 0.0
    %v3460 = vmax.f32 %v3396, 0.0
    %v3461 = vmax.f32 %v3397, 0.0
    %v3462 = vmax.f32 %v3398, %v3400
    %v3463 = vmax.f32 %v3399, %v3401
    %v3464 = vmax.f32 %v3430, %v3432
    %v3465 = vmax.f32 %v3431, %v3433
    %v3468 = vrot.slane %v3462, 1
    %v3469 = vrot.slane %v3464, 1
    %v3472 = vmax.f32 %v3462, %v3468
    %v3473 = vmax.f32 %v3464, %v3469
    %v3476 = vrot.slane %v3463, 1
    %v3477 = vrot.slane %v3465, 1
    %v3480 = vmax.f32 %v3463, %v3476
    %v3481 = vmax.f32 %v3465, %v3477
    %v3484 = vrot.slane %v3472, 1
    %v3485 = vrot.slane %v3473, 1
    %v3488 = vrot.slane %v3472, 2
    %v3489 = vrot.slane %v3473, 2
    %v3492 = vrot.slane %v3472, 3
    %v3493 = vrot.slane %v3473, 3
    %v3498 = vrot.slane %v3480, 4
    %v3499 = vrot.slane %v3481, 4
    %v3502 = vrot.slane %v3480, 5
    %v3503 = vrot.slane %v3481, 5
    %v3506 = vrot.slane %v3480, 6
    %v3507 = vrot.slane %v3481, 6
    %v3510 = vrot.slane %v3480, 7
    %v3511 = vrot.slane %v3481, 7
    %vm3514 = vcmask 1040384
    %v3515 = vsel %vm3514, %v3472, %v3484
    %v3516 = vsel %vm3514, %v3473, %v3485
    %vm3517 = vcmask 1041408
    %v3518 = vsel %vm3517, %v3515, %v3488
    %v3519 = vsel %vm3517, %v3516, %v3489
    %vm3520 = vcmask 1042432
    %v3521 = vsel %vm3520, %v3518, %v3492
    %v3522 = vsel %vm3520, %v3519, %v3493
    %vm3523 = vcmask 1043456
    %v3524 = vsel %vm3523, %v3521, %v3498
    %v3525 = vsel %vm3523, %v3522, %v3499
    %vm3526 = vcmask 1044480
    %v3527 = vsel %vm3526, %v3524, %v3502
    %v3528 = vsel %vm3526, %v3525, %v3503
    %vm3529 = vcmask 1045504
    %v3530 = vsel %vm3529, %v3527, %v3506
    %v3531 = vsel %vm3529, %v3528, %v3507
    %vm3532 = vcmask 1046528
    %v3533 = vsel %vm3532, %v3530, %v3510
    %v3534 = vsel %vm3532, %v3531, %v3511
    %v3535 = vmax.f32 %v3402, %v3404
    %v3536 = vmax.f32 %v3403, %v3405
    %v3537 = vmax.f32 %v3434, %v3436
    %v3538 = vmax.f32 %v3435, %v3437
    %v3541 = vrot.slane %v3535, 1
    %v3542 = vrot.slane %v3537, 1
    %v3545 = vmax.f32 %v3535, %v3541
    %v3546 = vmax.f32 %v3537, %v3542
    %v3549 = vrot.slane %v3536, 1
    %v3550 = vrot.slane %v3538, 1
    %v3553 = vmax.f32 %v3536, %v3549
    %v3554 = vmax.f32 %v3538, %v3550
    %v3557 = vrot.slane %v3545, 1
    %v3558 = vrot.slane %v3546, 1
    %v3561 = vrot.slane %v3545, 2
    %v3562 = vrot.slane %v3546, 2
    %v3565 = vrot.slane %v3545, 3
    %v3566 = vrot.slane %v3546, 3
    %v3571 = vrot.slane %v3553, 4
    %v3572 = vrot.slane %v3554, 4
    %v3575 = vrot.slane %v3553, 5
    %v3576 = vrot.slane %v3554, 5
    %v3579 = vrot.slane %v3553, 6
    %v3580 = vrot.slane %v3554, 6
    %v3583 = vrot.slane %v3553, 7
    %v3584 = vrot.slane %v3554, 7
    %v3587 = vsel %vm3514, %v3545, %v3557
    %v3588 = vsel %vm3514, %v3546, %v3558
    %v3589 = vsel %vm3517, %v3587, %v3561
    %v3590 = vsel %vm3517, %v3588, %v3562
    %v3591 = vsel %vm3520, %v3589, %v3565
    %v3592 = vsel %vm3520, %v3590, %v3566
    %v3593 = vsel %vm3523, %v3591, %v3571
    %v3594 = vsel %vm3523, %v3592, %v3572
    %v3595 = vsel %vm3526, %v3593, %v3575
    %v3596 = vsel %vm3526, %v3594, %v3576
    %v3597 = vsel %vm3529, %v3595, %v3579
    %v3598 = vsel %vm3529, %v3596, %v3580
    %v3599 = vsel %vm3532, %v3597, %v3583
    %v3600 = vsel %vm3532, %v3598, %v3584
    %v3601 = vmax.f32 %v3406, %v3408
    %v3602 = vmax.f32 %v3407, %v3409
    %v3603 = vmax.f32 %v3438, %v3440
    %v3604 = vmax.f32 %v3439, %v3441
    %v3607 = vrot.slane %v3601, 1
    %v3608 = vrot.slane %v3603, 1
    %v3611 = vmax.f32 %v3601, %v3607
    %v3612 = vmax.f32 %v3603, %v3608
    %v3615 = vrot.slane %v3602, 1
    %v3616 = vrot.slane %v3604, 1
    %v3619 = vmax.f32 %v3602, %v3615
    %v3620 = vmax.f32 %v3604, %v3616
    %v3623 = vrot.slane %v3611, 1
    %v3624 = vrot.slane %v3612, 1
    %v3627 = vrot.slane %v3611, 2
    %v3628 = vrot.slane %v3612, 2
    %v3631 = vrot.slane %v3611, 3
    %v3632 = vrot.slane %v3612, 3
    %v3637 = vrot.slane %v3619, 4
    %v3638 = vrot.slane %v3620, 4
    %v3641 = vrot.slane %v3619, 5
    %v3642 = vrot.slane %v3620, 5
    %v3645 = vrot.slane %v3619, 6
    %v3646 = vrot.slane %v3620, 6
    %v3649 = vrot.slane %v3619, 7
    %v3650 = vrot.slane %v3620, 7
    %v3653 = vsel %vm3514, %v3611, %v3623
    %v3654 = vsel %vm3514, %v3612, %v3624
    %v3655 = vsel %vm3517, %v3653, %v3627
    %v3656 = vsel %vm3517, %v3654, %v3628
    %v3657 = vsel %vm3520, %v3655, %v3631
    %v3658 = vsel %vm3520, %v3656, %v3632
    %v3659 = vsel %vm3523, %v3657, %v3637
    %v3660 = vsel %vm3523, %v3658, %v3638
    %v3661 = vsel %vm3526, %v3659, %v3641
    %v3662 = vsel %vm3526, %v3660, %v3642
    %v3663 = vsel %vm3529, %v3661, %v3645
    %v3664 = vsel %vm3529, %v3662, %v3646
    %v3665 = vsel %vm3532, %v3663, %v3649
    %v3666 = vsel %vm3532, %v3664, %v3650
    %v3667 = vmax.f32 %v3410, %v3412
    %v3668 = vmax.f32 %v3411, %v3413
    %v3669 = vmax.f32 %v3442, %v3444
    %v3670 = vmax.f32 %v3443, %v3445
    %v3673 = vrot.slane %v3667, 1
    %v3674 = vrot.slane %v3669, 1
    %v3677 = vmax.f32 %v3667, %v3673
    %v3678 = vmax.f32 %v3669, %v3674
    %v3681 = vrot.slane %v3668, 1
    %v3682 = vrot.slane %v3670, 1
    %v3685 = vmax.f32 %v3668, %v3681
    %v3686 = vmax.f32 %v3670, %v3682
    %v3689 = vrot.slane %v3677, 1
    %v3690 = vrot.slane %v3678, 1
    %v3693 = vrot.slane %v3677, 2
    %v3694 = vrot.slane %v3678, 2
    %v3697 = vrot.slane %v3677, 3
    %v3698 = vrot.slane %v3678, 3
    %v3703 = vrot.slane %v3685, 4
    %v3704 = vrot.slane %v3686, 4
    %v3707 = vrot.slane %v3685, 5
    %v3708 = vrot.slane %v3686, 5
    %v3711 = vrot.slane %v3685, 6
    %v3712 = vrot.slane %v3686, 6
    %v3715 = vrot.slane %v3685, 7
    %v3716 = vrot.slane %v3686, 7
    %v3719 = vsel %vm3514, %v3677, %v3689
    %v3720 = vsel %vm3514, %v3678, %v3690
    %v3721 = vsel %vm3517, %v3719, %v3693
    %v3722 = vsel %vm3517, %v3720, %v3694
    %v3723 = vsel %vm3520, %v3721, %v3697
    %v3724 = vsel %vm3520, %v3722, %v3698
    %v3725 = vsel %vm3523, %v3723, %v3703
    %v3726 = vsel %vm3523, %v3724, %v3704
    %v3727 = vsel %vm3526, %v3725, %v3707
    %v3728 = vsel %vm3526, %v3726, %v3708
    %v3729 = vsel %vm3529, %v3727, %v3711
    %v3730 = vsel %vm3529, %v3728, %v3712
    %v3731 = vsel %vm3532, %v3729, %v3715
    %v3732 = vsel %vm3532, %v3730, %v3716
    %v3733 = vmax.f32 %v3414, %v3416
    %v3734 = vmax.f32 %v3415, %v3417
    %v3735 = vmax.f32 %v3446, %v3448
    %v3736 = vmax.f32 %v3447, %v3449
    %v3739 = vrot.slane %v3733, 1
    %v3740 = vrot.slane %v3735, 1
    %v3743 = vmax.f32 %v3733, %v3739
    %v3744 = vmax.f32 %v3735, %v3740
    %v3747 = vrot.slane %v3734, 1
    %v3748 = vrot.slane %v3736, 1
    %v3751 = vmax.f32 %v3734, %v3747
    %v3752 = vmax.f32 %v3736, %v3748
    %v3755 = vrot.slane %v3743, 1
    %v3756 = vrot.slane %v3744, 1
    %v3759 = vrot.slane %v3743, 2
    %v3760 = vrot.slane %v3744, 2
    %v3763 = vrot.slane %v3743, 3
    %v3764 = vrot.slane %v3744, 3
    %v3769 = vrot.slane %v3751, 4
    %v3770 = vrot.slane %v3752, 4
    %v3773 = vrot.slane %v3751, 5
    %v3774 = vrot.slane %v3752, 5
    %v3777 = vrot.slane %v3751, 6
    %v3778 = vrot.slane %v3752, 6
    %v3781 = vrot.slane %v3751, 7
    %v3782 = vrot.slane %v3752, 7
    %v3785 = vsel %vm3514, %v3743, %v3755
    %v3786 = vsel %vm3514, %v3744, %v3756
    %v3787 = vsel %vm3517, %v3785, %v3759
    %v3788 = vsel %vm3517, %v3786, %v3760
    %v3789 = vsel %vm3520, %v3787, %v3763
    %v3790 = vsel %vm3520, %v3788, %v3764
    %v3791 = vsel %vm3523, %v3789, %v3769
    %v3792 = vsel %vm3523, %v3790, %v3770
    %v3793 = vsel %vm3526, %v3791, %v3773
    %v3794 = vsel %vm3526, %v3792, %v3774
    %v3795 = vsel %vm3529, %v3793, %v3777
    %v3796 = vsel %vm3529, %v3794, %v3778
    %v3797 = vsel %vm3532, %v3795, %v3781
    %v3798 = vsel %vm3532, %v3796, %v3782
    %v3799 = vmax.f32 %v3418, %v3420
    %v3800 = vmax.f32 %v3419, %v3421
    %v3801 = vmax.f32 %v3450, %v3452
    %v3802 = vmax.f32 %v3451, %v3453
    %v3805 = vrot.slane %v3799, 1
    %v3806 = vrot.slane %v3801, 1
    %v3809 = vmax.f32 %v3799, %v3805
    %v3810 = vmax.f32 %v3801, %v3806
    %v3813 = vrot.slane %v3800, 1
    %v3814 = vrot.slane %v3802, 1
    %v3817 = vmax.f32 %v3800, %v3813
    %v3818 = vmax.f32 %v3802, %v3814
    %v3821 = vrot.slane %v3809, 1
    %v3822 = vrot.slane %v3810, 1
    %v3825 = vrot.slane %v3809, 2
    %v3826 = vrot.slane %v3810, 2
    %v3829 = vrot.slane %v3809, 3
    %v3830 = vrot.slane %v3810, 3
    %v3835 = vrot.slane %v3817, 4
    %v3836 = vrot.slane %v3818, 4
    %v3839 = vrot.slane %v3817, 5
    %v3840 = vrot.slane %v3818, 5
    %v3843 = vrot.slane %v3817, 6
    %v3844 = vrot.slane %v3818, 6
    %v3847 = vrot.slane %v3817, 7
    %v3848 = vrot.slane %v3818, 7
    %v3851 = vsel %vm3514, %v3809, %v3821
    %v3852 = vsel %vm3514, %v3810, %v3822
    %v3853 = vsel %vm3517, %v3851, %v3825
    %v3854 = vsel %vm3517, %v3852, %v3826
    %v3855 = vsel %vm3520, %v3853, %v3829
    %v3856 = vsel %vm3520, %v3854, %v3830
    %v3857 = vsel %vm3523, %v3855, %v3835
    %v3858 = vsel %vm3523, %v3856, %v3836
    %v3859 = vsel %vm3526, %v3857, %v3839
    %v3860 = vsel %vm3526, %v3858, %v3840
    %v3861 = vsel %vm3529, %v3859, %v3843
    %v3862 = vsel %vm3529, %v3860, %v3844
    %v3863 = vsel %vm3532, %v3861, %v3847
    %v3864 = vsel %vm3532, %v3862, %v3848
    %v3865 = vmax.f32 %v3422, %v3424
    %v3866 = vmax.f32 %v3423, %v3425
    %v3867 = vmax.f32 %v3454, %v3456
    %v3868 = vmax.f32 %v3455, %v3457
    %v3871 = vrot.slane %v3865, 1
    %v3872 = vrot.slane %v3867, 1
    %v3875 = vmax.f32 %v3865, %v3871
    %v3876 = vmax.f32 %v3867, %v3872
    %v3879 = vrot.slane %v3866, 1
    %v3880 = vrot.slane %v3868, 1
    %v3883 = vmax.f32 %v3866, %v3879
    %v3884 = vmax.f32 %v3868, %v3880
    %v3887 = vrot.slane %v3875, 1
    %v3888 = vrot.slane %v3876, 1
    %v3891 = vrot.slane %v3875, 2
    %v3892 = vrot.slane %v3876, 2
    %v3895 = vrot.slane %v3875, 3
    %v3896 = vrot.slane %v3876, 3
    %v3901 = vrot.slane %v3883, 4
    %v3902 = vrot.slane %v3884, 4
    %v3905 = vrot.slane %v3883, 5
    %v3906 = vrot.slane %v3884, 5
    %v3909 = vrot.slane %v3883, 6
    %v3910 = vrot.slane %v3884, 6
    %v3913 = vrot.slane %v3883, 7
    %v3914 = vrot.slane %v3884, 7
    %v3917 = vsel %vm3514, %v3875, %v3887
    %v3918 = vsel %vm3514, %v3876, %v3888
    %v3919 = vsel %vm3517, %v3917, %v3891
    %v3920 = vsel %vm3517, %v3918, %v3892
    %v3921 = vsel %vm3520, %v3919, %v3895
    %v3922 = vsel %vm3520, %v3920, %v3896
    %v3923 = vsel %vm3523, %v3921, %v3901
    %v3924 = vsel %vm3523, %v3922, %v3902
    %v3925 = vsel %vm3526, %v3923, %v3905
    %v3926 = vsel %vm3526, %v3924, %v3906
    %v3927 = vsel %vm3529, %v3925, %v3909
    %v3928 = vsel %vm3529, %v3926, %v3910
    %v3929 = vsel %vm3532, %v3927, %v3913
    %v3930 = vsel %vm3532, %v3928, %v3914
    %v3931 = vmax.f32 %v3426, %v3428
    %v3932 = vmax.f32 %v3427, %v3429
    %v3933 = vmax.f32 %v3458, %v3460
    %v3934 = vmax.f32 %v3459, %v3461
    %v3937 = vrot.slane %v3931, 1
    %v3938 = vrot.slane %v3933, 1
    %v3941 = vmax.f32 %v3931, %v3937
    %v3942 = vmax.f32 %v3933, %v3938
    %v3945 = vrot.slane %v3932, 1
    %v3946 = vrot.slane %v3934, 1
    %v3949 = vmax.f32 %v3932, %v3945
    %v3950 = vmax.f32 %v3934, %v3946
    %v3953 = vrot.slane %v3941, 1
    %v3954 = vrot.slane %v3942, 1
    %v3957 = vrot.slane %v3941, 2
    %v3958 = vrot.slane %v3942, 2
    %v3961 = vrot.slane %v3941, 3
    %v3962 = vrot.slane %v3942, 3
    %v3967 = vrot.slane %v3949, 4
    %v3968 = vrot.slane %v3950, 4
    %v3971 = vrot.slane %v3949, 5
    %v3972 = vrot.slane %v3950, 5
    %v3975 = vrot.slane %v3949, 6
    %v3976 = vrot.slane %v3950, 6
    %v3979 = vrot.slane %v3949, 7
    %v3980 = vrot.slane %v3950, 7
    %v3983 = vsel %vm3514, %v3941, %v3953
    %v3984 = vsel %vm3514, %v3942, %v3954
    %v3985 = vsel %vm3517, %v3983, %v3957
    %v3986 = vsel %vm3517, %v3984, %v3958
    %v3987 = vsel %vm3520, %v3985, %v3961
    %v3988 = vsel %vm3520, %v3986, %v3962
    %v3989 = vsel %vm3523, %v3987, %v3967
    %v3990 = vsel %vm3523, %v3988, %v3968
    %v3991 = vsel %vm3526, %v3989, %v3971
    %v3992 = vsel %vm3526, %v3990, %v3972
    %v3993 = vsel %vm3529, %v3991, %v3975
    %v3994 = vsel %vm3529, %v3992, %v3976
    %v3995 = vsel %vm3532, %v3993, %v3979
    %v3996 = vsel %vm3532, %v3994, %v3980
    %v3997 = vpack.c.bf16 %v3599, %v3533
    %v3998 = vpack.c.bf16 %v3731, %v3665
    %v3999 = vpack.c.bf16 %v3863, %v3797
    %v4000 = vpack.c.bf16 %v3995, %v3929
    %v4001 = vpack.c.bf16 %v3600, %v3534
    %v4002 = vpack.c.bf16 %v3732, %v3666
    %v4003 = vpack.c.bf16 %v3864, %v3798
    %v4004 = vpack.c.bf16 %v3996, %v3930
    %v4005 = vld [vmem:[%s4] sm:$0xff]
    %v4006 = vld [vmem:[%s4 + $0x8] sm:$0xff]
    %v4007 = vld [vmem:[%s4 + $0x10] sm:$0xff]
    %v4008 = vld [vmem:[%s4 + $0x18] sm:$0xff]
    %v4013 = vunpack.c.l.b16 %v4005
    %v4014 = vunpack.c.h.b16 %v4005
    %v4015 = vunpack.c.l.b16 %v4006
    %v4016 = vunpack.c.h.b16 %v4006
    %v4017 = vunpack.c.l.b16 %v4007
    %v4018 = vunpack.c.h.b16 %v4007
    %v4019 = vunpack.c.l.b16 %v4008
    %v4020 = vunpack.c.h.b16 %v4008
    %v4021 = vpack.c.b16 %v4015, %v4013
    %v4022 = vpack.c.b16 %v4016, %v4014
    %v4023 = vpack.c.b16 %v4019, %v4017
    %v4024 = vpack.c.b16 %v4020, %v4018
    %v4030 = vsel %vm2618, %v3997, 0
    %v4033 = vsel %vm2618, %v3998, 0
    %v4036 = vsel %vm2618, %v3999, 0
    %v4039 = vsel %vm2618, %v4000, 0
    %v4042 = vsel %vm2618, %v4001, 0
    %v4045 = vsel %vm2618, %v4002, 0
    %v4048 = vsel %vm2618, %v4003, 0
    %v4051 = vsel %vm2618, %v4004, 0
    %4053 = vmatprep.subr.bf16.mxu0 0
    %4054 = vmatpush1.bf16.msra.mxu0 0
    %4055 = vmatprep.subr.bf16.mxu0 0
    %4056 = vmatpush1.bf16.msra.mxu0 0
    %4057 = vmatprep.subr.bf16.mxu0 0
    %4058 = vmatpush1.bf16.msra.mxu0 0
    %4059 = vmatprep.subr.bf16.mxu0 0
    %4060 = vmatpush1.bf16.msra.mxu0 0
    %4061 = vmatprep.subr.bf16.mxu0 0
    %4062 = vmatpush1.bf16.msra.mxu0 0
    %4063 = vmatprep.subr.bf16.mxu0 0
    %4064 = vmatpush1.bf16.msra.mxu0 0
    %4065 = vmatprep.subr.bf16.mxu0 %v4024
    %4066 = vmatpush1.bf16.msra.mxu0 %v4023
    %4067 = vmatprep.subr.bf16.mxu0 %v4022
    %4068 = vmatpush1.bf16.msra.mxu0 %v4021
    %4069 = vmatprep.subr.bf16.mxu0 0
    %4070 = vmatpush2.bf16.msra.mxu0 0
    %4071 = vmatprep.subr.bf16.mxu0 0
    %4072 = vmatpush2.bf16.msra.mxu0 0
    %4073 = vmatprep.subr.bf16.mxu0 0
    %4074 = vmatpush2.bf16.msra.mxu0 0
    %4075 = vmatprep.subr.bf16.mxu0 0
    %4076 = vmatpush2.bf16.msra.mxu0 0
    %4077 = vmatprep.subr.bf16.mxu0 0
    %4078 = vmatpush2.bf16.msra.mxu0 0
    %4079 = vmatprep.subr.bf16.mxu0 0
    %4080 = vmatpush2.bf16.msra.mxu0 0
    %4081 = vmatprep.subr.bf16.mxu0 0
    %4082 = vmatpush2.bf16.msra.mxu0 0
    %4083 = vmatprep.subr.bf16.mxu0 0
    %4084 = vmatpush2.bf16.msra.mxu0 0
    %4085 = vmatprep.mubr.bf16.mxu0 0
    %4086 = vmatmul.mubr.bf16.gmra.mxu0 %v4030
    %v4087 = vpop.f32.mrf.mxu0
    %v4088 = vadd.f32 0.0, %v4087
    %v4089 = vpop.f32.mrf.mxu0
    %v4090 = vadd.f32 0.0, %v4089
    %v4091 = vpop.f32.mrf.mxu0
    %v4092 = vadd.f32 0.0, %v4091
    %v4093 = vpop.f32.mrf.mxu0
    %v4094 = vadd.f32 0.0, %v4093
    %4095 = vmatprep.mubr.bf16.mxu0 0
    %4096 = vmatmul.mubr.bf16.gmra.mxu0 %v4033
    %v4097 = vpop.f32.mrf.mxu0
    %v4098 = vadd.f32 0.0, %v4097
    %v4099 = vpop.f32.mrf.mxu0
    %v4100 = vadd.f32 0.0, %v4099
    %v4101 = vpop.f32.mrf.mxu0
    %v4102 = vadd.f32 0.0, %v4101
    %v4103 = vpop.f32.mrf.mxu0
    %v4104 = vadd.f32 0.0, %v4103
    %4105 = vmatprep.mubr.bf16.mxu0 0
    %4106 = vmatmul.mubr.bf16.gmra.mxu0 %v4036
    %v4107 = vpop.f32.mrf.mxu0
    %v4108 = vadd.f32 0.0, %v4107
    %v4109 = vpop.f32.mrf.mxu0
    %v4110 = vadd.f32 0.0, %v4109
    %v4111 = vpop.f32.mrf.mxu0
    %v4112 = vadd.f32 0.0, %v4111
    %v4113 = vpop.f32.mrf.mxu0
    %v4114 = vadd.f32 0.0, %v4113
    %4115 = vmatprep.mubr.bf16.mxu0 0
    %4116 = vmatmul.mubr.bf16.gmra.mxu0 %v4039
    %v4117 = vpop.f32.mrf.mxu0
    %v4118 = vadd.f32 0.0, %v4117
    %v4119 = vpop.f32.mrf.mxu0
    %v4120 = vadd.f32 0.0, %v4119
    %v4121 = vpop.f32.mrf.mxu0
    %v4122 = vadd.f32 0.0, %v4121
    %v4123 = vpop.f32.mrf.mxu0
    %v4124 = vadd.f32 0.0, %v4123
    %4125 = vmatprep.mubr.bf16.mxu0 0
    %4126 = vmatmul.mubr.bf16.gmra.mxu0 %v4042
    %v4127 = vpop.f32.mrf.mxu0
    %v4128 = vadd.f32 0.0, %v4127
    %v4129 = vpop.f32.mrf.mxu0
    %v4130 = vadd.f32 0.0, %v4129
    %v4131 = vpop.f32.mrf.mxu0
    %v4132 = vadd.f32 0.0, %v4131
    %v4133 = vpop.f32.mrf.mxu0
    %v4134 = vadd.f32 0.0, %v4133
    %4135 = vmatprep.mubr.bf16.mxu0 0
    %4136 = vmatmul.mubr.bf16.gmra.mxu0 %v4045
    %v4137 = vpop.f32.mrf.mxu0
    %v4138 = vadd.f32 0.0, %v4137
    %v4139 = vpop.f32.mrf.mxu0
    %v4140 = vadd.f32 0.0, %v4139
    %v4141 = vpop.f32.mrf.mxu0
    %v4142 = vadd.f32 0.0, %v4141
    %v4143 = vpop.f32.mrf.mxu0
    %v4144 = vadd.f32 0.0, %v4143
    %4145 = vmatprep.mubr.bf16.mxu0 0
    %4146 = vmatmul.mubr.bf16.gmra.mxu0 %v4048
    %v4147 = vpop.f32.mrf.mxu0
    %v4148 = vadd.f32 0.0, %v4147
    %v4149 = vpop.f32.mrf.mxu0
    %v4150 = vadd.f32 0.0, %v4149
    %v4151 = vpop.f32.mrf.mxu0
    %v4152 = vadd.f32 0.0, %v4151
    %v4153 = vpop.f32.mrf.mxu0
    %v4154 = vadd.f32 0.0, %v4153
    %4155 = vmatprep.mubr.bf16.mxu0 0
    %4156 = vmatmul.mubr.bf16.gmra.mxu0 %v4051
    %v4157 = vpop.f32.mrf.mxu0
    %v4158 = vadd.f32 0.0, %v4157
    %v4159 = vpop.f32.mrf.mxu0
    %v4160 = vadd.f32 0.0, %v4159
    %v4161 = vpop.f32.mrf.mxu0
    %v4162 = vadd.f32 0.0, %v4161
    %v4163 = vpop.f32.mrf.mxu0
    %v4164 = vadd.f32 0.0, %v4163
    %4165 = vdwg.mxu0
    %v4183 = vrot.slane 0.0, 7
    %v4184 = vrot.slane %v4088, 7
    %v4185 = vrot.slane %v4092, 7
    %v4186 = vrot.slane %v4098, 7
    %v4187 = vrot.slane %v4102, 7
    %v4188 = vrot.slane %v4108, 7
    %v4189 = vrot.slane %v4112, 7
    %v4190 = vrot.slane %v4118, 7
    %v4191 = vrot.slane %v4122, 7
    %v4192 = vrot.slane %v4128, 7
    %v4193 = vrot.slane %v4132, 7
    %v4194 = vrot.slane %v4138, 7
    %v4195 = vrot.slane %v4142, 7
    %v4196 = vrot.slane %v4148, 7
    %v4197 = vrot.slane %v4152, 7
    %v4198 = vrot.slane %v4158, 7
    %v4199 = vrot.slane %v4162, 7
    %v4217 = vsel %vm3514, 0.0, %v4183
    %v4218 = vsel %vm3514, 0.0, %v4184
    %v4219 = vsel %vm3514, 0.0, %v4185
    %v4220 = vsel %vm3514, 0.0, %v4186
    %v4221 = vsel %vm3514, 0.0, %v4187
    %v4222 = vsel %vm3514, 0.0, %v4188
    %v4223 = vsel %vm3514, 0.0, %v4189
    %v4224 = vsel %vm3514, 0.0, %v4190
    %v4225 = vsel %vm3514, 0.0, %v4191
    %v4226 = vsel %vm3514, 0.0, %v4192
    %v4227 = vsel %vm3514, 0.0, %v4193
    %v4228 = vsel %vm3514, 0.0, %v4194
    %v4229 = vsel %vm3514, 0.0, %v4195
    %v4230 = vsel %vm3514, 0.0, %v4196
    %v4231 = vsel %vm3514, 0.0, %v4197
    %v4232 = vsel %vm3514, 0.0, %v4198
    %v4233 = vsel %vm3514, 0.0, %v4199
    %4234 = vrot.lane.b32.xlu0 %v4088, 64
    %v4235 = vpop.permute.xlu0 %4234
    %4236 = vrot.lane.b32.xlu0 %v4092, 64
    %v4237 = vpop.permute.xlu0 %4236
    %4238 = vrot.lane.b32.xlu0 %v4098, 64
    %v4239 = vpop.permute.xlu0 %4238
    %4240 = vrot.lane.b32.xlu0 %v4102, 64
    %v4241 = vpop.permute.xlu0 %4240
    %4242 = vrot.lane.b32.xlu0 %v4108, 64
    %v4243 = vpop.permute.xlu0 %4242
    %4244 = vrot.lane.b32.xlu0 %v4112, 64
    %v4245 = vpop.permute.xlu0 %4244
    %4246 = vrot.lane.b32.xlu0 %v4118, 64
    %v4247 = vpop.permute.xlu0 %4246
    %4248 = vrot.lane.b32.xlu0 %v4122, 64
    %v4249 = vpop.permute.xlu0 %4248
    %4250 = vrot.lane.b32.xlu0 %v4128, 64
    %v4251 = vpop.permute.xlu0 %4250
    %4252 = vrot.lane.b32.xlu0 %v4132, 64
    %v4253 = vpop.permute.xlu0 %4252
    %4254 = vrot.lane.b32.xlu0 %v4138, 64
    %v4255 = vpop.permute.xlu0 %4254
    %4256 = vrot.lane.b32.xlu0 %v4142, 64
    %v4257 = vpop.permute.xlu0 %4256
    %4258 = vrot.lane.b32.xlu0 %v4148, 64
    %v4259 = vpop.permute.xlu0 %4258
    %4260 = vrot.lane.b32.xlu0 %v4152, 64
    %v4261 = vpop.permute.xlu0 %4260
    %4262 = vrot.lane.b32.xlu0 %v4158, 64
    %v4263 = vpop.permute.xlu0 %4262
    %4264 = vrot.lane.b32.xlu0 %v4162, 64
    %v4265 = vpop.permute.xlu0 %4264
    %v4282 = vadd.f32 %v4217, 0.0
    %v4283 = vadd.f32 %v4183, 0.0
    %v4284 = vadd.f32 %v4218, %v4235
    %v4285 = vadd.f32 %v4184, 0.0
    %v4286 = vadd.f32 %v4219, %v4237
    %v4287 = vadd.f32 %v4185, 0.0
    %v4288 = vadd.f32 %v4220, %v4239
    %v4289 = vadd.f32 %v4186, 0.0
    %v4290 = vadd.f32 %v4221, %v4241
    %v4291 = vadd.f32 %v4187, 0.0
    %v4292 = vadd.f32 %v4222, %v4243
    %v4293 = vadd.f32 %v4188, 0.0
    %v4294 = vadd.f32 %v4223, %v4245
    %v4295 = vadd.f32 %v4189, 0.0
    %v4296 = vadd.f32 %v4224, %v4247
    %v4297 = vadd.f32 %v4190, 0.0
    %v4298 = vadd.f32 %v4225, %v4249
    %v4299 = vadd.f32 %v4191, 0.0
    %v4300 = vadd.f32 %v4226, %v4251
    %v4301 = vadd.f32 %v4192, 0.0
    %v4302 = vadd.f32 %v4227, %v4253
    %v4303 = vadd.f32 %v4193, 0.0
    %v4304 = vadd.f32 %v4228, %v4255
    %v4305 = vadd.f32 %v4194, 0.0
    %v4306 = vadd.f32 %v4229, %v4257
    %v4307 = vadd.f32 %v4195, 0.0
    %v4308 = vadd.f32 %v4230, %v4259
    %v4309 = vadd.f32 %v4196, 0.0
    %v4310 = vadd.f32 %v4231, %v4261
    %v4311 = vadd.f32 %v4197, 0.0
    %v4312 = vadd.f32 %v4232, %v4263
    %v4313 = vadd.f32 %v4198, 0.0
    %v4314 = vadd.f32 %v4233, %v4265
    %v4315 = vadd.f32 %v4199, 0.0
    %v4332 = vrot.slane %v4090, 7
    %v4333 = vrot.slane %v4094, 7
    %v4334 = vrot.slane %v4100, 7
    %v4335 = vrot.slane %v4104, 7
    %v4336 = vrot.slane %v4110, 7
    %v4337 = vrot.slane %v4114, 7
    %v4338 = vrot.slane %v4120, 7
    %v4339 = vrot.slane %v4124, 7
    %v4340 = vrot.slane %v4130, 7
    %v4341 = vrot.slane %v4134, 7
    %v4342 = vrot.slane %v4140, 7
    %v4343 = vrot.slane %v4144, 7
    %v4344 = vrot.slane %v4150, 7
    %v4345 = vrot.slane %v4154, 7
    %v4346 = vrot.slane %v4160, 7
    %v4347 = vrot.slane %v4164, 7
    %v4364 = vsel %vm3514, 0.0, %v4332
    %v4365 = vsel %vm3514, 0.0, %v4333
    %v4366 = vsel %vm3514, 0.0, %v4334
    %v4367 = vsel %vm3514, 0.0, %v4335
    %v4368 = vsel %vm3514, 0.0, %v4336
    %v4369 = vsel %vm3514, 0.0, %v4337
    %v4370 = vsel %vm3514, 0.0, %v4338
    %v4371 = vsel %vm3514, 0.0, %v4339
    %v4372 = vsel %vm3514, 0.0, %v4340
    %v4373 = vsel %vm3514, 0.0, %v4341
    %v4374 = vsel %vm3514, 0.0, %v4342
    %v4375 = vsel %vm3514, 0.0, %v4343
    %v4376 = vsel %vm3514, 0.0, %v4344
    %v4377 = vsel %vm3514, 0.0, %v4345
    %v4378 = vsel %vm3514, 0.0, %v4346
    %v4379 = vsel %vm3514, 0.0, %v4347
    %v4380 = vadd.f32 %v4282, %v4364
    %v4381 = vadd.f32 %v4283, %v4332
    %v4382 = vadd.f32 %v4284, %v4365
    %v4383 = vadd.f32 %v4285, %v4333
    %v4384 = vadd.f32 %v4286, %v4366
    %v4385 = vadd.f32 %v4287, %v4334
    %v4386 = vadd.f32 %v4288, %v4367
    %v4387 = vadd.f32 %v4289, %v4335
    %v4388 = vadd.f32 %v4290, %v4368
    %v4389 = vadd.f32 %v4291, %v4336
    %v4390 = vadd.f32 %v4292, %v4369
    %v4391 = vadd.f32 %v4293, %v4337
    %v4392 = vadd.f32 %v4294, %v4370
    %v4393 = vadd.f32 %v4295, %v4338
    %v4394 = vadd.f32 %v4296, %v4371
    %v4395 = vadd.f32 %v4297, %v4339
    %v4396 = vadd.f32 %v4298, %v4217
    %v4397 = vadd.f32 %v4299, %v4183
    %v4398 = vadd.f32 %v4282, %v4372
    %v4399 = vadd.f32 %v4283, %v4340
    %v4400 = vadd.f32 %v4300, %v4373
    %v4401 = vadd.f32 %v4301, %v4341
    %v4402 = vadd.f32 %v4302, %v4374
    %v4403 = vadd.f32 %v4303, %v4342
    %v4404 = vadd.f32 %v4304, %v4375
    %v4405 = vadd.f32 %v4305, %v4343
    %v4406 = vadd.f32 %v4306, %v4376
    %v4407 = vadd.f32 %v4307, %v4344
    %v4408 = vadd.f32 %v4308, %v4377
    %v4409 = vadd.f32 %v4309, %v4345
    %v4410 = vadd.f32 %v4310, %v4378
    %v4411 = vadd.f32 %v4311, %v4346
    %v4412 = vadd.f32 %v4312, %v4379
    %v4413 = vadd.f32 %v4313, %v4347
    %v4414 = vadd.f32 %v4314, %v4217
    %v4415 = vadd.f32 %v4315, %v4183
    %4416 = vrot.lane.b32.xlu0 %v4090, 64
    %v4417 = vpop.permute.xlu0 %4416
    %4418 = vrot.lane.b32.xlu0 0.0, 64
    %v4419 = vpop.permute.xlu0 %4418
    %4420 = vrot.lane.b32.xlu0 %v4094, 64
    %v4421 = vpop.permute.xlu0 %4420
    %4422 = vrot.lane.b32.xlu0 %v4100, 64
    %v4423 = vpop.permute.xlu0 %4422
    %4424 = vrot.lane.b32.xlu0 %v4104, 64
    %v4425 = vpop.permute.xlu0 %4424
    %4426 = vrot.lane.b32.xlu0 %v4110, 64
    %v4427 = vpop.permute.xlu0 %4426
    %4428 = vrot.lane.b32.xlu0 %v4114, 64
    %v4429 = vpop.permute.xlu0 %4428
    %4430 = vrot.lane.b32.xlu0 %v4120, 64
    %v4431 = vpop.permute.xlu0 %4430
    %4432 = vrot.lane.b32.xlu0 %v4124, 64
    %v4433 = vpop.permute.xlu0 %4432
    %4434 = vrot.lane.b32.xlu0 %v4130, 64
    %v4435 = vpop.permute.xlu0 %4434
    %4436 = vrot.lane.b32.xlu0 %v4134, 64
    %v4437 = vpop.permute.xlu0 %4436
    %4438 = vrot.lane.b32.xlu0 %v4140, 64
    %v4439 = vpop.permute.xlu0 %4438
    %4440 = vrot.lane.b32.xlu0 %v4144, 64
    %v4441 = vpop.permute.xlu0 %4440
    %4442 = vrot.lane.b32.xlu0 %v4150, 64
    %v4443 = vpop.permute.xlu0 %4442
    %4444 = vrot.lane.b32.xlu0 %v4154, 64
    %v4445 = vpop.permute.xlu0 %4444
    %4446 = vrot.lane.b32.xlu0 %v4160, 64
    %v4447 = vpop.permute.xlu0 %4446
    %4448 = vrot.lane.b32.xlu0 %v4164, 64
    %v4449 = vpop.permute.xlu0 %4448
    %v4467 = vadd.f32 %v4380, %v4417
    %v4468 = vadd.f32 %v4381, %v4419
    %v4469 = vadd.f32 %v4382, %v4421
    %v4470 = vadd.f32 %v4383, %v4419
    %v4471 = vadd.f32 %v4384, %v4423
    %v4472 = vadd.f32 %v4385, %v4419
    %v4473 = vadd.f32 %v4386, %v4425
    %v4474 = vadd.f32 %v4387, %v4419
    %v4475 = vadd.f32 %v4388, %v4427
    %v4476 = vadd.f32 %v4389, %v4419
    %v4477 = vadd.f32 %v4390, %v4429
    %v4478 = vadd.f32 %v4391, %v4419
    %v4479 = vadd.f32 %v4392, %v4431
    %v4480 = vadd.f32 %v4393, %v4419
    %v4481 = vadd.f32 %v4394, %v4433
    %v4482 = vadd.f32 %v4395, %v4419
    %v4483 = vadd.f32 %v4396, %v4419
    %v4484 = vadd.f32 %v4397, %v4419
    %v4485 = vadd.f32 %v4398, %v4435
    %v4486 = vadd.f32 %v4399, %v4419
    %v4487 = vadd.f32 %v4400, %v4437
    %v4488 = vadd.f32 %v4401, %v4419
    %v4489 = vadd.f32 %v4402, %v4439
    %v4490 = vadd.f32 %v4403, %v4419
    %v4491 = vadd.f32 %v4404, %v4441
    %v4492 = vadd.f32 %v4405, %v4419
    %v4493 = vadd.f32 %v4406, %v4443
    %v4494 = vadd.f32 %v4407, %v4419
    %v4495 = vadd.f32 %v4408, %v4445
    %v4496 = vadd.f32 %v4409, %v4419
    %v4497 = vadd.f32 %v4410, %v4447
    %v4498 = vadd.f32 %v4411, %v4419
    %v4499 = vadd.f32 %v4412, %v4449
    %v4500 = vadd.f32 %v4413, %v4419
    %v4501 = vadd.f32 %v4414, %v4419
    %v4502 = vadd.f32 %v4415, %v4419
    %v4503 = vld [vmem:[%s5] sm:$0x1]
    %v4504 = vld [vmem:[%s6] sm:$0x1]
    %vm4505 = vcmask 523264
    %v4506 = vsel %vm4505, %v4467, 0.0
    %v4507 = vsel %vm4505, %v4485, 0.0
    %v4508 = vadd.f32 %v4506, %v4507
    %vm4509 = vcmask 516096
    %v4510 = vsel %vm4509, %v4468, 0.0
    %v4511 = vsel %vm4509, %v4486, 0.0
    %v4512 = vadd.f32 %v4510, %v4511
    %v4513 = vsel %vm4505, %v4469, 0.0
    %v4514 = vsel %vm4505, %v4487, 0.0
    %v4515 = vadd.f32 %v4513, %v4514
    %v4516 = vsel %vm4509, %v4470, 0.0
    %v4517 = vsel %vm4509, %v4488, 0.0
    %v4518 = vadd.f32 %v4516, %v4517
    %v4519 = vsel %vm4505, %v4471, 0.0
    %v4520 = vsel %vm4505, %v4489, 0.0
    %v4521 = vadd.f32 %v4519, %v4520
    %v4522 = vsel %vm4509, %v4472, 0.0
    %v4523 = vsel %vm4509, %v4490, 0.0
    %v4524 = vadd.f32 %v4522, %v4523
    %v4525 = vsel %vm4505, %v4473, 0.0
    %v4526 = vsel %vm4505, %v4491, 0.0
    %v4527 = vadd.f32 %v4525, %v4526
    %v4528 = vsel %vm4509, %v4474, 0.0
    %v4529 = vsel %vm4509, %v4492, 0.0
    %v4530 = vadd.f32 %v4528, %v4529
    %v4531 = vsel %vm4505, %v4475, 0.0
    %v4532 = vsel %vm4505, %v4493, 0.0
    %v4533 = vadd.f32 %v4531, %v4532
    %v4534 = vsel %vm4509, %v4476, 0.0
    %v4535 = vsel %vm4509, %v4494, 0.0
    %v4536 = vadd.f32 %v4534, %v4535
    %v4537 = vsel %vm4505, %v4477, 0.0
    %v4538 = vsel %vm4505, %v4495, 0.0
    %v4539 = vadd.f32 %v4537, %v4538
    %v4540 = vsel %vm4509, %v4478, 0.0
    %v4541 = vsel %vm4509, %v4496, 0.0
    %v4542 = vadd.f32 %v4540, %v4541
    %v4543 = vsel %vm4505, %v4479, 0.0
    %v4544 = vsel %vm4505, %v4497, 0.0
    %v4545 = vadd.f32 %v4543, %v4544
    %v4546 = vsel %vm4509, %v4480, 0.0
    %v4547 = vsel %vm4509, %v4498, 0.0
    %v4548 = vadd.f32 %v4546, %v4547
    %v4549 = vsel %vm4505, %v4481, 0.0
    %v4550 = vsel %vm4505, %v4499, 0.0
    %v4551 = vadd.f32 %v4549, %v4550
    %v4552 = vsel %vm4509, %v4482, 0.0
    %v4553 = vsel %vm4509, %v4500, 0.0
    %v4554 = vadd.f32 %v4552, %v4553
    %v4555 = vsel %vm4505, %v4483, 0.0
    %v4556 = vsel %vm4505, %v4501, 0.0
    %v4557 = vadd.f32 %v4555, %v4556
    %v4558 = vsel %vm4509, %v4484, 0.0
    %v4559 = vsel %vm4509, %v4502, 0.0
    %v4560 = vadd.f32 %v4558, %v4559
    %v4561 = vsel %vm4505, %v4508, 0.0
    %v4562 = vsel %vm4505, %v4515, 0.0
    %v4563 = vadd.f32 %v4561, %v4562
    %v4564 = vsel %vm4505, %v4521, 0.0
    %v4565 = vadd.f32 %v4563, %v4564
    %v4566 = vsel %vm4505, %v4527, 0.0
    %v4567 = vadd.f32 %v4565, %v4566
    %v4568 = vsel %vm4505, %v4533, 0.0
    %v4569 = vadd.f32 %v4567, %v4568
    %v4570 = vsel %vm4505, %v4539, 0.0
    %v4571 = vadd.f32 %v4569, %v4570
    %v4572 = vsel %vm4505, %v4545, 0.0
    %v4573 = vadd.f32 %v4571, %v4572
    %v4574 = vsel %vm4505, %v4551, 0.0
    %v4575 = vadd.f32 %v4573, %v4574
    %v4576 = vsel %vm4505, %v4557, 0.0
    %v4577 = vadd.f32 %v4575, %v4576
    %v4578 = vsel %vm4509, %v4512, 0.0
    %v4579 = vsel %vm4509, %v4518, 0.0
    %v4580 = vadd.f32 %v4578, %v4579
    %v4581 = vsel %vm4509, %v4524, 0.0
    %v4582 = vadd.f32 %v4580, %v4581
    %v4583 = vsel %vm4509, %v4530, 0.0
    %v4584 = vadd.f32 %v4582, %v4583
    %v4585 = vsel %vm4509, %v4536, 0.0
    %v4586 = vadd.f32 %v4584, %v4585
    %v4587 = vsel %vm4509, %v4542, 0.0
    %v4588 = vadd.f32 %v4586, %v4587
    %v4589 = vsel %vm4509, %v4548, 0.0
    %v4590 = vadd.f32 %v4588, %v4589
    %v4591 = vsel %vm4509, %v4554, 0.0
    %v4592 = vadd.f32 %v4590, %v4591
    %v4593 = vsel %vm4509, %v4560, 0.0
    %v4594 = vadd.f32 %v4592, %v4593
    %v4595 = vsel %vm4505, %v4577, 0.0
    %v4596 = vsel %vm4509, %v4594, 0.0
    %v4597 = vadd.f32 %v4595, %v4596
    %v4598 = vrot.slane %v4597, 4
    %v4599 = vadd.f32 %v4597, %v4598
    %v4600 = vrot.slane %v4599, 2
    %v4601 = vadd.f32 %v4599, %v4600
    %v4602 = vrot.slane %v4601, 1
    %v4603 = vadd.f32 %v4601, %v4602
    %v4604 = vmul.f32 %v4467, %v4467
    %v4605 = vmul.f32 %v4468, %v4468
    %v4606 = vmul.f32 %v4469, %v4469
    %v4607 = vmul.f32 %v4470, %v4470
    %v4608 = vmul.f32 %v4471, %v4471
    %v4609 = vmul.f32 %v4472, %v4472
    %v4610 = vmul.f32 %v4473, %v4473
    %v4611 = vmul.f32 %v4474, %v4474
    %v4612 = vmul.f32 %v4475, %v4475
    %v4613 = vmul.f32 %v4476, %v4476
    %v4614 = vmul.f32 %v4477, %v4477
    %v4615 = vmul.f32 %v4478, %v4478
    %v4616 = vmul.f32 %v4479, %v4479
    %v4617 = vmul.f32 %v4480, %v4480
    %v4618 = vmul.f32 %v4481, %v4481
    %v4619 = vmul.f32 %v4482, %v4482
    %v4620 = vmul.f32 %v4483, %v4483
    %v4621 = vmul.f32 %v4484, %v4484
    %v4622 = vmul.f32 %v4485, %v4485
    %v4623 = vmul.f32 %v4486, %v4486
    %v4624 = vmul.f32 %v4487, %v4487
    %v4625 = vmul.f32 %v4488, %v4488
    %v4626 = vmul.f32 %v4489, %v4489
    %v4627 = vmul.f32 %v4490, %v4490
    %v4628 = vmul.f32 %v4491, %v4491
    %v4629 = vmul.f32 %v4492, %v4492
    %v4630 = vmul.f32 %v4493, %v4493
    %v4631 = vmul.f32 %v4494, %v4494
    %v4632 = vmul.f32 %v4495, %v4495
    %v4633 = vmul.f32 %v4496, %v4496
    %v4634 = vmul.f32 %v4497, %v4497
    %v4635 = vmul.f32 %v4498, %v4498
    %v4636 = vmul.f32 %v4499, %v4499
    %v4637 = vmul.f32 %v4500, %v4500
    %v4638 = vmul.f32 %v4501, %v4501
    %v4639 = vmul.f32 %v4502, %v4502
    %v4640 = vsel %vm4505, %v4604, 0.0
    %v4641 = vsel %vm4505, %v4622, 0.0
    %v4642 = vadd.f32 %v4640, %v4641
    %v4643 = vsel %vm4509, %v4605, 0.0
    %v4644 = vsel %vm4509, %v4623, 0.0
    %v4645 = vadd.f32 %v4643, %v4644
    %v4646 = vsel %vm4505, %v4606, 0.0
    %v4647 = vsel %vm4505, %v4624, 0.0
    %v4648 = vadd.f32 %v4646, %v4647
    %v4649 = vsel %vm4509, %v4607, 0.0
    %v4650 = vsel %vm4509, %v4625, 0.0
    %v4651 = vadd.f32 %v4649, %v4650
    %v4652 = vsel %vm4505, %v4608, 0.0
    %v4653 = vsel %vm4505, %v4626, 0.0
    %v4654 = vadd.f32 %v4652, %v4653
    %v4655 = vsel %vm4509, %v4609, 0.0
    %v4656 = vsel %vm4509, %v4627, 0.0
    %v4657 = vadd.f32 %v4655, %v4656
    %v4658 = vsel %vm4505, %v4610, 0.0
    %v4659 = vsel %vm4505, %v4628, 0.0
    %v4660 = vadd.f32 %v4658, %v4659
    %v4661 = vsel %vm4509, %v4611, 0.0
    %v4662 = vsel %vm4509, %v4629, 0.0
    %v4663 = vadd.f32 %v4661, %v4662
    %v4664 = vsel %vm4505, %v4612, 0.0
    %v4665 = vsel %vm4505, %v4630, 0.0
    %v4666 = vadd.f32 %v4664, %v4665
    %v4667 = vsel %vm4509, %v4613, 0.0
    %v4668 = vsel %vm4509, %v4631, 0.0
    %v4669 = vadd.f32 %v4667, %v4668
    %v4670 = vsel %vm4505, %v4614, 0.0
    %v4671 = vsel %vm4505, %v4632, 0.0
    %v4672 = vadd.f32 %v4670, %v4671
    %v4673 = vsel %vm4509, %v4615, 0.0
    %v4674 = vsel %vm4509, %v4633, 0.0
    %v4675 = vadd.f32 %v4673, %v4674
    %v4676 = vsel %vm4505, %v4616, 0.0
    %v4677 = vsel %vm4505, %v4634, 0.0
    %v4678 = vadd.f32 %v4676, %v4677
    %v4679 = vsel %vm4509, %v4617, 0.0
    %v4680 = vsel %vm4509, %v4635, 0.0
    %v4681 = vadd.f32 %v4679, %v4680
    %v4682 = vsel %vm4505, %v4618, 0.0
    %v4683 = vsel %vm4505, %v4636, 0.0
    %v4684 = vadd.f32 %v4682, %v4683
    %v4685 = vsel %vm4509, %v4619, 0.0
    %v4686 = vsel %vm4509, %v4637, 0.0
    %v4687 = vadd.f32 %v4685, %v4686
    %v4688 = vsel %vm4505, %v4620, 0.0
    %v4689 = vsel %vm4505, %v4638, 0.0
    %v4690 = vadd.f32 %v4688, %v4689
    %v4691 = vsel %vm4509, %v4621, 0.0
    %v4692 = vsel %vm4509, %v4639, 0.0
    %v4693 = vadd.f32 %v4691, %v4692
    %v4694 = vsel %vm4505, %v4642, 0.0
    %v4695 = vsel %vm4505, %v4648, 0.0
    %v4696 = vadd.f32 %v4694, %v4695
    %v4697 = vsel %vm4505, %v4654, 0.0
    %v4698 = vadd.f32 %v4696, %v4697
    %v4699 = vsel %vm4505, %v4660, 0.0
    %v4700 = vadd.f32 %v4698, %v4699
    %v4701 = vsel %vm4505, %v4666, 0.0
    %v4702 = vadd.f32 %v4700, %v4701
    %v4703 = vsel %vm4505, %v4672, 0.0
    %v4704 = vadd.f32 %v4702, %v4703
    %v4705 = vsel %vm4505, %v4678, 0.0
    %v4706 = vadd.f32 %v4704, %v4705
    %v4707 = vsel %vm4505, %v4684, 0.0
    %v4708 = vadd.f32 %v4706, %v4707
    %v4709 = vsel %vm4505, %v4690, 0.0
    %v4710 = vadd.f32 %v4708, %v4709
    %v4711 = vsel %vm4509, %v4645, 0.0
    %v4712 = vsel %vm4509, %v4651, 0.0
    %v4713 = vadd.f32 %v4711, %v4712
    %v4714 = vsel %vm4509, %v4657, 0.0
    %v4715 = vadd.f32 %v4713, %v4714
    %v4716 = vsel %vm4509, %v4663, 0.0
    %v4717 = vadd.f32 %v4715, %v4716
    %v4718 = vsel %vm4509, %v4669, 0.0
    %v4719 = vadd.f32 %v4717, %v4718
    %v4720 = vsel %vm4509, %v4675, 0.0
    %v4721 = vadd.f32 %v4719, %v4720
    %v4722 = vsel %vm4509, %v4681, 0.0
    %v4723 = vadd.f32 %v4721, %v4722
    %v4724 = vsel %vm4509, %v4687, 0.0
    %v4725 = vadd.f32 %v4723, %v4724
    %v4726 = vsel %vm4509, %v4693, 0.0
    %v4727 = vadd.f32 %v4725, %v4726
    %v4728 = vsel %vm4505, %v4710, 0.0
    %v4729 = vsel %vm4509, %v4727, 0.0
    %v4730 = vadd.f32 %v4728, %v4729
    %v4731 = vrot.slane %v4730, 4
    %v4732 = vadd.f32 %v4730, %v4731
    %v4733 = vrot.slane %v4732, 2
    %v4734 = vadd.f32 %v4732, %v4733
    %v4735 = vrot.slane %v4734, 1
    %v4736 = vadd.f32 %v4734, %v4735
    %v4737 = vmul.f32 %v4603, 0.0061728396
    %v4738 = vmul.f32 %v4736, 0.0061728396
    %v4739 = vmul.f32 %v4737, %v4737
    %v4740 = vsub.f32 %v4738, %v4739
    %v4741 = vmax.f32 %v4740, 0.0
    %v4742 = vadd.f32 %v4741, 1e-05
    %v4743 = vrsqrt.pop %v4742
    %v4744 = vmul.f32 %v4503, %v4743
    %v4745 = vmul.f32 %v4737, %v4744
    %v4746 = vsub.f32 %v4504, %v4745
    %v4748 = vlaneseq
    %v4749 = vshrl.u32 %v4748, 7
    %v4750 = vsub.s32 0, %v4749
    %v4751 = vrot.slane %v4744, %v4750
    %v4753 = vmul.f32 %v4467, %v4751
    %v4754 = vmul.f32 %v4469, %v4751
    %v4755 = vmul.f32 %v4471, %v4751
    %v4756 = vmul.f32 %v4473, %v4751
    %v4757 = vmul.f32 %v4475, %v4751
    %v4758 = vmul.f32 %v4477, %v4751
    %v4759 = vmul.f32 %v4479, %v4751
    %v4760 = vmul.f32 %v4481, %v4751
    %v4761 = vmul.f32 %v4485, %v4751
    %v4762 = vmul.f32 %v4487, %v4751
    %v4763 = vmul.f32 %v4489, %v4751
    %v4764 = vmul.f32 %v4491, %v4751
    %v4765 = vmul.f32 %v4493, %v4751
    %v4766 = vmul.f32 %v4495, %v4751
    %v4767 = vmul.f32 %v4497, %v4751
    %v4768 = vmul.f32 %v4499, %v4751
    %v4770 = vlaneseq
    %v4771 = vshrl.u32 %v4770, 7
    %v4772 = vsub.s32 0, %v4771
    %v4773 = vrot.slane %v4746, %v4772
    %v4775 = vadd.f32 %v4753, %v4773
    %v4776 = vadd.f32 %v4754, %v4773
    %v4777 = vadd.f32 %v4755, %v4773
    %v4778 = vadd.f32 %v4756, %v4773
    %v4779 = vadd.f32 %v4757, %v4773
    %v4780 = vadd.f32 %v4758, %v4773
    %v4781 = vadd.f32 %v4759, %v4773
    %v4782 = vadd.f32 %v4760, %v4773
    %v4783 = vadd.f32 %v4761, %v4773
    %v4784 = vadd.f32 %v4762, %v4773
    %v4785 = vadd.f32 %v4763, %v4773
    %v4786 = vadd.f32 %v4764, %v4773
    %v4787 = vadd.f32 %v4765, %v4773
    %v4788 = vadd.f32 %v4766, %v4773
    %v4789 = vadd.f32 %v4767, %v4773
    %v4790 = vadd.f32 %v4768, %v4773
    %v4791 = vmax.f32 %v4775, 0.0
    %v4792 = vmax.f32 %v4776, 0.0
    %v4793 = vmax.f32 %v4777, 0.0
    %v4794 = vmax.f32 %v4778, 0.0
    %v4795 = vmax.f32 %v4779, 0.0
    %v4796 = vmax.f32 %v4780, 0.0
    %v4797 = vmax.f32 %v4781, 0.0
    %v4798 = vmax.f32 %v4782, 0.0
    %v4799 = vmax.f32 %v4783, 0.0
    %v4800 = vmax.f32 %v4784, 0.0
    %v4801 = vmax.f32 %v4785, 0.0
    %v4802 = vmax.f32 %v4786, 0.0
    %v4803 = vmax.f32 %v4787, 0.0
    %v4804 = vmax.f32 %v4788, 0.0
    %v4805 = vmax.f32 %v4789, 0.0
    %v4806 = vmax.f32 %v4790, 0.0
    %v4807 = vmax.f32 %v4791, %v4792
    %v4808 = vmax.f32 %v4799, %v4800
    %v4811 = vrot.slane %v4807, 1
    %v4812 = vrot.slane %v4808, 1
    %v4815 = vmax.f32 %v4807, %v4811
    %v4816 = vmax.f32 %v4808, %v4812
    %v4819 = vrot.slane %v4815, 1
    %v4820 = vrot.slane %v4816, 1
    %v4823 = vrot.slane %v4815, 2
    %v4824 = vrot.slane %v4816, 2
    %v4827 = vrot.slane %v4815, 3
    %v4828 = vrot.slane %v4816, 3
    %v4831 = vsel %vm3514, %v4815, %v4819
    %v4832 = vsel %vm3514, %v4816, %v4820
    %v4833 = vsel %vm3517, %v4831, %v4823
    %v4834 = vsel %vm3517, %v4832, %v4824
    %v4835 = vsel %vm3520, %v4833, %v4827
    %v4836 = vsel %vm3520, %v4834, %v4828
    %v4837 = vmax.f32 %v4793, %v4794
    %v4838 = vmax.f32 %v4801, %v4802
    %v4841 = vrot.slane %v4837, 1
    %v4842 = vrot.slane %v4838, 1
    %v4845 = vmax.f32 %v4837, %v4841
    %v4846 = vmax.f32 %v4838, %v4842
    %v4849 = vrot.slane %v4845, 1
    %v4850 = vrot.slane %v4846, 1
    %v4853 = vrot.slane %v4845, 2
    %v4854 = vrot.slane %v4846, 2
    %v4857 = vrot.slane %v4845, 3
    %v4858 = vrot.slane %v4846, 3
    %v4861 = vsel %vm3514, %v4845, %v4849
    %v4862 = vsel %vm3514, %v4846, %v4850
    %v4863 = vsel %vm3517, %v4861, %v4853
    %v4864 = vsel %vm3517, %v4862, %v4854
    %v4865 = vsel %vm3520, %v4863, %v4857
    %v4866 = vsel %vm3520, %v4864, %v4858
    %v4867 = vmax.f32 %v4795, %v4796
    %v4868 = vmax.f32 %v4803, %v4804
    %v4871 = vrot.slane %v4867, 1
    %v4872 = vrot.slane %v4868, 1
    %v4875 = vmax.f32 %v4867, %v4871
    %v4876 = vmax.f32 %v4868, %v4872
    %v4879 = vrot.slane %v4875, 1
    %v4880 = vrot.slane %v4876, 1
    %v4883 = vrot.slane %v4875, 2
    %v4884 = vrot.slane %v4876, 2
    %v4887 = vrot.slane %v4875, 3
    %v4888 = vrot.slane %v4876, 3
    %v4891 = vsel %vm3514, %v4875, %v4879
    %v4892 = vsel %vm3514, %v4876, %v4880
    %v4893 = vsel %vm3517, %v4891, %v4883
    %v4894 = vsel %vm3517, %v4892, %v4884
    %v4895 = vsel %vm3520, %v4893, %v4887
    %v4896 = vsel %vm3520, %v4894, %v4888
    %v4897 = vmax.f32 %v4797, %v4798
    %v4898 = vmax.f32 %v4805, %v4806
    %v4901 = vrot.slane %v4897, 1
    %v4902 = vrot.slane %v4898, 1
    %v4905 = vmax.f32 %v4897, %v4901
    %v4906 = vmax.f32 %v4898, %v4902
    %v4909 = vrot.slane %v4905, 1
    %v4910 = vrot.slane %v4906, 1
    %v4913 = vrot.slane %v4905, 2
    %v4914 = vrot.slane %v4906, 2
    %v4917 = vrot.slane %v4905, 3
    %v4918 = vrot.slane %v4906, 3
    %v4921 = vsel %vm3514, %v4905, %v4909
    %v4922 = vsel %vm3514, %v4906, %v4910
    %v4923 = vsel %vm3517, %v4921, %v4913
    %v4924 = vsel %vm3517, %v4922, %v4914
    %v4925 = vsel %vm3520, %v4923, %v4917
    %v4926 = vsel %vm3520, %v4924, %v4918
    %v4927 = vld [vmem:[%s7] sm:$0x3]
    %v4928 = vld [vmem:[%s8] sm:$0x3]
    %4930 = vset.pattern.permute.xlu0 0
    %4931 = vperm.xlu0 %4930, %v4927
    %v4932 = vpop.permute.xlu0 %4931
    %v4934 = vlaneseq
    %v4935 = vshrl.u32 %v4934, 7
    %v4936 = vsub.s32 0, %v4935
    %v4937 = vrot.slane %v4928, %v4936
    %v4938 = vmul.f32 %v4932, %v4937
    %4939 = vset.pattern.permute.xlu0 1
    %4940 = vperm.xlu0 %4939, %v4927
    %v4941 = vpop.permute.xlu0 %4940
    %v4943 = vlaneseq
    %v4944 = vshrl.u32 %v4943, 7
    %v4945 = vsub.s32 1, %v4944
    %v4946 = vrot.slane %v4928, %v4945
    %v4947 = vmul.f32 %v4941, %v4946
    %v4948 = vadd.f32 %v4938, %v4947
    %v4949 = vld [vmem:[%s9] sm:$0x1]
    %v4951 = vlaneseq
    %v4952 = vshrl.u32 %v4951, 7
    %v4953 = vsub.s32 0, %v4952
    %v4954 = vrot.slane %v4949, %v4953
    %v4956 = vadd.f32 %v4948, %v4954
    %v4957 = vmax.f32 %v4956, 0.0
    %v4960 = vrot.slane %v4836, 7
    %vm4961 = vcmask 1041409
    %v4962 = vsel %vm4961, %v4960, %v4835
    %v4964 = vrot.slane %v4835, 1
    %v4965 = vsel %vm4961, %v4836, %v4964
    %4966 = vrot.lane.b32.xlu0 %v4965, 64
    %v4967 = vpop.permute.xlu0 %4966
    %v4969 = vrot.slane %v4835, 2
    %v4970 = vrot.slane %v4836, 1
    %v4971 = vsel %vm4961, %v4970, %v4969
    %v4973 = vrot.slane %v4835, 3
    %v4974 = vrot.slane %v4836, 2
    %v4975 = vsel %vm4961, %v4974, %v4973
    %4976 = vrot.lane.b32.xlu0 %v4975, 64
    %v4977 = vpop.permute.xlu0 %4976
    %v4981 = vrot.slane %v4866, 7
    %v4982 = vsel %vm4961, %v4981, %v4865
    %v4984 = vrot.slane %v4865, 1
    %v4985 = vsel %vm4961, %v4866, %v4984
    %4986 = vrot.lane.b32.xlu0 %v4985, 64
    %v4987 = vpop.permute.xlu0 %4986
    %v4989 = vrot.slane %v4865, 2
    %v4990 = vrot.slane %v4866, 1
    %v4991 = vsel %vm4961, %v4990, %v4989
    %v4993 = vrot.slane %v4865, 3
    %v4994 = vrot.slane %v4866, 2
    %v4995 = vsel %vm4961, %v4994, %v4993
    %4996 = vrot.lane.b32.xlu0 %v4995, 64
    %v4997 = vpop.permute.xlu0 %4996
    %v5001 = vrot.slane %v4896, 7
    %v5002 = vsel %vm4961, %v5001, %v4895
    %v5004 = vrot.slane %v4895, 1
    %v5005 = vsel %vm4961, %v4896, %v5004
    %5006 = vrot.lane.b32.xlu0 %v5005, 64
    %v5007 = vpop.permute.xlu0 %5006
    %v5009 = vrot.slane %v4895, 2
    %v5010 = vrot.slane %v4896, 1
    %v5011 = vsel %vm4961, %v5010, %v5009
    %v5013 = vrot.slane %v4895, 3
    %v5014 = vrot.slane %v4896, 2
    %v5015 = vsel %vm4961, %v5014, %v5013
    %5016 = vrot.lane.b32.xlu0 %v5015, 64
    %v5017 = vpop.permute.xlu0 %5016
    %v5021 = vrot.slane %v4926, 7
    %v5022 = vsel %vm4961, %v5021, %v4925
    %v5024 = vrot.slane %v4925, 1
    %v5025 = vsel %vm4961, %v4926, %v5024
    %5026 = vrot.lane.b32.xlu0 %v5025, 64
    %v5027 = vpop.permute.xlu0 %5026
    %v5029 = vrot.slane %v4925, 2
    %v5030 = vrot.slane %v4926, 1
    %v5031 = vsel %vm4961, %v5030, %v5029
    %v5033 = vrot.slane %v4925, 3
    %v5034 = vrot.slane %v4926, 2
    %v5035 = vsel %vm4961, %v5034, %v5033
    %5036 = vrot.lane.b32.xlu0 %v5035, 64
    %v5037 = vpop.permute.xlu0 %5036
    %v5039 = vsel %vm4505, %v4962, %v4967
    %v5040 = vsel %vm4505, %v4971, %v4977
    %v5041 = vsel %vm4505, %v4982, %v4987
    %v5042 = vsel %vm4505, %v4991, %v4997
    %v5043 = vsel %vm4505, %v5002, %v5007
    %v5044 = vsel %vm4505, %v5011, %v5017
    %v5045 = vsel %vm4505, %v5022, %v5027
    %v5046 = vsel %vm4505, %v5031, %v5037
    %v5047 = vpack.c.bf16 %v5039, %v5039
    %v5048 = vpack.c.bf16 %v5040, %v5040
    %v5049 = vpack.c.bf16 %v5041, %v5041
    %v5050 = vpack.c.bf16 %v5042, %v5042
    %v5051 = vpack.c.bf16 %v5043, %v5043
    %v5052 = vpack.c.bf16 %v5044, %v5044
    %v5053 = vpack.c.bf16 %v5045, %v5045
    %v5054 = vpack.c.bf16 %v5046, %v5046
    %v5055 = vpack.c.bf16 %v4957, %v4957
    %v5056 = vld [vmem:[%s10] sm:$0xf]
    %v5057 = vld [vmem:[%s10 + $0x4] sm:$0xf]
    %v5058 = vld [vmem:[%s10 + $0x8] sm:$0xf]
    %v5059 = vld [vmem:[%s10 + $0xc] sm:$0xf]
    %v5060 = vld [vmem:[%s10 + $0x10] sm:$0xf]
    %v5061 = vld [vmem:[%s10 + $0x14] sm:$0xf]
    %v5062 = vld [vmem:[%s10 + $0x18] sm:$0xf]
    %v5063 = vld [vmem:[%s10 + $0x1c] sm:$0xf]
    %v5064 = vld [vmem:[%s10 + $0x20] sm:$0xf]
    %v5065 = vld [vmem:[%s10 + $0x24] sm:$0xf]
    %v5066 = vld [vmem:[%s10 + $0x28] sm:$0xf]
    %v5067 = vld [vmem:[%s10 + $0x2c] sm:$0xf]
    %v5068 = vld [vmem:[%s10 + $0x30] sm:$0xf]
    %v5069 = vld [vmem:[%s10 + $0x34] sm:$0xf]
    %v5070 = vld [vmem:[%s10 + $0x38] sm:$0xf]
    %v5071 = vld [vmem:[%s10 + $0x3c] sm:$0xf]
    %v5072 = vld [vmem:[%s10 + $0x40] sm:$0xf]
    %v5073 = vld [vmem:[%s10 + $0x44] sm:$0xf]
    %v5074 = vld [vmem:[%s10 + $0x48] sm:$0xf]
    %v5075 = vld [vmem:[%s10 + $0x4c] sm:$0xf]
    %v5076 = vld [vmem:[%s10 + $0x50] sm:$0xf]
    %v5077 = vld [vmem:[%s10 + $0x54] sm:$0xf]
    %v5078 = vld [vmem:[%s10 + $0x58] sm:$0xf]
    %v5079 = vld [vmem:[%s10 + $0x5c] sm:$0xf]
    %v5080 = vld [vmem:[%s10 + $0x60] sm:$0xf]
    %v5081 = vld [vmem:[%s10 + $0x64] sm:$0xf]
    %v5082 = vld [vmem:[%s10 + $0x68] sm:$0xf]
    %v5083 = vld [vmem:[%s10 + $0x6c] sm:$0xf]
    %v5084 = vld [vmem:[%s10 + $0x70] sm:$0xf]
    %v5085 = vld [vmem:[%s10 + $0x74] sm:$0xf]
    %v5086 = vld [vmem:[%s10 + $0x78] sm:$0xf]
    %v5087 = vld [vmem:[%s10 + $0x7c] sm:$0xf]
    %v5088 = vld [vmem:[%s10 + $0x80] sm:$0xf]
    %v5089 = vld [vmem:[%s10 + $0x84] sm:$0xf]
    %v5090 = vld [vmem:[%s10 + $0x88] sm:$0xf]
    %v5091 = vld [vmem:[%s10 + $0x8c] sm:$0xf]
    %v5092 = vld [vmem:[%s10 + $0x90] sm:$0xf]
    %v5093 = vld [vmem:[%s10 + $0x94] sm:$0xf]
    %v5094 = vld [vmem:[%s10 + $0x98] sm:$0xf]
    %v5095 = vld [vmem:[%s10 + $0x9c] sm:$0xf]
    %v5096 = vld [vmem:[%s10 + $0xa0] sm:$0xf]
    %v5097 = vld [vmem:[%s10 + $0xa4] sm:$0xf]
    %v5098 = vld [vmem:[%s10 + $0xa8] sm:$0xf]
    %v5099 = vld [vmem:[%s10 + $0xac] sm:$0xf]
    %v5100 = vld [vmem:[%s10 + $0xb0] sm:$0xf]
    %v5101 = vld [vmem:[%s10 + $0xb4] sm:$0xf]
    %v5102 = vld [vmem:[%s10 + $0xb8] sm:$0xf]
    %v5103 = vld [vmem:[%s10 + $0xbc] sm:$0xf]
    %v5104 = vld [vmem:[%s10 + $0xc0] sm:$0xf]
    %v5105 = vld [vmem:[%s10 + $0xc4] sm:$0xf]
    %v5106 = vld [vmem:[%s10 + $0xc8] sm:$0xf]
    %v5107 = vld [vmem:[%s10 + $0xcc] sm:$0xf]
    %v5108 = vld [vmem:[%s10 + $0xd0] sm:$0xf]
    %v5109 = vld [vmem:[%s10 + $0xd4] sm:$0xf]
    %v5110 = vld [vmem:[%s10 + $0xd8] sm:$0xf]
    %v5111 = vld [vmem:[%s10 + $0xdc] sm:$0xf]
    %v5112 = vld [vmem:[%s10 + $0xe0] sm:$0xf]
    %v5113 = vld [vmem:[%s10 + $0xe4] sm:$0xf]
    %v5114 = vld [vmem:[%s10 + $0xe8] sm:$0xf]
    %v5115 = vld [vmem:[%s10 + $0xec] sm:$0xf]
    %v5116 = vld [vmem:[%s10 + $0xf0] sm:$0xf]
    %v5117 = vld [vmem:[%s10 + $0xf4] sm:$0xf]
    %v5118 = vld [vmem:[%s10 + $0xf8] sm:$0xf]
    %v5119 = vld [vmem:[%s10 + $0xfc] sm:$0xf]
    %v5120 = vld [vmem:[%s10 + $0x100] sm:$0xf]
    %v5121 = vld [vmem:[%s10 + $0x104] sm:$0xf]
    %v5122 = vld [vmem:[%s10 + $0x108] sm:$0xf]
    %v5123 = vld [vmem:[%s10 + $0x10c] sm:$0xf]
    %v5124 = vld [vmem:[%s10 + $0x110] sm:$0xf]
    %v5125 = vld [vmem:[%s10 + $0x114] sm:$0xf]
    %v5126 = vld [vmem:[%s10 + $0x118] sm:$0xf]
    %v5127 = vld [vmem:[%s10 + $0x11c] sm:$0xf]
    %v5128 = vld [vmem:[%s10 + $0x120] sm:$0xf]
    %v5129 = vld [vmem:[%s10 + $0x124] sm:$0xf]
    %v5130 = vld [vmem:[%s10 + $0x128] sm:$0xf]
    %v5131 = vld [vmem:[%s10 + $0x12c] sm:$0xf]
    %v5132 = vld [vmem:[%s10 + $0x130] sm:$0xf]
    %v5133 = vld [vmem:[%s10 + $0x134] sm:$0xf]
    %v5134 = vld [vmem:[%s10 + $0x138] sm:$0xf]
    %v5135 = vld [vmem:[%s10 + $0x13c] sm:$0xf]
    %v5136 = vld [vmem:[%s10 + $0x140] sm:$0xf]
    %v5137 = vld [vmem:[%s10 + $0x144] sm:$0xf]
    %v5138 = vld [vmem:[%s10 + $0x148] sm:$0xf]
    %v5139 = vld [vmem:[%s10 + $0x14c] sm:$0xf]
    %v5140 = vld [vmem:[%s10 + $0x150] sm:$0xf]
    %v5141 = vld [vmem:[%s10 + $0x154] sm:$0xf]
    %v5142 = vld [vmem:[%s10 + $0x158] sm:$0xf]
    %v5143 = vld [vmem:[%s10 + $0x15c] sm:$0xf]
    %v5144 = vld [vmem:[%s10 + $0x160] sm:$0xf]
    %v5145 = vld [vmem:[%s10 + $0x164] sm:$0xf]
    %v5146 = vld [vmem:[%s10 + $0x168] sm:$0xf]
    %v5147 = vld [vmem:[%s10 + $0x16c] sm:$0xf]
    %v5148 = vld [vmem:[%s10 + $0x170] sm:$0xf]
    %v5149 = vld [vmem:[%s10 + $0x174] sm:$0xf]
    %v5150 = vld [vmem:[%s10 + $0x178] sm:$0xf]
    %v5151 = vld [vmem:[%s10 + $0x17c] sm:$0xf]
    %v5152 = vld [vmem:[%s10 + $0x180] sm:$0xf]
    %v5153 = vld [vmem:[%s10 + $0x184] sm:$0xf]
    %v5154 = vld [vmem:[%s10 + $0x188] sm:$0xf]
    %v5155 = vld [vmem:[%s10 + $0x18c] sm:$0xf]
    %v5156 = vld [vmem:[%s10 + $0x190] sm:$0xf]
    %v5157 = vld [vmem:[%s10 + $0x194] sm:$0xf]
    %v5158 = vld [vmem:[%s10 + $0x198] sm:$0xf]
    %v5159 = vld [vmem:[%s10 + $0x19c] sm:$0xf]
    %v5160 = vld [vmem:[%s10 + $0x1a0] sm:$0xf]
    %v5161 = vld [vmem:[%s10 + $0x1a4] sm:$0xf]
    %v5162 = vld [vmem:[%s10 + $0x1a8] sm:$0xf]
    %v5163 = vld [vmem:[%s10 + $0x1ac] sm:$0xf]
    %v5164 = vld [vmem:[%s10 + $0x1b0] sm:$0xf]
    %v5165 = vld [vmem:[%s10 + $0x1b4] sm:$0xf]
    %v5166 = vld [vmem:[%s10 + $0x1b8] sm:$0xf]
    %v5167 = vld [vmem:[%s10 + $0x1bc] sm:$0xf]
    %v5168 = vld [vmem:[%s10 + $0x1c0] sm:$0xf]
    %v5169 = vld [vmem:[%s10 + $0x1c4] sm:$0xf]
    %v5170 = vld [vmem:[%s10 + $0x1c8] sm:$0xf]
    %v5171 = vld [vmem:[%s10 + $0x1cc] sm:$0xf]
    %v5172 = vld [vmem:[%s10 + $0x1d0] sm:$0xf]
    %v5173 = vld [vmem:[%s10 + $0x1d4] sm:$0xf]
    %v5174 = vld [vmem:[%s10 + $0x1d8] sm:$0xf]
    %v5175 = vld [vmem:[%s10 + $0x1dc] sm:$0xf]
    %v5176 = vld [vmem:[%s10 + $0x1e0] sm:$0xf]
    %v5177 = vld [vmem:[%s10 + $0x1e4] sm:$0xf]
    %v5178 = vld [vmem:[%s10 + $0x1e8] sm:$0xf]
    %v5179 = vld [vmem:[%s10 + $0x1ec] sm:$0xf]
    %v5180 = vld [vmem:[%s10 + $0x1f0] sm:$0xf]
    %v5181 = vld [vmem:[%s10 + $0x1f4] sm:$0xf]
    %v5182 = vld [vmem:[%s10 + $0x1f8] sm:$0xf]
    %v5183 = vld [vmem:[%s10 + $0x1fc] sm:$0xf]
    %v5184 = vld [vmem:[%s10 + $0x200] sm:$0xf]
    %v5185 = vld [vmem:[%s10 + $0x204] sm:$0xf]
    %v5186 = vld [vmem:[%s10 + $0x208] sm:$0xf]
    %v5187 = vld [vmem:[%s10 + $0x20c] sm:$0xf]
    %v5188 = vld [vmem:[%s11] sm:$0x1]
    %v5190 = vlaneseq
    %v5191 = vshrl.u32 %v5190, 7
    %v5192 = vsub.s32 0, %v5191
    %v5193 = vrot.slane %v5188, %v5192
    %v5327 = vunpack.c.l.b16 %v5056
    %v5328 = vunpack.c.l.b16 %v5057
    %v5329 = vunpack.c.l.b16 %v5058
    %v5330 = vunpack.c.l.b16 %v5059
    %v5331 = vunpack.c.l.b16 %v5060
    %v5332 = vunpack.c.l.b16 %v5061
    %v5333 = vunpack.c.l.b16 %v5062
    %v5334 = vunpack.c.l.b16 %v5063
    %v5335 = vunpack.c.l.b16 %v5064
    %v5336 = vunpack.c.l.b16 %v5065
    %v5337 = vunpack.c.l.b16 %v5066
    %v5338 = vunpack.c.l.b16 %v5067
    %v5339 = vunpack.c.l.b16 %v5068
    %v5340 = vunpack.c.l.b16 %v5069
    %v5341 = vunpack.c.l.b16 %v5070
    %v5342 = vunpack.c.l.b16 %v5071
    %v5343 = vunpack.c.l.b16 %v5072
    %v5344 = vunpack.c.l.b16 %v5073
    %v5345 = vunpack.c.l.b16 %v5074
    %v5346 = vunpack.c.l.b16 %v5075
    %v5347 = vunpack.c.l.b16 %v5076
    %v5348 = vunpack.c.l.b16 %v5077
    %v5349 = vunpack.c.l.b16 %v5078
    %v5350 = vunpack.c.l.b16 %v5079
    %v5351 = vunpack.c.l.b16 %v5080
    %v5352 = vunpack.c.l.b16 %v5081
    %v5353 = vunpack.c.l.b16 %v5082
    %v5354 = vunpack.c.l.b16 %v5083
    %v5355 = vunpack.c.l.b16 %v5084
    %v5356 = vunpack.c.l.b16 %v5085
    %v5357 = vunpack.c.l.b16 %v5086
    %v5358 = vunpack.c.l.b16 %v5087
    %v5359 = vunpack.c.l.b16 %v5088
    %v5360 = vunpack.c.l.b16 %v5089
    %v5361 = vunpack.c.l.b16 %v5090
    %v5362 = vunpack.c.l.b16 %v5091
    %v5363 = vunpack.c.l.b16 %v5092
    %v5364 = vunpack.c.l.b16 %v5093
    %v5365 = vunpack.c.l.b16 %v5094
    %v5366 = vunpack.c.l.b16 %v5095
    %v5367 = vunpack.c.l.b16 %v5096
    %v5368 = vunpack.c.l.b16 %v5097
    %v5369 = vunpack.c.l.b16 %v5098
    %v5370 = vunpack.c.l.b16 %v5099
    %v5371 = vunpack.c.l.b16 %v5100
    %v5372 = vunpack.c.l.b16 %v5101
    %v5373 = vunpack.c.l.b16 %v5102
    %v5374 = vunpack.c.l.b16 %v5103
    %v5375 = vunpack.c.l.b16 %v5104
    %v5376 = vunpack.c.l.b16 %v5105
    %v5377 = vunpack.c.l.b16 %v5106
    %v5378 = vunpack.c.l.b16 %v5107
    %v5379 = vunpack.c.l.b16 %v5108
    %v5380 = vunpack.c.l.b16 %v5109
    %v5381 = vunpack.c.l.b16 %v5110
    %v5382 = vunpack.c.l.b16 %v5111
    %v5383 = vunpack.c.l.b16 %v5112
    %v5384 = vunpack.c.l.b16 %v5113
    %v5385 = vunpack.c.l.b16 %v5114
    %v5386 = vunpack.c.l.b16 %v5115
    %v5387 = vunpack.c.l.b16 %v5116
    %v5388 = vunpack.c.l.b16 %v5117
    %v5389 = vunpack.c.l.b16 %v5118
    %v5390 = vunpack.c.l.b16 %v5119
    %v5391 = vunpack.c.l.b16 %v5120
    %v5392 = vunpack.c.l.b16 %v5121
    %v5393 = vunpack.c.l.b16 %v5122
    %v5394 = vunpack.c.l.b16 %v5123
    %v5395 = vunpack.c.l.b16 %v5124
    %v5396 = vunpack.c.l.b16 %v5125
    %v5397 = vunpack.c.l.b16 %v5126
    %v5398 = vunpack.c.l.b16 %v5127
    %v5399 = vunpack.c.l.b16 %v5128
    %v5400 = vunpack.c.l.b16 %v5129
    %v5401 = vunpack.c.l.b16 %v5130
    %v5402 = vunpack.c.l.b16 %v5131
    %v5403 = vunpack.c.l.b16 %v5132
    %v5404 = vunpack.c.l.b16 %v5133
    %v5405 = vunpack.c.l.b16 %v5134
    %v5406 = vunpack.c.l.b16 %v5135
    %v5407 = vunpack.c.l.b16 %v5136
    %v5408 = vunpack.c.l.b16 %v5137
    %v5409 = vunpack.c.l.b16 %v5138
    %v5410 = vunpack.c.l.b16 %v5139
    %v5411 = vunpack.c.l.b16 %v5140
    %v5412 = vunpack.c.l.b16 %v5141
    %v5413 = vunpack.c.l.b16 %v5142
    %v5414 = vunpack.c.l.b16 %v5143
    %v5415 = vunpack.c.l.b16 %v5144
    %v5416 = vunpack.c.l.b16 %v5145
    %v5417 = vunpack.c.l.b16 %v5146
    %v5418 = vunpack.c.l.b16 %v5147
    %v5419 = vunpack.c.l.b16 %v5148
    %v5420 = vunpack.c.l.b16 %v5149
    %v5421 = vunpack.c.l.b16 %v5150
    %v5422 = vunpack.c.l.b16 %v5151
    %v5423 = vunpack.c.l.b16 %v5152
    %v5424 = vunpack.c.l.b16 %v5153
    %v5425 = vunpack.c.l.b16 %v5154
    %v5426 = vunpack.c.l.b16 %v5155
    %v5427 = vunpack.c.l.b16 %v5156
    %v5428 = vunpack.c.l.b16 %v5157
    %v5429 = vunpack.c.l.b16 %v5158
    %v5430 = vunpack.c.l.b16 %v5159
    %v5431 = vunpack.c.l.b16 %v5160
    %v5432 = vunpack.c.l.b16 %v5161
    %v5433 = vunpack.c.l.b16 %v5162
    %v5434 = vunpack.c.l.b16 %v5163
    %v5435 = vunpack.c.l.b16 %v5164
    %v5436 = vunpack.c.l.b16 %v5165
    %v5437 = vunpack.c.l.b16 %v5166
    %v5438 = vunpack.c.l.b16 %v5167
    %v5439 = vunpack.c.l.b16 %v5168
    %v5440 = vunpack.c.l.b16 %v5169
    %v5441 = vunpack.c.l.b16 %v5170
    %v5442 = vunpack.c.l.b16 %v5171
    %v5443 = vunpack.c.l.b16 %v5172
    %v5444 = vunpack.c.l.b16 %v5173
    %v5445 = vunpack.c.l.b16 %v5174
    %v5446 = vunpack.c.l.b16 %v5175
    %v5447 = vunpack.c.l.b16 %v5176
    %v5448 = vunpack.c.l.b16 %v5177
    %v5449 = vunpack.c.l.b16 %v5178
    %v5450 = vunpack.c.l.b16 %v5179
    %v5451 = vunpack.c.l.b16 %v5180
    %v5452 = vunpack.c.l.b16 %v5181
    %v5453 = vunpack.c.l.b16 %v5182
    %v5454 = vunpack.c.l.b16 %v5183
    %v5455 = vunpack.c.l.b16 %v5184
    %v5456 = vunpack.c.l.b16 %v5185
    %v5457 = vunpack.c.l.b16 %v5186
    %v5458 = vunpack.c.l.b16 %v5187
    %v5459 = vpack.c.b16 %v5328, %v5327
    %v5460 = vpack.c.b16 %v5330, %v5329
    %v5461 = vpack.c.b16 %v5332, %v5331
    %v5462 = vpack.c.b16 %v5334, %v5333
    %v5463 = vpack.c.b16 %v5336, %v5335
    %v5464 = vpack.c.b16 %v5338, %v5337
    %v5465 = vpack.c.b16 %v5340, %v5339
    %v5466 = vpack.c.b16 %v5342, %v5341
    %v5467 = vpack.c.b16 %v5344, %v5343
    %v5468 = vpack.c.b16 %v5346, %v5345
    %v5469 = vpack.c.b16 %v5348, %v5347
    %v5470 = vpack.c.b16 %v5350, %v5349
    %v5471 = vpack.c.b16 %v5352, %v5351
    %v5472 = vpack.c.b16 %v5354, %v5353
    %v5473 = vpack.c.b16 %v5356, %v5355
    %v5474 = vpack.c.b16 %v5358, %v5357
    %v5475 = vpack.c.b16 %v5360, %v5359
    %v5476 = vpack.c.b16 %v5362, %v5361
    %v5477 = vpack.c.b16 %v5364, %v5363
    %v5478 = vpack.c.b16 %v5366, %v5365
    %v5479 = vpack.c.b16 %v5368, %v5367
    %v5480 = vpack.c.b16 %v5370, %v5369
    %v5481 = vpack.c.b16 %v5372, %v5371
    %v5482 = vpack.c.b16 %v5374, %v5373
    %v5483 = vpack.c.b16 %v5376, %v5375
    %v5484 = vpack.c.b16 %v5378, %v5377
    %v5485 = vpack.c.b16 %v5380, %v5379
    %v5486 = vpack.c.b16 %v5382, %v5381
    %v5487 = vpack.c.b16 %v5384, %v5383
    %v5488 = vpack.c.b16 %v5386, %v5385
    %v5489 = vpack.c.b16 %v5388, %v5387
    %v5490 = vpack.c.b16 %v5390, %v5389
    %v5491 = vpack.c.b16 %v5392, %v5391
    %v5492 = vpack.c.b16 %v5394, %v5393
    %v5493 = vpack.c.b16 %v5396, %v5395
    %v5494 = vpack.c.b16 %v5398, %v5397
    %v5495 = vpack.c.b16 %v5400, %v5399
    %v5496 = vpack.c.b16 %v5402, %v5401
    %v5497 = vpack.c.b16 %v5404, %v5403
    %v5498 = vpack.c.b16 %v5406, %v5405
    %v5499 = vpack.c.b16 %v5408, %v5407
    %v5500 = vpack.c.b16 %v5410, %v5409
    %v5501 = vpack.c.b16 %v5412, %v5411
    %v5502 = vpack.c.b16 %v5414, %v5413
    %v5503 = vpack.c.b16 %v5416, %v5415
    %v5504 = vpack.c.b16 %v5418, %v5417
    %v5505 = vpack.c.b16 %v5420, %v5419
    %v5506 = vpack.c.b16 %v5422, %v5421
    %v5507 = vpack.c.b16 %v5424, %v5423
    %v5508 = vpack.c.b16 %v5426, %v5425
    %v5509 = vpack.c.b16 %v5428, %v5427
    %v5510 = vpack.c.b16 %v5430, %v5429
    %v5511 = vpack.c.b16 %v5432, %v5431
    %v5512 = vpack.c.b16 %v5434, %v5433
    %v5513 = vpack.c.b16 %v5436, %v5435
    %v5514 = vpack.c.b16 %v5438, %v5437
    %v5515 = vpack.c.b16 %v5440, %v5439
    %v5516 = vpack.c.b16 %v5442, %v5441
    %v5517 = vpack.c.b16 %v5444, %v5443
    %v5518 = vpack.c.b16 %v5446, %v5445
    %v5519 = vpack.c.b16 %v5448, %v5447
    %v5520 = vpack.c.b16 %v5450, %v5449
    %v5521 = vpack.c.b16 %v5452, %v5451
    %v5522 = vpack.c.b16 %v5454, %v5453
    %v5523 = vpack.c.b16 %v5456, %v5455
    %v5524 = vpack.c.b16 %v5458, %v5457
    %v5592 = vsel %vm2618, %v5055, 0
    %5594 = vmatprep.subr.bf16.mxu0 0
    %5595 = vmatpush1.bf16.msra.mxu0 %v5466
    %5596 = vmatprep.subr.bf16.mxu0 0
    %5597 = vmatpush1.bf16.msra.mxu0 %v5465
    %5598 = vmatprep.subr.bf16.mxu0 0
    %5599 = vmatpush1.bf16.msra.mxu0 %v5464
    %5600 = vmatprep.subr.bf16.mxu0 0
    %5601 = vmatpush1.bf16.msra.mxu0 %v5463
    %5602 = vmatprep.subr.bf16.mxu0 0
    %5603 = vmatpush1.bf16.msra.mxu0 %v5462
    %5604 = vmatprep.subr.bf16.mxu0 0
    %5605 = vmatpush1.bf16.msra.mxu0 %v5461
    %5606 = vmatprep.subr.bf16.mxu0 0
    %5607 = vmatpush1.bf16.msra.mxu0 %v5460
    %5608 = vmatprep.subr.bf16.mxu0 0
    %5609 = vmatpush1.bf16.msra.mxu0 %v5459
    %5610 = vmatprep.subr.bf16.mxu0 0
    %5611 = vmatpush2.bf16.msra.mxu0 %v5474
    %5612 = vmatprep.subr.bf16.mxu0 0
    %5613 = vmatpush2.bf16.msra.mxu0 %v5473
    %5614 = vmatprep.subr.bf16.mxu0 0
    %5615 = vmatpush2.bf16.msra.mxu0 %v5472
    %5616 = vmatprep.subr.bf16.mxu0 0
    %5617 = vmatpush2.bf16.msra.mxu0 %v5471
    %5618 = vmatprep.subr.bf16.mxu0 0
    %5619 = vmatpush2.bf16.msra.mxu0 %v5470
    %5620 = vmatprep.subr.bf16.mxu0 0
    %5621 = vmatpush2.bf16.msra.mxu0 %v5469
    %5622 = vmatprep.subr.bf16.mxu0 0
    %5623 = vmatpush2.bf16.msra.mxu0 %v5468
    %5624 = vmatprep.subr.bf16.mxu0 0
    %5625 = vmatpush2.bf16.msra.mxu0 %v5467
    %5626 = vmatprep.mubr.bf16.mxu0 %v5048
    %5627 = vmatmul.mubr.bf16.gmra.mxu0 %v5047
    %v5628 = vpop.f32.mrf.mxu0
    %v5629 = vadd.f32 %v5193, %v5628
    %v5630 = vpop.f32.mrf.mxu0
    %v5631 = vpop.f32.mrf.mxu0
    %v5632 = vpop.f32.mrf.mxu0
    %5633 = vdwg.mxu0
    %5634 = vmatprep.subr.bf16.mxu0 0
    %5635 = vmatpush1.bf16.msra.mxu0 %v5482
    %5636 = vmatprep.subr.bf16.mxu0 0
    %5637 = vmatpush1.bf16.msra.mxu0 %v5481
    %5638 = vmatprep.subr.bf16.mxu0 0
    %5639 = vmatpush1.bf16.msra.mxu0 %v5480
    %5640 = vmatprep.subr.bf16.mxu0 0
    %5641 = vmatpush1.bf16.msra.mxu0 %v5479
    %5642 = vmatprep.subr.bf16.mxu0 0
    %5643 = vmatpush1.bf16.msra.mxu0 %v5478
    %5644 = vmatprep.subr.bf16.mxu0 0
    %5645 = vmatpush1.bf16.msra.mxu0 %v5477
    %5646 = vmatprep.subr.bf16.mxu0 0
    %5647 = vmatpush1.bf16.msra.mxu0 %v5476
    %5648 = vmatprep.subr.bf16.mxu0 0
    %5649 = vmatpush1.bf16.msra.mxu0 %v5475
    %5650 = vmatprep.subr.bf16.mxu0 0
    %5651 = vmatpush2.bf16.msra.mxu0 %v5490
    %5652 = vmatprep.subr.bf16.mxu0 0
    %5653 = vmatpush2.bf16.msra.mxu0 %v5489
    %5654 = vmatprep.subr.bf16.mxu0 0
    %5655 = vmatpush2.bf16.msra.mxu0 %v5488
    %5656 = vmatprep.subr.bf16.mxu0 0
    %5657 = vmatpush2.bf16.msra.mxu0 %v5487
    %5658 = vmatprep.subr.bf16.mxu0 0
    %5659 = vmatpush2.bf16.msra.mxu0 %v5486
    %5660 = vmatprep.subr.bf16.mxu0 0
    %5661 = vmatpush2.bf16.msra.mxu0 %v5485
    %5662 = vmatprep.subr.bf16.mxu0 0
    %5663 = vmatpush2.bf16.msra.mxu0 %v5484
    %5664 = vmatprep.subr.bf16.mxu0 0
    %5665 = vmatpush2.bf16.msra.mxu0 %v5483
    %5666 = vmatprep.mubr.bf16.mxu0 %v5050
    %5667 = vmatmul.mubr.bf16.gmra.mxu0 %v5049
    %v5668 = vpop.f32.mrf.mxu0
    %v5669 = vadd.f32 %v5629, %v5668
    %v5670 = vpop.f32.mrf.mxu0
    %v5671 = vpop.f32.mrf.mxu0
    %v5672 = vpop.f32.mrf.mxu0
    %5673 = vdwg.mxu0
    %5674 = vmatprep.subr.bf16.mxu0 0
    %5675 = vmatpush1.bf16.msra.mxu0 %v5498
    %5676 = vmatprep.subr.bf16.mxu0 0
    %5677 = vmatpush1.bf16.msra.mxu0 %v5497
    %5678 = vmatprep.subr.bf16.mxu0 0
    %5679 = vmatpush1.bf16.msra.mxu0 %v5496
    %5680 = vmatprep.subr.bf16.mxu0 0
    %5681 = vmatpush1.bf16.msra.mxu0 %v5495
    %5682 = vmatprep.subr.bf16.mxu0 0
    %5683 = vmatpush1.bf16.msra.mxu0 %v5494
    %5684 = vmatprep.subr.bf16.mxu0 0
    %5685 = vmatpush1.bf16.msra.mxu0 %v5493
    %5686 = vmatprep.subr.bf16.mxu0 0
    %5687 = vmatpush1.bf16.msra.mxu0 %v5492
    %5688 = vmatprep.subr.bf16.mxu0 0
    %5689 = vmatpush1.bf16.msra.mxu0 %v5491
    %5690 = vmatprep.subr.bf16.mxu0 0
    %5691 = vmatpush2.bf16.msra.mxu0 %v5506
    %5692 = vmatprep.subr.bf16.mxu0 0
    %5693 = vmatpush2.bf16.msra.mxu0 %v5505
    %5694 = vmatprep.subr.bf16.mxu0 0
    %5695 = vmatpush2.bf16.msra.mxu0 %v5504
    %5696 = vmatprep.subr.bf16.mxu0 0
    %5697 = vmatpush2.bf16.msra.mxu0 %v5503
    %5698 = vmatprep.subr.bf16.mxu0 0
    %5699 = vmatpush2.bf16.msra.mxu0 %v5502
    %5700 = vmatprep.subr.bf16.mxu0 0
    %5701 = vmatpush2.bf16.msra.mxu0 %v5501
    %5702 = vmatprep.subr.bf16.mxu0 0
    %5703 = vmatpush2.bf16.msra.mxu0 %v5500
    %5704 = vmatprep.subr.bf16.mxu0 0
    %5705 = vmatpush2.bf16.msra.mxu0 %v5499
    %5706 = vmatprep.mubr.bf16.mxu0 %v5052
    %5707 = vmatmul.mubr.bf16.gmra.mxu0 %v5051
    %v5708 = vpop.f32.mrf.mxu0
    %v5709 = vadd.f32 %v5669, %v5708
    %v5710 = vpop.f32.mrf.mxu0
    %v5711 = vpop.f32.mrf.mxu0
    %v5712 = vpop.f32.mrf.mxu0
    %5713 = vdwg.mxu0
    %5714 = vmatprep.subr.bf16.mxu0 0
    %5715 = vmatpush1.bf16.msra.mxu0 %v5514
    %5716 = vmatprep.subr.bf16.mxu0 0
    %5717 = vmatpush1.bf16.msra.mxu0 %v5513
    %5718 = vmatprep.subr.bf16.mxu0 0
    %5719 = vmatpush1.bf16.msra.mxu0 %v5512
    %5720 = vmatprep.subr.bf16.mxu0 0
    %5721 = vmatpush1.bf16.msra.mxu0 %v5511
    %5722 = vmatprep.subr.bf16.mxu0 0
    %5723 = vmatpush1.bf16.msra.mxu0 %v5510
    %5724 = vmatprep.subr.bf16.mxu0 0
    %5725 = vmatpush1.bf16.msra.mxu0 %v5509
    %5726 = vmatprep.subr.bf16.mxu0 0
    %5727 = vmatpush1.bf16.msra.mxu0 %v5508
    %5728 = vmatprep.subr.bf16.mxu0 0
    %5729 = vmatpush1.bf16.msra.mxu0 %v5507
    %5730 = vmatprep.subr.bf16.mxu0 0
    %5731 = vmatpush2.bf16.msra.mxu0 %v5522
    %5732 = vmatprep.subr.bf16.mxu0 0
    %5733 = vmatpush2.bf16.msra.mxu0 %v5521
    %5734 = vmatprep.subr.bf16.mxu0 0
    %5735 = vmatpush2.bf16.msra.mxu0 %v5520
    %5736 = vmatprep.subr.bf16.mxu0 0
    %5737 = vmatpush2.bf16.msra.mxu0 %v5519
    %5738 = vmatprep.subr.bf16.mxu0 0
    %5739 = vmatpush2.bf16.msra.mxu0 %v5518
    %5740 = vmatprep.subr.bf16.mxu0 0
    %5741 = vmatpush2.bf16.msra.mxu0 %v5517
    %5742 = vmatprep.subr.bf16.mxu0 0
    %5743 = vmatpush2.bf16.msra.mxu0 %v5516
    %5744 = vmatprep.subr.bf16.mxu0 0
    %5745 = vmatpush2.bf16.msra.mxu0 %v5515
    %5746 = vmatprep.mubr.bf16.mxu0 %v5054
    %5747 = vmatmul.mubr.bf16.gmra.mxu0 %v5053
    %v5748 = vpop.f32.mrf.mxu0
    %v5749 = vadd.f32 %v5709, %v5748
    %v5750 = vpop.f32.mrf.mxu0
    %v5751 = vpop.f32.mrf.mxu0
    %v5752 = vpop.f32.mrf.mxu0
    %5753 = vdwg.mxu0
    %5754 = vmatprep.subr.bf16.mxu0 0
    %5755 = vmatpush1.bf16.msra.mxu0 0
    %5756 = vmatprep.subr.bf16.mxu0 0
    %5757 = vmatpush1.bf16.msra.mxu0 0
    %5758 = vmatprep.subr.bf16.mxu0 0
    %5759 = vmatpush1.bf16.msra.mxu0 0
    %5760 = vmatprep.subr.bf16.mxu0 0
    %5761 = vmatpush1.bf16.msra.mxu0 0
    %5762 = vmatprep.subr.bf16.mxu0 0
    %5763 = vmatpush1.bf16.msra.mxu0 0
    %5764 = vmatprep.subr.bf16.mxu0 0
    %5765 = vmatpush1.bf16.msra.mxu0 0
    %5766 = vmatprep.subr.bf16.mxu0 0
    %5767 = vmatpush1.bf16.msra.mxu0 %v5524
    %5768 = vmatprep.subr.bf16.mxu0 0
    %5769 = vmatpush1.bf16.msra.mxu0 %v5523
    %5770 = vmatprep.subr.bf16.mxu0 0
    %5771 = vmatpush2.bf16.msra.mxu0 0
    %5772 = vmatprep.subr.bf16.mxu0 0
    %5773 = vmatpush2.bf16.msra.mxu0 0
    %5774 = vmatprep.subr.bf16.mxu0 0
    %5775 = vmatpush2.bf16.msra.mxu0 0
    %5776 = vmatprep.subr.bf16.mxu0 0
    %5777 = vmatpush2.bf16.msra.mxu0 0
    %5778 = vmatprep.subr.bf16.mxu0 0
    %5779 = vmatpush2.bf16.msra.mxu0 0
    %5780 = vmatprep.subr.bf16.mxu0 0
    %5781 = vmatpush2.bf16.msra.mxu0 0
    %5782 = vmatprep.subr.bf16.mxu0 0
    %5783 = vmatpush2.bf16.msra.mxu0 0
    %5784 = vmatprep.subr.bf16.mxu0 0
    %5785 = vmatpush2.bf16.msra.mxu0 0
    %5786 = vmatprep.mubr.bf16.mxu0 0
    %5787 = vmatmul.mubr.bf16.gmra.mxu0 %v5592
    %v5788 = vpop.f32.mrf.mxu0
    %v5789 = vadd.f32 %v5749, %v5788
    %v5790 = vpop.f32.mrf.mxu0
    %v5791 = vpop.f32.mrf.mxu0
    %v5792 = vpop.f32.mrf.mxu0
    %5793 = vdwg.mxu0
    %v5794 = vmax.f32 %v5789, 0.0
    %v5795 = vpack.c.bf16 %v5794, %v5794
    %v5796 = vld [vmem:[%s12] sm:$0xf]
    %v5797 = vld [vmem:[%s12 + $0x4] sm:$0xf]
    %v5798 = vld [vmem:[%s12 + $0x8] sm:$0xf]
    %v5799 = vld [vmem:[%s12 + $0xc] sm:$0xf]
    %v5800 = vld [vmem:[%s13] sm:$0x1]
    %v5802 = vlaneseq
    %v5803 = vshrl.u32 %v5802, 7
    %v5804 = vsub.s32 0, %v5803
    %v5805 = vrot.slane %v5800, %v5804
    %v5811 = vunpack.c.l.b16 %v5796
    %v5812 = vunpack.c.l.b16 %v5797
    %v5813 = vunpack.c.l.b16 %v5798
    %v5814 = vunpack.c.l.b16 %v5799
    %v5815 = vpack.c.b16 %v5812, %v5811
    %v5816 = vpack.c.b16 %v5814, %v5813
    %v5820 = vsel %vm2618, %v5795, 0
    %5822 = vmatprep.subr.bf16.mxu0 0
    %5823 = vmatpush1.bf16.msra.mxu0 0
    %5824 = vmatprep.subr.bf16.mxu0 0
    %5825 = vmatpush1.bf16.msra.mxu0 0
    %5826 = vmatprep.subr.bf16.mxu0 0
    %5827 = vmatpush1.bf16.msra.mxu0 0
    %5828 = vmatprep.subr.bf16.mxu0 0
    %5829 = vmatpush1.bf16.msra.mxu0 0
    %5830 = vmatprep.subr.bf16.mxu0 0
    %5831 = vmatpush1.bf16.msra.mxu0 0
    %5832 = vmatprep.subr.bf16.mxu0 0
    %5833 = vmatpush1.bf16.msra.mxu0 0
    %5834 = vmatprep.subr.bf16.mxu0 0
    %5835 = vmatpush1.bf16.msra.mxu0 %v5816
    %5836 = vmatprep.subr.bf16.mxu0 0
    %5837 = vmatpush1.bf16.msra.mxu0 %v5815
    %5838 = vmatprep.subr.bf16.mxu0 0
    %5839 = vmatpush2.bf16.msra.mxu0 0
    %5840 = vmatprep.subr.bf16.mxu0 0
    %5841 = vmatpush2.bf16.msra.mxu0 0
    %5842 = vmatprep.subr.bf16.mxu0 0
    %5843 = vmatpush2.bf16.msra.mxu0 0
    %5844 = vmatprep.subr.bf16.mxu0 0
    %5845 = vmatpush2.bf16.msra.mxu0 0
    %5846 = vmatprep.subr.bf16.mxu0 0
    %5847 = vmatpush2.bf16.msra.mxu0 0
    %5848 = vmatprep.subr.bf16.mxu0 0
    %5849 = vmatpush2.bf16.msra.mxu0 0
    %5850 = vmatprep.subr.bf16.mxu0 0
    %5851 = vmatpush2.bf16.msra.mxu0 0
    %5852 = vmatprep.subr.bf16.mxu0 0
    %5853 = vmatpush2.bf16.msra.mxu0 0
    %5854 = vmatprep.mubr.bf16.mxu0 0
    %5855 = vmatmul.mubr.bf16.gmra.mxu0 %v5820
    %v5856 = vpop.f32.mrf.mxu0
    %v5857 = vadd.f32 %v5805, %v5856
    %v5858 = vpop.f32.mrf.mxu0
    %v5859 = vpop.f32.mrf.mxu0
    %v5860 = vpop.f32.mrf.mxu0
    %5861 = vdwg.mxu0
    %vm5862 = vcmask 25600
    %5863 = vst.msk [vmem:[#allocation2] sm:$0x3] %vm5862, %v5857
    // Predicated region
    $region58: #{mulchan_forward.1} parent=1 // pred_check
      _
    $region59: #{mulchan_forward.1} parent=1 // pred_check_branch
      %5865 = sbr.rel (0) target = $region61
    $region60: #{mulchan_forward.1} parent=1 // pred_region
      %s5867 = ssub.s32 32, 32
      %5868 = vsyncadd [#allocation3], %s5867
      %s5870 = sshll.u32 [#allocation2], 4
      %s5871 = int_to_ptr.vmem [resolvable:$true] %s5870
      %5873 = dma.vmem_to_hbm [thread:$0]  %s5871, 32, %s14, [#allocation3]
    $region61: #{mulchan_forward.1} parent=1 // pred_fallthru
      _
    // Predicated region
    $region62: #{mulchan_forward.1} parent=1 // pred_check
      _
    $region63: #{mulchan_forward.1} parent=1 // pred_check_branch
      %5875 = sbr.rel (0) target = $region65
    $region64: #{mulchan_forward.1} parent=1 // pred_region
      %5876 = dma.done [#allocation3], 32
    $region65: #{mulchan_forward.1} parent=1 // pred_fallthru
      _
    %5877 = vsyncpa [#allocation3], 1

</llo_original>
